<compile_context>
chip_gen: v6e
topology: v6e:2x2x1
jax: 0.10.0
libtpu: 0.0.40
codegen_flags: <defaults>
</compile_context>

<pallas_src>
import numpy as np
import jax
import jax.numpy as jnp
from jax.experimental import pallas as pl
from jax.experimental.pallas import tpu as pltpu

NUM_ADJ_SLICES = 1  # singlecoil


# ---------------------------------------------------------------------------
# Centered ortho DFT matrix:  M @ x == fftshift(fft(ifftshift(x), norm='ortho'))
# The centered ortho inverse is conj(M) (M unitary, symmetric for even n).
# ---------------------------------------------------------------------------
def _centered_dft_matrix(n: int) -> np.ndarray:
    eye = np.eye(n)
    m = np.fft.fftshift(
        np.fft.fft(np.fft.ifftshift(eye, axes=0), axis=0, norm="ortho"), axes=0
    )
    return m.astype(np.complex64)


def _dft_row_stack(n: int) -> jnp.ndarray:
    """(3, n, n) f32 stack [Re(M), Im(M), Re+Im] for left-multiply (H axis)."""
    m = _centered_dft_matrix(n)
    mr = np.ascontiguousarray(m.real).astype(np.float32)
    mi = np.ascontiguousarray(m.imag).astype(np.float32)
    return jnp.asarray(np.stack([mr, mi, mr + mi]))


def _dft_col_stack_blockdiag(w: int, wp: int, c: int) -> jnp.ndarray:
    """(3, c*wp, c*wp) block-diagonal f32 stack of M^T for right-multiply.

    Each (wp, wp) diagonal block holds the (w, w) transposed centered DFT in
    its top-left corner and zeros elsewhere, so zero-padded lanes stay zero and
    all C channels are transformed by ONE wide MXU matmul.
    """
    m = _centered_dft_matrix(w).T
    mr = np.ascontiguousarray(m.real).astype(np.float32)
    mi = np.ascontiguousarray(m.imag).astype(np.float32)
    out = np.zeros((3, c * wp, c * wp), np.float32)
    for ci in range(c):
        s = ci * wp
        out[0, s:s + w, s:s + w] = mr
        out[1, s:s + w, s:s + w] = mi
        out[2, s:s + w, s:s + w] = mr + mi
    return jnp.asarray(out)


# ---------------------------------------------------------------------------
# Kernel: one grid step processes one batch element; all channels are batched
# into the lane dimension of every matmul (HL layout the whole way through).
# ---------------------------------------------------------------------------
def _make_kernel(C, H, W, Wp, HID):
    C2 = 2 * C
    HW = float(H * W)

    def _dot(a, b):
        # f32 operands + f32 accumulation (accuracy; MXU has large slack here).
        return jnp.dot(a, b, preferred_element_type=jnp.float32)

    def _cmul_left(m, xr, xi, conj):
        # Gauss 3-multiply:  M @ (xr + i*xi)  or  conj(M) @ (xr + i*xi).
        mr, mi, ms = m
        p1 = _dot(mr, xr)
        p2 = _dot(mi, xi)
        if conj:
            return p1 + p2, _dot(ms, xi - xr) + p1 - p2
        return p1 - p2, _dot(ms, xr + xi) - p1 - p2

    def _cmul_right(xr, xi, m, conj):
        # Gauss 3-multiply:  (xr + i*xi) @ M  or  (xr + i*xi) @ conj(M).
        # Right-multiply keeps everything in HL layout -> no transposes.
        mr, mi, ms = m
        p1 = _dot(xr, mr)
        p2 = _dot(xi, mi)
        if conj:
            return p1 + p2, _dot(xi - xr, ms) + p1 - p2
        return p1 - p2, _dot(xr + xi, ms) - p1 - p2

    def kernel(kr_ref, ki_ref, refr_ref, refi_ref, mask_ref, fh_ref, fw_ref,
               w1_ref, b1_ref, w2_ref, b2_ref, dcw_ref,
               predr_ref, predi_ref, imgr_ref, imgi_ref):
        fh = (fh_ref[0], fh_ref[1], fh_ref[2])
        fw = (fw_ref[0], fw_ref[1], fw_ref[2])

        def ifft2c(xr, xi):
            ar, ai = _cmul_left(fh, xr, xi, conj=True)
            return _cmul_right(ar, ai, fw, conj=True)

        def fft2c(xr, xi):
            ar, ai = _cmul_left(fh, xr, xi, conj=False)
            return _cmul_right(ar, ai, fw, conj=False)

        # ---- restore_im = ifft2c(current_kspace), stays in HL layout --------
        imr, imi = ifft2c(kr_ref[0], ki_ref[0])

        # ---- per-channel mean / unbiased std (single fused pass) ------------
        # Padding lanes of imr/imi are exactly zero, so whole-block sums equal
        # valid-region sums; counts use the true H*W.
        cs_r = jnp.sum(imr, axis=0, keepdims=True)           # (1, C*Wp)
        ss_r = jnp.sum(imr * imr, axis=0, keepdims=True)
        cs_i = jnp.sum(imi, axis=0, keepdims=True)
        ss_i = jnp.sum(imi * imi, axis=0, keepdims=True)

        # complex_to_chan_dim ordering: C real planes, then C imag planes.
        x_planes, means, stds, inv_stds = [], [], [], []
        for j in range(C2):
            c = j if j < C else j - C
            src, cs, ss = (imr, cs_r, ss_r) if j < C else (imi, cs_i, ss_i)
            lo, hi = c * Wp, (c + 1) * Wp                    # 128-aligned slice
            s1 = jnp.sum(cs[:, lo:hi])
            s2 = jnp.sum(ss[:, lo:hi])
            mean = s1 / HW
            var = (s2 - HW * mean * mean) / (HW - 1.0)       # torch.std unbiased
            std = jnp.maximum(jnp.sqrt(jnp.maximum(var, 0.0)), 1e-12)
            x_planes.append(src[:, lo:hi])
            means.append(mean)
            stds.append(std)
            inv_stds.append(1.0 / std)

        # ---- stand-in regularizer: residual pointwise 2-layer MLP -----------
        # norm/unnorm folded into SMEM scalars: no xn planes, no unnorm pass,
        # no per-hidden-unit broadcast; hidden planes computed once, each
        # output channel accumulated in a single pass.
        hidden = []
        for o in range(HID):
            bias = b1_ref[o]
            acc = None
            for j in range(C2):
                w = w1_ref[o, j] * inv_stds[j]               # scalar fold
                bias = bias - w * means[j]
                t = x_planes[j] * w
                acc = t if acc is None else acc + t
            hidden.append(jnp.maximum(acc + bias, 0.0))

        out_planes = []
        for j in range(C2):
            acc = None
            for o in range(HID):
                t = hidden[o] * (w2_ref[j, o] * stds[j])     # scalar fold
                acc = t if acc is None else acc + t
            out_planes.append(x_planes[j] + acc + b2_ref[j] * stds[j])

        if C == 1:
            regr, regi = out_planes[0], out_planes[1]
        else:
            regr = jnp.concatenate(out_planes[:C], axis=1)   # 128-aligned pieces
            regi = jnp.concatenate(out_planes[C:], axis=1)

        # ---- model_term = fft2c(regularized image) --------------------------
        mtr, mti = fft2c(regr, regi)

        # ---- soft DC (as in the module spec):
        #      pred = model_term - where(mask, model_term - ref, 0) * dc_weight
        scale = mask_ref[...] * dcw_ref[0]                   # (1, C*Wp) row
        pr = mtr - (mtr - refr_ref[0]) * scale
        pi = mti - (mti - refi_ref[0]) * scale
        predr_ref[0] = pr
        predi_ref[0] = pi

        # ---- pred_image = ifft2c(pred_kspace) --------------------------------
        i2r, i2i = ifft2c(pr, pi)
        imgr_ref[0] = i2r
        imgi_ref[0] = i2i

    return kernel


# ---------------------------------------------------------------------------
# Wrapper (JAX glue + pallas_call)
# ---------------------------------------------------------------------------
def _chw_to_hl(x, Wp):
    # (B, C, H, W) -> (B, H, C*Wp): channels folded into lanes, each channel
    # zero-padded to a 128-aligned lane stride (dense stores, aligned slices).
    B, C, H, W = x.shape
    xp = jnp.pad(x, ((0, 0), (0, 0), (0, 0), (0, Wp - W)))
    return jnp.transpose(xp, (0, 2, 1, 3)).reshape(B, H, C * Wp)


def varnet_block_forward(current_kspace, ref_kspace, mask, iter_t, current_mask,
                         current_prob, add_list, prob_fea, params):
    B, C, H, W, two = current_kspace.shape
    assert two == 2
    assert H % 8 == 0  # TODO(synk): pad H in the wrapper for general H
    HID = params["w1"].shape[0]
    Wp = ((W + 127) // 128) * 128        # 128-aligned per-channel lane stride
    CWp = C * Wp

    kr = _chw_to_hl(current_kspace[..., 0], Wp)
    ki = _chw_to_hl(current_kspace[..., 1], Wp)
    refr = _chw_to_hl(ref_kspace[..., 0], Wp)
    refi = _chw_to_hl(ref_kspace[..., 1], Wp)

    # fastMRI column mask as a single (1, C*Wp) row (zeros in the padding).
    mask_cw = jnp.broadcast_to(mask[0, ..., 0], (C, H, W))[:, 0, :].astype(jnp.float32)
    mask_cw = jnp.pad(mask_cw, ((0, 0), (0, Wp - W))).reshape(1, CWp)

    fh = _dft_row_stack(H)                      # (3, H, H)      left-multiply
    fw = _dft_col_stack_blockdiag(W, Wp, C)     # (3, CWp, CWp)  right-multiply

    kernel = _make_kernel(C, H, W, Wp, HID)

    data_spec = pl.BlockSpec((1, H, CWp), lambda b: (b, 0, 0))
    const = pl.Buffered(1)        # grid-invariant inputs: single-buffered
    mask_spec = pl.BlockSpec((1, CWp), lambda b: (0, 0), pipeline_mode=const)
    fh_spec = pl.BlockSpec((3, H, H), lambda b: (0, 0, 0), pipeline_mode=const)
    fw_spec = pl.BlockSpec((3, CWp, CWp), lambda b: (0, 0, 0), pipeline_mode=const)
    smem = pl.BlockSpec(memory_space=pltpu.MemorySpace.SMEM)

    out_shape = tuple(jax.ShapeDtypeStruct((B, H, CWp), jnp.float32)
                      for _ in range(4))
    out_specs = [pl.BlockSpec((1, H, CWp), lambda b: (b, 0, 0)) for _ in range(4)]

    predr, predi, imgr, imgi = pl.pallas_call(
        kernel,
        out_shape=out_shape,
        grid=(B,),
        in_specs=[data_spec, data_spec, data_spec, data_spec,
                  mask_spec, fh_spec, fw_spec,
                  smem, smem, smem, smem, smem],
        out_specs=out_specs,
        # vmem_limit_bytes intentionally left at the compiler default: the
        # per-step footprint here is well under 2 MiB, and requesting all of
        # v7x's 64 MiB would leave no headroom for compiler scratch.
        compiler_params=pltpu.CompilerParams(
            dimension_semantics=("parallel",)),   # B>=2 keeps both v7x TCs busy
    )(kr, ki, refr, refi, mask_cw, fh, fw,
      params["w1"], params["b1"], params["w2"], params["b2"],
      params["dc_weight"])

    def _hl_to_chw(x):   # (B, H, C*Wp) -> (B, C, H, W): crop padding (XLA plumbing)
        return x.reshape(B, H, C, Wp)[..., :W].transpose(0, 2, 1, 3)

    pred_kspace = jnp.stack([_hl_to_chw(predr), _hl_to_chw(predi)], axis=-1)
    pred_image = jnp.stack([_hl_to_chw(imgr), _hl_to_chw(imgi)], axis=-1)
    return pred_kspace, pred_image


def init_params(C, hidden, key):
    c2 = 2 * C
    k1, k2, k3, k4 = jax.random.split(key, 4)
    return {
        "w1": (0.1 * jax.random.normal(k1, (hidden, c2))).astype(jnp.float32),
        "b1": (0.01 * jax.random.normal(k2, (hidden,))).astype(jnp.float32),
        "w2": (0.1 * jax.random.normal(k3, (c2, hidden))).astype(jnp.float32),
        "b2": (0.01 * jax.random.normal(k4, (c2,))).astype(jnp.float32),
        "dc_weight": jnp.ones((1,), jnp.float32),  # nn.Parameter(torch.ones(1))
    }


if __name__ == "__main__":
    B, C, H, W = 2, 2, 16, 16   # complex (B, C, H, W, 2) -> 2C = 4 real channels
    HID = 8

    root = jax.random.PRNGKey(0)
    kk, kref, kparam = jax.random.split(root, 3)
    current_kspace = jax.random.normal(kk, (B, C, H, W, 2), jnp.float32)
    ref_kspace = jax.random.normal(kref, (B, C, H, W, 2), jnp.float32)

    # column undersampling mask (center + every 3rd column), bool, fastMRI-style
    cols = jnp.arange(W)
    keep = (jnp.abs(cols - W // 2) < 3) | (cols % 3 == 0)
    mask = keep.reshape(1, 1, 1, W, 1)

    # unused-by-compute forward args (kept for signature fidelity)
    iter_t = jnp.zeros((1,), jnp.int32)
    current_mask = mask.astype(jnp.float32)
    current_prob = jnp.zeros((1, 1, 1, W, 1), jnp.float32)
    add_list = None
    prob_fea = jnp.zeros((B, 1, H, W), jnp.float32)  # stand-in model ignores it

    params = init_params(C, HID, kparam)

    pred_kspace, pred_image = varnet_block_forward(
        current_kspace, ref_kspace, mask, iter_t, current_mask,
        current_prob, add_list, prob_fea, params)
    jax.block_until_ready((pred_kspace, pred_image))

    assert pred_kspace.shape == (B, C, H, W, 2)
    assert pred_image.shape == (B, C, H, W, 2)
    assert bool(jnp.all(jnp.isfinite(pred_kspace)))
    assert bool(jnp.all(jnp.isfinite(pred_image)))
    print("KERNEL_OK")
</pallas_src>

<mosaic_0001>
module attributes {stable_mosaic.version = 11 : i64} {
  func.func @kernel(%arg0: i32, %arg1: memref<1x16x256xf32, #tpu.memory_space<vmem>>, %arg2: memref<1x16x256xf32, #tpu.memory_space<vmem>>, %arg3: memref<1x16x256xf32, #tpu.memory_space<vmem>>, %arg4: memref<1x16x256xf32, #tpu.memory_space<vmem>>, %arg5: memref<1x256xf32, #tpu.memory_space<vmem>>, %arg6: memref<3x16x16xf32, #tpu.memory_space<vmem>>, %arg7: memref<3x256x256xf32, #tpu.memory_space<vmem>>, %arg8: memref<8x4xf32, #tpu.memory_space<smem>>, %arg9: memref<8xf32, #tpu.memory_space<smem>>, %arg10: memref<4x8xf32, #tpu.memory_space<smem>>, %arg11: memref<4xf32, #tpu.memory_space<smem>>, %arg12: memref<1xf32, #tpu.memory_space<smem>>, %arg13: memref<1x16x256xf32, #tpu.memory_space<vmem>>, %arg14: memref<1x16x256xf32, #tpu.memory_space<vmem>>, %arg15: memref<1x16x256xf32, #tpu.memory_space<vmem>>, %arg16: memref<1x16x256xf32, #tpu.memory_space<vmem>>) attributes {dimension_semantics = [#tpu.dimension_semantics<parallel>], iteration_bounds = array<i64: 2>, scalar_prefetch = 0 : i64, scratch_operands = 0 : i64, tpu.core_type = #tpu.core_type<tc>, window_params = [{transform_indices = @transform_0, window_bounds = array<i64: 1, 16, 256>}, {transform_indices = @transform_1, window_bounds = array<i64: 1, 16, 256>}, {transform_indices = @transform_2, window_bounds = array<i64: 1, 16, 256>}, {transform_indices = @transform_3, window_bounds = array<i64: 1, 16, 256>}, {pipeline_mode = #tpu.pipeline_mode<synchronous>, transform_indices = @transform_4, window_bounds = array<i64: 1, 256>}, {pipeline_mode = #tpu.pipeline_mode<synchronous>, transform_indices = @transform_5, window_bounds = array<i64: 3, 16, 16>}, {pipeline_mode = #tpu.pipeline_mode<synchronous>, transform_indices = @transform_6, window_bounds = array<i64: 3, 256, 256>}, {transform_indices = @transform_7, window_bounds = array<i64: 8, 4>}, {transform_indices = @transform_8, window_bounds = array<i64: 8>}, {transform_indices = @transform_9, window_bounds = array<i64: 4, 8>}, {transform_indices = @transform_10, window_bounds = array<i64: 4>}, {transform_indices = @transform_11, window_bounds = array<i64: 1>}, {transform_indices = @transform_12, window_bounds = array<i64: 1, 16, 256>}, {transform_indices = @transform_13, window_bounds = array<i64: 1, 16, 256>}, {transform_indices = @transform_14, window_bounds = array<i64: 1, 16, 256>}, {transform_indices = @transform_15, window_bounds = array<i64: 1, 16, 256>}]} {
    %c0 = arith.constant 0 : index
    %c0_0 = arith.constant 0 : index
    %c0_1 = arith.constant 0 : index
    %0 = vector.load %arg6[%c0, %c0_0, %c0_1] : memref<3x16x16xf32, #tpu.memory_space<vmem>>, vector<1x16x16xf32>
    %1 = vector.shape_cast %0 : vector<1x16x16xf32> to vector<16x16xf32>
    %c1 = arith.constant 1 : index
    %c0_2 = arith.constant 0 : index
    %c0_3 = arith.constant 0 : index
    %2 = vector.load %arg6[%c1, %c0_2, %c0_3] : memref<3x16x16xf32, #tpu.memory_space<vmem>>, vector<1x16x16xf32>
    %3 = vector.shape_cast %2 : vector<1x16x16xf32> to vector<16x16xf32>
    %c2 = arith.constant 2 : index
    %c0_4 = arith.constant 0 : index
    %c0_5 = arith.constant 0 : index
    %4 = vector.load %arg6[%c2, %c0_4, %c0_5] : memref<3x16x16xf32, #tpu.memory_space<vmem>>, vector<1x16x16xf32>
    %5 = vector.shape_cast %4 : vector<1x16x16xf32> to vector<16x16xf32>
    %c0_6 = arith.constant 0 : index
    %c0_7 = arith.constant 0 : index
    %c0_8 = arith.constant 0 : index
    %6 = vector.load %arg7[%c0_6, %c0_7, %c0_8] : memref<3x256x256xf32, #tpu.memory_space<vmem>>, vector<1x256x256xf32>
    %7 = vector.shape_cast %6 : vector<1x256x256xf32> to vector<256x256xf32>
    %c1_9 = arith.constant 1 : index
    %c0_10 = arith.constant 0 : index
    %c0_11 = arith.constant 0 : index
    %8 = vector.load %arg7[%c1_9, %c0_10, %c0_11] : memref<3x256x256xf32, #tpu.memory_space<vmem>>, vector<1x256x256xf32>
    %9 = vector.shape_cast %8 : vector<1x256x256xf32> to vector<256x256xf32>
    %c2_12 = arith.constant 2 : index
    %c0_13 = arith.constant 0 : index
    %c0_14 = arith.constant 0 : index
    %10 = vector.load %arg7[%c2_12, %c0_13, %c0_14] : memref<3x256x256xf32, #tpu.memory_space<vmem>>, vector<1x256x256xf32>
    %11 = vector.shape_cast %10 : vector<1x256x256xf32> to vector<256x256xf32>
    %c0_15 = arith.constant 0 : index
    %c0_16 = arith.constant 0 : index
    %c0_17 = arith.constant 0 : index
    %12 = vector.load %arg1[%c0_15, %c0_16, %c0_17] : memref<1x16x256xf32, #tpu.memory_space<vmem>>, vector<1x16x256xf32>
    %13 = vector.shape_cast %12 : vector<1x16x256xf32> to vector<16x256xf32>
    %c0_18 = arith.constant 0 : index
    %c0_19 = arith.constant 0 : index
    %c0_20 = arith.constant 0 : index
    %14 = vector.load %arg2[%c0_18, %c0_19, %c0_20] : memref<1x16x256xf32, #tpu.memory_space<vmem>>, vector<1x16x256xf32>
    %15 = vector.shape_cast %14 : vector<1x16x256xf32> to vector<16x256xf32>
    %cst = arith.constant dense<0.000000e+00> : vector<16x256xf32>
    %16 = tpu.matmul %1, %13, %cst {dimension_numbers = #tpu.dot_dimension_numbers<[1], [0], [0], [1], [0, 0, 1, 1], [], []>} : vector<16x16xf32>, vector<16x256xf32>, vector<16x256xf32> -> vector<16x256xf32>
    %cst_21 = arith.constant dense<0.000000e+00> : vector<16x256xf32>
    %17 = tpu.matmul %3, %15, %cst_21 {dimension_numbers = #tpu.dot_dimension_numbers<[1], [0], [0], [1], [0, 0, 1, 1], [], []>} : vector<16x16xf32>, vector<16x256xf32>, vector<16x256xf32> -> vector<16x256xf32>
    %18 = arith.addf %16, %17 : vector<16x256xf32>
    %19 = arith.subf %15, %13 : vector<16x256xf32>
    %cst_22 = arith.constant dense<0.000000e+00> : vector<16x256xf32>
    %20 = tpu.matmul %5, %19, %cst_22 {dimension_numbers = #tpu.dot_dimension_numbers<[1], [0], [0], [1], [0, 0, 1, 1], [], []>} : vector<16x16xf32>, vector<16x256xf32>, vector<16x256xf32> -> vector<16x256xf32>
    %21 = arith.addf %20, %16 : vector<16x256xf32>
    %22 = arith.subf %21, %17 : vector<16x256xf32>
    %cst_23 = arith.constant dense<0.000000e+00> : vector<16x256xf32>
    %23 = tpu.matmul %18, %7, %cst_23 {dimension_numbers = #tpu.dot_dimension_numbers<[1], [0], [0], [1], [0, 0, 1, 1], [], []>} : vector<16x256xf32>, vector<256x256xf32>, vector<16x256xf32> -> vector<16x256xf32>
    %cst_24 = arith.constant dense<0.000000e+00> : vector<16x256xf32>
    %24 = tpu.matmul %22, %9, %cst_24 {dimension_numbers = #tpu.dot_dimension_numbers<[1], [0], [0], [1], [0, 0, 1, 1], [], []>} : vector<16x256xf32>, vector<256x256xf32>, vector<16x256xf32> -> vector<16x256xf32>
    %25 = arith.addf %23, %24 : vector<16x256xf32>
    %26 = arith.subf %22, %18 : vector<16x256xf32>
    %cst_25 = arith.constant dense<0.000000e+00> : vector<16x256xf32>
    %27 = tpu.matmul %26, %11, %cst_25 {dimension_numbers = #tpu.dot_dimension_numbers<[1], [0], [0], [1], [0, 0, 1, 1], [], []>} : vector<16x256xf32>, vector<256x256xf32>, vector<16x256xf32> -> vector<16x256xf32>
    %28 = arith.addf %27, %23 : vector<16x256xf32>
    %29 = arith.subf %28, %24 : vector<16x256xf32>
    %cst_26 = arith.constant dense<0.000000e+00> : vector<256xf32>
    %30 = vector.multi_reduction <add>, %25, %cst_26 [0] : vector<16x256xf32> to vector<256xf32>
    %31 = vector.shape_cast %30 : vector<256xf32> to vector<1x256xf32>
    %32 = arith.mulf %25, %25 : vector<16x256xf32>
    %cst_27 = arith.constant dense<0.000000e+00> : vector<256xf32>
    %33 = vector.multi_reduction <add>, %32, %cst_27 [0] : vector<16x256xf32> to vector<256xf32>
    %34 = vector.shape_cast %33 : vector<256xf32> to vector<1x256xf32>
    %cst_28 = arith.constant dense<0.000000e+00> : vector<256xf32>
    %35 = vector.multi_reduction <add>, %29, %cst_28 [0] : vector<16x256xf32> to vector<256xf32>
    %36 = vector.shape_cast %35 : vector<256xf32> to vector<1x256xf32>
    %37 = arith.mulf %29, %29 : vector<16x256xf32>
    %cst_29 = arith.constant dense<0.000000e+00> : vector<256xf32>
    %38 = vector.multi_reduction <add>, %37, %cst_29 [0] : vector<16x256xf32> to vector<256xf32>
    %39 = vector.shape_cast %38 : vector<256xf32> to vector<1x256xf32>
    %40 = vector.extract_strided_slice %31 {offsets = [0, 0], sizes = [1, 128], strides = [1, 1]} : vector<1x256xf32> to vector<1x128xf32>
    %41 = vector.shape_cast %40 : vector<1x128xf32> to vector<1x1x128xf32>
    %cst_30 = arith.constant dense<0.000000e+00> : vector<1xf32>
    %42 = vector.multi_reduction <add>, %41, %cst_30 [1, 2] : vector<1x1x128xf32> to vector<1xf32>
    %43 = vector.shape_cast %42 : vector<1xf32> to vector<1x1x1xf32>
    %44 = vector.extract %43[0, 0, 0] : f32 from vector<1x1x1xf32>
    %45 = vector.extract_strided_slice %34 {offsets = [0, 0], sizes = [1, 128], strides = [1, 1]} : vector<1x256xf32> to vector<1x128xf32>
    %46 = vector.shape_cast %45 : vector<1x128xf32> to vector<1x1x128xf32>
    %cst_31 = arith.constant dense<0.000000e+00> : vector<1xf32>
    %47 = vector.multi_reduction <add>, %46, %cst_31 [1, 2] : vector<1x1x128xf32> to vector<1xf32>
    %48 = vector.shape_cast %47 : vector<1xf32> to vector<1x1x1xf32>
    %49 = vector.extract %48[0, 0, 0] : f32 from vector<1x1x1xf32>
    %cst_32 = arith.constant 2.560000e+02 : f32
    %50 = arith.divf %44, %cst_32 : f32
    %cst_33 = arith.constant 2.560000e+02 : f32
    %51 = arith.mulf %cst_33, %50 : f32
    %52 = arith.mulf %51, %50 : f32
    %53 = arith.subf %49, %52 : f32
    %cst_34 = arith.constant 2.550000e+02 : f32
    %54 = arith.divf %53, %cst_34 : f32
    %cst_35 = arith.constant 0.000000e+00 : f32
    %55 = arith.maximumf %54, %cst_35 : f32
    %56 = math.sqrt %55 : f32
    %cst_36 = arith.constant 9.99999996E-13 : f32
    %57 = arith.maximumf %56, %cst_36 : f32
    %58 = vector.extract_strided_slice %25 {offsets = [0, 0], sizes = [16, 128], strides = [1, 1]} : vector<16x256xf32> to vector<16x128xf32>
    %cst_37 = arith.constant 1.000000e+00 : f32
    %59 = arith.divf %cst_37, %57 : f32
    %60 = vector.extract_strided_slice %31 {offsets = [0, 128], sizes = [1, 128], strides = [1, 1]} : vector<1x256xf32> to vector<1x128xf32>
    %61 = vector.shape_cast %60 : vector<1x128xf32> to vector<1x1x128xf32>
    %cst_38 = arith.constant dense<0.000000e+00> : vector<1xf32>
    %62 = vector.multi_reduction <add>, %61, %cst_38 [1, 2] : vector<1x1x128xf32> to vector<1xf32>
    %63 = vector.shape_cast %62 : vector<1xf32> to vector<1x1x1xf32>
    %64 = vector.extract %63[0, 0, 0] : f32 from vector<1x1x1xf32>
    %65 = vector.extract_strided_slice %34 {offsets = [0, 128], sizes = [1, 128], strides = [1, 1]} : vector<1x256xf32> to vector<1x128xf32>
    %66 = vector.shape_cast %65 : vector<1x128xf32> to vector<1x1x128xf32>
    %cst_39 = arith.constant dense<0.000000e+00> : vector<1xf32>
    %67 = vector.multi_reduction <add>, %66, %cst_39 [1, 2] : vector<1x1x128xf32> to vector<1xf32>
    %68 = vector.shape_cast %67 : vector<1xf32> to vector<1x1x1xf32>
    %69 = vector.extract %68[0, 0, 0] : f32 from vector<1x1x1xf32>
    %cst_40 = arith.constant 2.560000e+02 : f32
    %70 = arith.divf %64, %cst_40 : f32
    %cst_41 = arith.constant 2.560000e+02 : f32
    %71 = arith.mulf %cst_41, %70 : f32
    %72 = arith.mulf %71, %70 : f32
    %73 = arith.subf %69, %72 : f32
    %cst_42 = arith.constant 2.550000e+02 : f32
    %74 = arith.divf %73, %cst_42 : f32
    %cst_43 = arith.constant 0.000000e+00 : f32
    %75 = arith.maximumf %74, %cst_43 : f32
    %76 = math.sqrt %75 : f32
    %cst_44 = arith.constant 9.99999996E-13 : f32
    %77 = arith.maximumf %76, %cst_44 : f32
    %78 = vector.extract_strided_slice %25 {offsets = [0, 128], sizes = [16, 128], strides = [1, 1]} : vector<16x256xf32> to vector<16x128xf32>
    %cst_45 = arith.constant 1.000000e+00 : f32
    %79 = arith.divf %cst_45, %77 : f32
    %80 = vector.extract_strided_slice %36 {offsets = [0, 0], sizes = [1, 128], strides = [1, 1]} : vector<1x256xf32> to vector<1x128xf32>
    %81 = vector.shape_cast %80 : vector<1x128xf32> to vector<1x1x128xf32>
    %cst_46 = arith.constant dense<0.000000e+00> : vector<1xf32>
    %82 = vector.multi_reduction <add>, %81, %cst_46 [1, 2] : vector<1x1x128xf32> to vector<1xf32>
    %83 = vector.shape_cast %82 : vector<1xf32> to vector<1x1x1xf32>
    %84 = vector.extract %83[0, 0, 0] : f32 from vector<1x1x1xf32>
    %85 = vector.extract_strided_slice %39 {offsets = [0, 0], sizes = [1, 128], strides = [1, 1]} : vector<1x256xf32> to vector<1x128xf32>
    %86 = vector.shape_cast %85 : vector<1x128xf32> to vector<1x1x128xf32>
    %cst_47 = arith.constant dense<0.000000e+00> : vector<1xf32>
    %87 = vector.multi_reduction <add>, %86, %cst_47 [1, 2] : vector<1x1x128xf32> to vector<1xf32>
    %88 = vector.shape_cast %87 : vector<1xf32> to vector<1x1x1xf32>
    %89 = vector.extract %88[0, 0, 0] : f32 from vector<1x1x1xf32>
    %cst_48 = arith.constant 2.560000e+02 : f32
    %90 = arith.divf %84, %cst_48 : f32
    %cst_49 = arith.constant 2.560000e+02 : f32
    %91 = arith.mulf %cst_49, %90 : f32
    %92 = arith.mulf %91, %90 : f32
    %93 = arith.subf %89, %92 : f32
    %cst_50 = arith.constant 2.550000e+02 : f32
    %94 = arith.divf %93, %cst_50 : f32
    %cst_51 = arith.constant 0.000000e+00 : f32
    %95 = arith.maximumf %94, %cst_51 : f32
    %96 = math.sqrt %95 : f32
    %cst_52 = arith.constant 9.99999996E-13 : f32
    %97 = arith.maximumf %96, %cst_52 : f32
    %98 = vector.extract_strided_slice %29 {offsets = [0, 0], sizes = [16, 128], strides = [1, 1]} : vector<16x256xf32> to vector<16x128xf32>
    %cst_53 = arith.constant 1.000000e+00 : f32
    %99 = arith.divf %cst_53, %97 : f32
    %100 = vector.extract_strided_slice %36 {offsets = [0, 128], sizes = [1, 128], strides = [1, 1]} : vector<1x256xf32> to vector<1x128xf32>
    %101 = vector.shape_cast %100 : vector<1x128xf32> to vector<1x1x128xf32>
    %cst_54 = arith.constant dense<0.000000e+00> : vector<1xf32>
    %102 = vector.multi_reduction <add>, %101, %cst_54 [1, 2] : vector<1x1x128xf32> to vector<1xf32>
    %103 = vector.shape_cast %102 : vector<1xf32> to vector<1x1x1xf32>
    %104 = vector.extract %103[0, 0, 0] : f32 from vector<1x1x1xf32>
    %105 = vector.extract_strided_slice %39 {offsets = [0, 128], sizes = [1, 128], strides = [1, 1]} : vector<1x256xf32> to vector<1x128xf32>
    %106 = vector.shape_cast %105 : vector<1x128xf32> to vector<1x1x128xf32>
    %cst_55 = arith.constant dense<0.000000e+00> : vector<1xf32>
    %107 = vector.multi_reduction <add>, %106, %cst_55 [1, 2] : vector<1x1x128xf32> to vector<1xf32>
    %108 = vector.shape_cast %107 : vector<1xf32> to vector<1x1x1xf32>
    %109 = vector.extract %108[0, 0, 0] : f32 from vector<1x1x1xf32>
    %cst_56 = arith.constant 2.560000e+02 : f32
    %110 = arith.divf %104, %cst_56 : f32
    %cst_57 = arith.constant 2.560000e+02 : f32
    %111 = arith.mulf %cst_57, %110 : f32
    %112 = arith.mulf %111, %110 : f32
    %113 = arith.subf %109, %112 : f32
    %cst_58 = arith.constant 2.550000e+02 : f32
    %114 = arith.divf %113, %cst_58 : f32
    %cst_59 = arith.constant 0.000000e+00 : f32
    %115 = arith.maximumf %114, %cst_59 : f32
    %116 = math.sqrt %115 : f32
    %cst_60 = arith.constant 9.99999996E-13 : f32
    %117 = arith.maximumf %116, %cst_60 : f32
    %118 = vector.extract_strided_slice %29 {offsets = [0, 128], sizes = [16, 128], strides = [1, 1]} : vector<16x256xf32> to vector<16x128xf32>
    %cst_61 = arith.constant 1.000000e+00 : f32
    %119 = arith.divf %cst_61, %117 : f32
    %c0_62 = arith.constant 0 : index
    %120 = memref.load %arg9[%c0_62] : memref<8xf32, #tpu.memory_space<smem>>
    %c0_63 = arith.constant 0 : index
    %c0_64 = arith.constant 0 : index
    %121 = memref.load %arg8[%c0_63, %c0_64] : memref<8x4xf32, #tpu.memory_space<smem>>
    %122 = arith.mulf %121, %59 : f32
    %123 = arith.mulf %122, %50 : f32
    %124 = arith.subf %120, %123 : f32
    %125 = vector.broadcast %122 : f32 to vector<16x128xf32>
    %126 = arith.mulf %58, %125 : vector<16x128xf32>
    %c0_65 = arith.constant 0 : index
    %c1_66 = arith.constant 1 : index
    %127 = memref.load %arg8[%c0_65, %c1_66] : memref<8x4xf32, #tpu.memory_space<smem>>
    %128 = arith.mulf %127, %79 : f32
    %129 = arith.mulf %128, %70 : f32
    %130 = arith.subf %124, %129 : f32
    %131 = vector.broadcast %128 : f32 to vector<16x128xf32>
    %132 = arith.mulf %78, %131 : vector<16x128xf32>
    %133 = arith.addf %126, %132 : vector<16x128xf32>
    %c0_67 = arith.constant 0 : index
    %c2_68 = arith.constant 2 : index
    %134 = memref.load %arg8[%c0_67, %c2_68] : memref<8x4xf32, #tpu.memory_space<smem>>
    %135 = arith.mulf %134, %99 : f32
    %136 = arith.mulf %135, %90 : f32
    %137 = arith.subf %130, %136 : f32
    %138 = vector.broadcast %135 : f32 to vector<16x128xf32>
    %139 = arith.mulf %98, %138 : vector<16x128xf32>
    %140 = arith.addf %133, %139 : vector<16x128xf32>
    %c0_69 = arith.constant 0 : index
    %c3 = arith.constant 3 : index
    %141 = memref.load %arg8[%c0_69, %c3] : memref<8x4xf32, #tpu.memory_space<smem>>
    %142 = arith.mulf %141, %119 : f32
    %143 = arith.mulf %142, %110 : f32
    %144 = arith.subf %137, %143 : f32
    %145 = vector.broadcast %142 : f32 to vector<16x128xf32>
    %146 = arith.mulf %118, %145 : vector<16x128xf32>
    %147 = arith.addf %140, %146 : vector<16x128xf32>
    %148 = vector.broadcast %144 : f32 to vector<16x128xf32>
    %149 = arith.addf %147, %148 : vector<16x128xf32>
    %cst_70 = arith.constant 0.000000e+00 : f32
    %150 = vector.broadcast %cst_70 : f32 to vector<16x128xf32>
    %151 = arith.maximumf %149, %150 : vector<16x128xf32>
    %c1_71 = arith.constant 1 : index
    %152 = memref.load %arg9[%c1_71] : memref<8xf32, #tpu.memory_space<smem>>
    %c1_72 = arith.constant 1 : index
    %c0_73 = arith.constant 0 : index
    %153 = memref.load %arg8[%c1_72, %c0_73] : memref<8x4xf32, #tpu.memory_space<smem>>
    %154 = arith.mulf %153, %59 : f32
    %155 = arith.mulf %154, %50 : f32
    %156 = arith.subf %152, %155 : f32
    %157 = vector.broadcast %154 : f32 to vector<16x128xf32>
    %158 = arith.mulf %58, %157 : vector<16x128xf32>
    %c1_74 = arith.constant 1 : index
    %c1_75 = arith.constant 1 : index
    %159 = memref.load %arg8[%c1_74, %c1_75] : memref<8x4xf32, #tpu.memory_space<smem>>
    %160 = arith.mulf %159, %79 : f32
    %161 = arith.mulf %160, %70 : f32
    %162 = arith.subf %156, %161 : f32
    %163 = vector.broadcast %160 : f32 to vector<16x128xf32>
    %164 = arith.mulf %78, %163 : vector<16x128xf32>
    %165 = arith.addf %158, %164 : vector<16x128xf32>
    %c1_76 = arith.constant 1 : index
    %c2_77 = arith.constant 2 : index
    %166 = memref.load %arg8[%c1_76, %c2_77] : memref<8x4xf32, #tpu.memory_space<smem>>
    %167 = arith.mulf %166, %99 : f32
    %168 = arith.mulf %167, %90 : f32
    %169 = arith.subf %162, %168 : f32
    %170 = vector.broadcast %167 : f32 to vector<16x128xf32>
    %171 = arith.mulf %98, %170 : vector<16x128xf32>
    %172 = arith.addf %165, %171 : vector<16x128xf32>
    %c1_78 = arith.constant 1 : index
    %c3_79 = arith.constant 3 : index
    %173 = memref.load %arg8[%c1_78, %c3_79] : memref<8x4xf32, #tpu.memory_space<smem>>
    %174 = arith.mulf %173, %119 : f32
    %175 = arith.mulf %174, %110 : f32
    %176 = arith.subf %169, %175 : f32
    %177 = vector.broadcast %174 : f32 to vector<16x128xf32>
    %178 = arith.mulf %118, %177 : vector<16x128xf32>
    %179 = arith.addf %172, %178 : vector<16x128xf32>
    %180 = vector.broadcast %176 : f32 to vector<16x128xf32>
    %181 = arith.addf %179, %180 : vector<16x128xf32>
    %cst_80 = arith.constant 0.000000e+00 : f32
    %182 = vector.broadcast %cst_80 : f32 to vector<16x128xf32>
    %183 = arith.maximumf %181, %182 : vector<16x128xf32>
    %c2_81 = arith.constant 2 : index
    %184 = memref.load %arg9[%c2_81] : memref<8xf32, #tpu.memory_space<smem>>
    %c2_82 = arith.constant 2 : index
    %c0_83 = arith.constant 0 : index
    %185 = memref.load %arg8[%c2_82, %c0_83] : memref<8x4xf32, #tpu.memory_space<smem>>
    %186 = arith.mulf %185, %59 : f32
    %187 = arith.mulf %186, %50 : f32
    %188 = arith.subf %184, %187 : f32
    %189 = vector.broadcast %186 : f32 to vector<16x128xf32>
    %190 = arith.mulf %58, %189 : vector<16x128xf32>
    %c2_84 = arith.constant 2 : index
    %c1_85 = arith.constant 1 : index
    %191 = memref.load %arg8[%c2_84, %c1_85] : memref<8x4xf32, #tpu.memory_space<smem>>
    %192 = arith.mulf %191, %79 : f32
    %193 = arith.mulf %192, %70 : f32
    %194 = arith.subf %188, %193 : f32
    %195 = vector.broadcast %192 : f32 to vector<16x128xf32>
    %196 = arith.mulf %78, %195 : vector<16x128xf32>
    %197 = arith.addf %190, %196 : vector<16x128xf32>
    %c2_86 = arith.constant 2 : index
    %c2_87 = arith.constant 2 : index
    %198 = memref.load %arg8[%c2_86, %c2_87] : memref<8x4xf32, #tpu.memory_space<smem>>
    %199 = arith.mulf %198, %99 : f32
    %200 = arith.mulf %199, %90 : f32
    %201 = arith.subf %194, %200 : f32
    %202 = vector.broadcast %199 : f32 to vector<16x128xf32>
    %203 = arith.mulf %98, %202 : vector<16x128xf32>
    %204 = arith.addf %197, %203 : vector<16x128xf32>
    %c2_88 = arith.constant 2 : index
    %c3_89 = arith.constant 3 : index
    %205 = memref.load %arg8[%c2_88, %c3_89] : memref<8x4xf32, #tpu.memory_space<smem>>
    %206 = arith.mulf %205, %119 : f32
    %207 = arith.mulf %206, %110 : f32
    %208 = arith.subf %201, %207 : f32
    %209 = vector.broadcast %206 : f32 to vector<16x128xf32>
    %210 = arith.mulf %118, %209 : vector<16x128xf32>
    %211 = arith.addf %204, %210 : vector<16x128xf32>
    %212 = vector.broadcast %208 : f32 to vector<16x128xf32>
    %213 = arith.addf %211, %212 : vector<16x128xf32>
    %cst_90 = arith.constant 0.000000e+00 : f32
    %214 = vector.broadcast %cst_90 : f32 to vector<16x128xf32>
    %215 = arith.maximumf %213, %214 : vector<16x128xf32>
    %c3_91 = arith.constant 3 : index
    %216 = memref.load %arg9[%c3_91] : memref<8xf32, #tpu.memory_space<smem>>
    %c3_92 = arith.constant 3 : index
    %c0_93 = arith.constant 0 : index
    %217 = memref.load %arg8[%c3_92, %c0_93] : memref<8x4xf32, #tpu.memory_space<smem>>
    %218 = arith.mulf %217, %59 : f32
    %219 = arith.mulf %218, %50 : f32
    %220 = arith.subf %216, %219 : f32
    %221 = vector.broadcast %218 : f32 to vector<16x128xf32>
    %222 = arith.mulf %58, %221 : vector<16x128xf32>
    %c3_94 = arith.constant 3 : index
    %c1_95 = arith.constant 1 : index
    %223 = memref.load %arg8[%c3_94, %c1_95] : memref<8x4xf32, #tpu.memory_space<smem>>
    %224 = arith.mulf %223, %79 : f32
    %225 = arith.mulf %224, %70 : f32
    %226 = arith.subf %220, %225 : f32
    %227 = vector.broadcast %224 : f32 to vector<16x128xf32>
    %228 = arith.mulf %78, %227 : vector<16x128xf32>
    %229 = arith.addf %222, %228 : vector<16x128xf32>
    %c3_96 = arith.constant 3 : index
    %c2_97 = arith.constant 2 : index
    %230 = memref.load %arg8[%c3_96, %c2_97] : memref<8x4xf32, #tpu.memory_space<smem>>
    %231 = arith.mulf %230, %99 : f32
    %232 = arith.mulf %231, %90 : f32
    %233 = arith.subf %226, %232 : f32
    %234 = vector.broadcast %231 : f32 to vector<16x128xf32>
    %235 = arith.mulf %98, %234 : vector<16x128xf32>
    %236 = arith.addf %229, %235 : vector<16x128xf32>
    %c3_98 = arith.constant 3 : index
    %c3_99 = arith.constant 3 : index
    %237 = memref.load %arg8[%c3_98, %c3_99] : memref<8x4xf32, #tpu.memory_space<smem>>
    %238 = arith.mulf %237, %119 : f32
    %239 = arith.mulf %238, %110 : f32
    %240 = arith.subf %233, %239 : f32
    %241 = vector.broadcast %238 : f32 to vector<16x128xf32>
    %242 = arith.mulf %118, %241 : vector<16x128xf32>
    %243 = arith.addf %236, %242 : vector<16x128xf32>
    %244 = vector.broadcast %240 : f32 to vector<16x128xf32>
    %245 = arith.addf %243, %244 : vector<16x128xf32>
    %cst_100 = arith.constant 0.000000e+00 : f32
    %246 = vector.broadcast %cst_100 : f32 to vector<16x128xf32>
    %247 = arith.maximumf %245, %246 : vector<16x128xf32>
    %c4 = arith.constant 4 : index
    %248 = memref.load %arg9[%c4] : memref<8xf32, #tpu.memory_space<smem>>
    %c4_101 = arith.constant 4 : index
    %c0_102 = arith.constant 0 : index
    %249 = memref.load %arg8[%c4_101, %c0_102] : memref<8x4xf32, #tpu.memory_space<smem>>
    %250 = arith.mulf %249, %59 : f32
    %251 = arith.mulf %250, %50 : f32
    %252 = arith.subf %248, %251 : f32
    %253 = vector.broadcast %250 : f32 to vector<16x128xf32>
    %254 = arith.mulf %58, %253 : vector<16x128xf32>
    %c4_103 = arith.constant 4 : index
    %c1_104 = arith.constant 1 : index
    %255 = memref.load %arg8[%c4_103, %c1_104] : memref<8x4xf32, #tpu.memory_space<smem>>
    %256 = arith.mulf %255, %79 : f32
    %257 = arith.mulf %256, %70 : f32
    %258 = arith.subf %252, %257 : f32
    %259 = vector.broadcast %256 : f32 to vector<16x128xf32>
    %260 = arith.mulf %78, %259 : vector<16x128xf32>
    %261 = arith.addf %254, %260 : vector<16x128xf32>
    %c4_105 = arith.constant 4 : index
    %c2_106 = arith.constant 2 : index
    %262 = memref.load %arg8[%c4_105, %c2_106] : memref<8x4xf32, #tpu.memory_space<smem>>
    %263 = arith.mulf %262, %99 : f32
    %264 = arith.mulf %263, %90 : f32
    %265 = arith.subf %258, %264 : f32
    %266 = vector.broadcast %263 : f32 to vector<16x128xf32>
    %267 = arith.mulf %98, %266 : vector<16x128xf32>
    %268 = arith.addf %261, %267 : vector<16x128xf32>
    %c4_107 = arith.constant 4 : index
    %c3_108 = arith.constant 3 : index
    %269 = memref.load %arg8[%c4_107, %c3_108] : memref<8x4xf32, #tpu.memory_space<smem>>
    %270 = arith.mulf %269, %119 : f32
    %271 = arith.mulf %270, %110 : f32
    %272 = arith.subf %265, %271 : f32
    %273 = vector.broadcast %270 : f32 to vector<16x128xf32>
    %274 = arith.mulf %118, %273 : vector<16x128xf32>
    %275 = arith.addf %268, %274 : vector<16x128xf32>
    %276 = vector.broadcast %272 : f32 to vector<16x128xf32>
    %277 = arith.addf %275, %276 : vector<16x128xf32>
    %cst_109 = arith.constant 0.000000e+00 : f32
    %278 = vector.broadcast %cst_109 : f32 to vector<16x128xf32>
    %279 = arith.maximumf %277, %278 : vector<16x128xf32>
    %c5 = arith.constant 5 : index
    %280 = memref.load %arg9[%c5] : memref<8xf32, #tpu.memory_space<smem>>
    %c5_110 = arith.constant 5 : index
    %c0_111 = arith.constant 0 : index
    %281 = memref.load %arg8[%c5_110, %c0_111] : memref<8x4xf32, #tpu.memory_space<smem>>
    %282 = arith.mulf %281, %59 : f32
    %283 = arith.mulf %282, %50 : f32
    %284 = arith.subf %280, %283 : f32
    %285 = vector.broadcast %282 : f32 to vector<16x128xf32>
    %286 = arith.mulf %58, %285 : vector<16x128xf32>
    %c5_112 = arith.constant 5 : index
    %c1_113 = arith.constant 1 : index
    %287 = memref.load %arg8[%c5_112, %c1_113] : memref<8x4xf32, #tpu.memory_space<smem>>
    %288 = arith.mulf %287, %79 : f32
    %289 = arith.mulf %288, %70 : f32
    %290 = arith.subf %284, %289 : f32
    %291 = vector.broadcast %288 : f32 to vector<16x128xf32>
    %292 = arith.mulf %78, %291 : vector<16x128xf32>
    %293 = arith.addf %286, %292 : vector<16x128xf32>
    %c5_114 = arith.constant 5 : index
    %c2_115 = arith.constant 2 : index
    %294 = memref.load %arg8[%c5_114, %c2_115] : memref<8x4xf32, #tpu.memory_space<smem>>
    %295 = arith.mulf %294, %99 : f32
    %296 = arith.mulf %295, %90 : f32
    %297 = arith.subf %290, %296 : f32
    %298 = vector.broadcast %295 : f32 to vector<16x128xf32>
    %299 = arith.mulf %98, %298 : vector<16x128xf32>
    %300 = arith.addf %293, %299 : vector<16x128xf32>
    %c5_116 = arith.constant 5 : index
    %c3_117 = arith.constant 3 : index
    %301 = memref.load %arg8[%c5_116, %c3_117] : memref<8x4xf32, #tpu.memory_space<smem>>
    %302 = arith.mulf %301, %119 : f32
    %303 = arith.mulf %302, %110 : f32
    %304 = arith.subf %297, %303 : f32
    %305 = vector.broadcast %302 : f32 to vector<16x128xf32>
    %306 = arith.mulf %118, %305 : vector<16x128xf32>
    %307 = arith.addf %300, %306 : vector<16x128xf32>
    %308 = vector.broadcast %304 : f32 to vector<16x128xf32>
    %309 = arith.addf %307, %308 : vector<16x128xf32>
    %cst_118 = arith.constant 0.000000e+00 : f32
    %310 = vector.broadcast %cst_118 : f32 to vector<16x128xf32>
    %311 = arith.maximumf %309, %310 : vector<16x128xf32>
    %c6 = arith.constant 6 : index
    %312 = memref.load %arg9[%c6] : memref<8xf32, #tpu.memory_space<smem>>
    %c6_119 = arith.constant 6 : index
    %c0_120 = arith.constant 0 : index
    %313 = memref.load %arg8[%c6_119, %c0_120] : memref<8x4xf32, #tpu.memory_space<smem>>
    %314 = arith.mulf %313, %59 : f32
    %315 = arith.mulf %314, %50 : f32
    %316 = arith.subf %312, %315 : f32
    %317 = vector.broadcast %314 : f32 to vector<16x128xf32>
    %318 = arith.mulf %58, %317 : vector<16x128xf32>
    %c6_121 = arith.constant 6 : index
    %c1_122 = arith.constant 1 : index
    %319 = memref.load %arg8[%c6_121, %c1_122] : memref<8x4xf32, #tpu.memory_space<smem>>
    %320 = arith.mulf %319, %79 : f32
    %321 = arith.mulf %320, %70 : f32
    %322 = arith.subf %316, %321 : f32
    %323 = vector.broadcast %320 : f32 to vector<16x128xf32>
    %324 = arith.mulf %78, %323 : vector<16x128xf32>
    %325 = arith.addf %318, %324 : vector<16x128xf32>
    %c6_123 = arith.constant 6 : index
    %c2_124 = arith.constant 2 : index
    %326 = memref.load %arg8[%c6_123, %c2_124] : memref<8x4xf32, #tpu.memory_space<smem>>
    %327 = arith.mulf %326, %99 : f32
    %328 = arith.mulf %327, %90 : f32
    %329 = arith.subf %322, %328 : f32
    %330 = vector.broadcast %327 : f32 to vector<16x128xf32>
    %331 = arith.mulf %98, %330 : vector<16x128xf32>
    %332 = arith.addf %325, %331 : vector<16x128xf32>
    %c6_125 = arith.constant 6 : index
    %c3_126 = arith.constant 3 : index
    %333 = memref.load %arg8[%c6_125, %c3_126] : memref<8x4xf32, #tpu.memory_space<smem>>
    %334 = arith.mulf %333, %119 : f32
    %335 = arith.mulf %334, %110 : f32
    %336 = arith.subf %329, %335 : f32
    %337 = vector.broadcast %334 : f32 to vector<16x128xf32>
    %338 = arith.mulf %118, %337 : vector<16x128xf32>
    %339 = arith.addf %332, %338 : vector<16x128xf32>
    %340 = vector.broadcast %336 : f32 to vector<16x128xf32>
    %341 = arith.addf %339, %340 : vector<16x128xf32>
    %cst_127 = arith.constant 0.000000e+00 : f32
    %342 = vector.broadcast %cst_127 : f32 to vector<16x128xf32>
    %343 = arith.maximumf %341, %342 : vector<16x128xf32>
    %c7 = arith.constant 7 : index
    %344 = memref.load %arg9[%c7] : memref<8xf32, #tpu.memory_space<smem>>
    %c7_128 = arith.constant 7 : index
    %c0_129 = arith.constant 0 : index
    %345 = memref.load %arg8[%c7_128, %c0_129] : memref<8x4xf32, #tpu.memory_space<smem>>
    %346 = arith.mulf %345, %59 : f32
    %347 = arith.mulf %346, %50 : f32
    %348 = arith.subf %344, %347 : f32
    %349 = vector.broadcast %346 : f32 to vector<16x128xf32>
    %350 = arith.mulf %58, %349 : vector<16x128xf32>
    %c7_130 = arith.constant 7 : index
    %c1_131 = arith.constant 1 : index
    %351 = memref.load %arg8[%c7_130, %c1_131] : memref<8x4xf32, #tpu.memory_space<smem>>
    %352 = arith.mulf %351, %79 : f32
    %353 = arith.mulf %352, %70 : f32
    %354 = arith.subf %348, %353 : f32
    %355 = vector.broadcast %352 : f32 to vector<16x128xf32>
    %356 = arith.mulf %78, %355 : vector<16x128xf32>
    %357 = arith.addf %350, %356 : vector<16x128xf32>
    %c7_132 = arith.constant 7 : index
    %c2_133 = arith.constant 2 : index
    %358 = memref.load %arg8[%c7_132, %c2_133] : memref<8x4xf32, #tpu.memory_space<smem>>
    %359 = arith.mulf %358, %99 : f32
    %360 = arith.mulf %359, %90 : f32
    %361 = arith.subf %354, %360 : f32
    %362 = vector.broadcast %359 : f32 to vector<16x128xf32>
    %363 = arith.mulf %98, %362 : vector<16x128xf32>
    %364 = arith.addf %357, %363 : vector<16x128xf32>
    %c7_134 = arith.constant 7 : index
    %c3_135 = arith.constant 3 : index
    %365 = memref.load %arg8[%c7_134, %c3_135] : memref<8x4xf32, #tpu.memory_space<smem>>
    %366 = arith.mulf %365, %119 : f32
    %367 = arith.mulf %366, %110 : f32
    %368 = arith.subf %361, %367 : f32
    %369 = vector.broadcast %366 : f32 to vector<16x128xf32>
    %370 = arith.mulf %118, %369 : vector<16x128xf32>
    %371 = arith.addf %364, %370 : vector<16x128xf32>
    %372 = vector.broadcast %368 : f32 to vector<16x128xf32>
    %373 = arith.addf %371, %372 : vector<16x128xf32>
    %cst_136 = arith.constant 0.000000e+00 : f32
    %374 = vector.broadcast %cst_136 : f32 to vector<16x128xf32>
    %375 = arith.maximumf %373, %374 : vector<16x128xf32>
    %c0_137 = arith.constant 0 : index
    %c0_138 = arith.constant 0 : index
    %376 = memref.load %arg10[%c0_137, %c0_138] : memref<4x8xf32, #tpu.memory_space<smem>>
    %377 = arith.mulf %376, %57 : f32
    %378 = vector.broadcast %377 : f32 to vector<16x128xf32>
    %379 = arith.mulf %151, %378 : vector<16x128xf32>
    %c0_139 = arith.constant 0 : index
    %c1_140 = arith.constant 1 : index
    %380 = memref.load %arg10[%c0_139, %c1_140] : memref<4x8xf32, #tpu.memory_space<smem>>
    %381 = arith.mulf %380, %57 : f32
    %382 = vector.broadcast %381 : f32 to vector<16x128xf32>
    %383 = arith.mulf %183, %382 : vector<16x128xf32>
    %384 = arith.addf %379, %383 : vector<16x128xf32>
    %c0_141 = arith.constant 0 : index
    %c2_142 = arith.constant 2 : index
    %385 = memref.load %arg10[%c0_141, %c2_142] : memref<4x8xf32, #tpu.memory_space<smem>>
    %386 = arith.mulf %385, %57 : f32
    %387 = vector.broadcast %386 : f32 to vector<16x128xf32>
    %388 = arith.mulf %215, %387 : vector<16x128xf32>
    %389 = arith.addf %384, %388 : vector<16x128xf32>
    %c0_143 = arith.constant 0 : index
    %c3_144 = arith.constant 3 : index
    %390 = memref.load %arg10[%c0_143, %c3_144] : memref<4x8xf32, #tpu.memory_space<smem>>
    %391 = arith.mulf %390, %57 : f32
    %392 = vector.broadcast %391 : f32 to vector<16x128xf32>
    %393 = arith.mulf %247, %392 : vector<16x128xf32>
    %394 = arith.addf %389, %393 : vector<16x128xf32>
    %c0_145 = arith.constant 0 : index
    %c4_146 = arith.constant 4 : index
    %395 = memref.load %arg10[%c0_145, %c4_146] : memref<4x8xf32, #tpu.memory_space<smem>>
    %396 = arith.mulf %395, %57 : f32
    %397 = vector.broadcast %396 : f32 to vector<16x128xf32>
    %398 = arith.mulf %279, %397 : vector<16x128xf32>
    %399 = arith.addf %394, %398 : vector<16x128xf32>
    %c0_147 = arith.constant 0 : index
    %c5_148 = arith.constant 5 : index
    %400 = memref.load %arg10[%c0_147, %c5_148] : memref<4x8xf32, #tpu.memory_space<smem>>
    %401 = arith.mulf %400, %57 : f32
    %402 = vector.broadcast %401 : f32 to vector<16x128xf32>
    %403 = arith.mulf %311, %402 : vector<16x128xf32>
    %404 = arith.addf %399, %403 : vector<16x128xf32>
    %c0_149 = arith.constant 0 : index
    %c6_150 = arith.constant 6 : index
    %405 = memref.load %arg10[%c0_149, %c6_150] : memref<4x8xf32, #tpu.memory_space<smem>>
    %406 = arith.mulf %405, %57 : f32
    %407 = vector.broadcast %406 : f32 to vector<16x128xf32>
    %408 = arith.mulf %343, %407 : vector<16x128xf32>
    %409 = arith.addf %404, %408 : vector<16x128xf32>
    %c0_151 = arith.constant 0 : index
    %c7_152 = arith.constant 7 : index
    %410 = memref.load %arg10[%c0_151, %c7_152] : memref<4x8xf32, #tpu.memory_space<smem>>
    %411 = arith.mulf %410, %57 : f32
    %412 = vector.broadcast %411 : f32 to vector<16x128xf32>
    %413 = arith.mulf %375, %412 : vector<16x128xf32>
    %414 = arith.addf %409, %413 : vector<16x128xf32>
    %415 = arith.addf %58, %414 : vector<16x128xf32>
    %c0_153 = arith.constant 0 : index
    %416 = memref.load %arg11[%c0_153] : memref<4xf32, #tpu.memory_space<smem>>
    %417 = arith.mulf %416, %57 : f32
    %418 = vector.broadcast %417 : f32 to vector<16x128xf32>
    %419 = arith.addf %415, %418 : vector<16x128xf32>
    %c1_154 = arith.constant 1 : index
    %c0_155 = arith.constant 0 : index
    %420 = memref.load %arg10[%c1_154, %c0_155] : memref<4x8xf32, #tpu.memory_space<smem>>
    %421 = arith.mulf %420, %77 : f32
    %422 = vector.broadcast %421 : f32 to vector<16x128xf32>
    %423 = arith.mulf %151, %422 : vector<16x128xf32>
    %c1_156 = arith.constant 1 : index
    %c1_157 = arith.constant 1 : index
    %424 = memref.load %arg10[%c1_156, %c1_157] : memref<4x8xf32, #tpu.memory_space<smem>>
    %425 = arith.mulf %424, %77 : f32
    %426 = vector.broadcast %425 : f32 to vector<16x128xf32>
    %427 = arith.mulf %183, %426 : vector<16x128xf32>
    %428 = arith.addf %423, %427 : vector<16x128xf32>
    %c1_158 = arith.constant 1 : index
    %c2_159 = arith.constant 2 : index
    %429 = memref.load %arg10[%c1_158, %c2_159] : memref<4x8xf32, #tpu.memory_space<smem>>
    %430 = arith.mulf %429, %77 : f32
    %431 = vector.broadcast %430 : f32 to vector<16x128xf32>
    %432 = arith.mulf %215, %431 : vector<16x128xf32>
    %433 = arith.addf %428, %432 : vector<16x128xf32>
    %c1_160 = arith.constant 1 : index
    %c3_161 = arith.constant 3 : index
    %434 = memref.load %arg10[%c1_160, %c3_161] : memref<4x8xf32, #tpu.memory_space<smem>>
    %435 = arith.mulf %434, %77 : f32
    %436 = vector.broadcast %435 : f32 to vector<16x128xf32>
    %437 = arith.mulf %247, %436 : vector<16x128xf32>
    %438 = arith.addf %433, %437 : vector<16x128xf32>
    %c1_162 = arith.constant 1 : index
    %c4_163 = arith.constant 4 : index
    %439 = memref.load %arg10[%c1_162, %c4_163] : memref<4x8xf32, #tpu.memory_space<smem>>
    %440 = arith.mulf %439, %77 : f32
    %441 = vector.broadcast %440 : f32 to vector<16x128xf32>
    %442 = arith.mulf %279, %441 : vector<16x128xf32>
    %443 = arith.addf %438, %442 : vector<16x128xf32>
    %c1_164 = arith.constant 1 : index
    %c5_165 = arith.constant 5 : index
    %444 = memref.load %arg10[%c1_164, %c5_165] : memref<4x8xf32, #tpu.memory_space<smem>>
    %445 = arith.mulf %444, %77 : f32
    %446 = vector.broadcast %445 : f32 to vector<16x128xf32>
    %447 = arith.mulf %311, %446 : vector<16x128xf32>
    %448 = arith.addf %443, %447 : vector<16x128xf32>
    %c1_166 = arith.constant 1 : index
    %c6_167 = arith.constant 6 : index
    %449 = memref.load %arg10[%c1_166, %c6_167] : memref<4x8xf32, #tpu.memory_space<smem>>
    %450 = arith.mulf %449, %77 : f32
    %451 = vector.broadcast %450 : f32 to vector<16x128xf32>
    %452 = arith.mulf %343, %451 : vector<16x128xf32>
    %453 = arith.addf %448, %452 : vector<16x128xf32>
    %c1_168 = arith.constant 1 : index
    %c7_169 = arith.constant 7 : index
    %454 = memref.load %arg10[%c1_168, %c7_169] : memref<4x8xf32, #tpu.memory_space<smem>>
    %455 = arith.mulf %454, %77 : f32
    %456 = vector.broadcast %455 : f32 to vector<16x128xf32>
    %457 = arith.mulf %375, %456 : vector<16x128xf32>
    %458 = arith.addf %453, %457 : vector<16x128xf32>
    %459 = arith.addf %78, %458 : vector<16x128xf32>
    %c1_170 = arith.constant 1 : index
    %460 = memref.load %arg11[%c1_170] : memref<4xf32, #tpu.memory_space<smem>>
    %461 = arith.mulf %460, %77 : f32
    %462 = vector.broadcast %461 : f32 to vector<16x128xf32>
    %463 = arith.addf %459, %462 : vector<16x128xf32>
    %c2_171 = arith.constant 2 : index
    %c0_172 = arith.constant 0 : index
    %464 = memref.load %arg10[%c2_171, %c0_172] : memref<4x8xf32, #tpu.memory_space<smem>>
    %465 = arith.mulf %464, %97 : f32
    %466 = vector.broadcast %465 : f32 to vector<16x128xf32>
    %467 = arith.mulf %151, %466 : vector<16x128xf32>
    %c2_173 = arith.constant 2 : index
    %c1_174 = arith.constant 1 : index
    %468 = memref.load %arg10[%c2_173, %c1_174] : memref<4x8xf32, #tpu.memory_space<smem>>
    %469 = arith.mulf %468, %97 : f32
    %470 = vector.broadcast %469 : f32 to vector<16x128xf32>
    %471 = arith.mulf %183, %470 : vector<16x128xf32>
    %472 = arith.addf %467, %471 : vector<16x128xf32>
    %c2_175 = arith.constant 2 : index
    %c2_176 = arith.constant 2 : index
    %473 = memref.load %arg10[%c2_175, %c2_176] : memref<4x8xf32, #tpu.memory_space<smem>>
    %474 = arith.mulf %473, %97 : f32
    %475 = vector.broadcast %474 : f32 to vector<16x128xf32>
    %476 = arith.mulf %215, %475 : vector<16x128xf32>
    %477 = arith.addf %472, %476 : vector<16x128xf32>
    %c2_177 = arith.constant 2 : index
    %c3_178 = arith.constant 3 : index
    %478 = memref.load %arg10[%c2_177, %c3_178] : memref<4x8xf32, #tpu.memory_space<smem>>
    %479 = arith.mulf %478, %97 : f32
    %480 = vector.broadcast %479 : f32 to vector<16x128xf32>
    %481 = arith.mulf %247, %480 : vector<16x128xf32>
    %482 = arith.addf %477, %481 : vector<16x128xf32>
    %c2_179 = arith.constant 2 : index
    %c4_180 = arith.constant 4 : index
    %483 = memref.load %arg10[%c2_179, %c4_180] : memref<4x8xf32, #tpu.memory_space<smem>>
    %484 = arith.mulf %483, %97 : f32
    %485 = vector.broadcast %484 : f32 to vector<16x128xf32>
    %486 = arith.mulf %279, %485 : vector<16x128xf32>
    %487 = arith.addf %482, %486 : vector<16x128xf32>
    %c2_181 = arith.constant 2 : index
    %c5_182 = arith.constant 5 : index
    %488 = memref.load %arg10[%c2_181, %c5_182] : memref<4x8xf32, #tpu.memory_space<smem>>
    %489 = arith.mulf %488, %97 : f32
    %490 = vector.broadcast %489 : f32 to vector<16x128xf32>
    %491 = arith.mulf %311, %490 : vector<16x128xf32>
    %492 = arith.addf %487, %491 : vector<16x128xf32>
    %c2_183 = arith.constant 2 : index
    %c6_184 = arith.constant 6 : index
    %493 = memref.load %arg10[%c2_183, %c6_184] : memref<4x8xf32, #tpu.memory_space<smem>>
    %494 = arith.mulf %493, %97 : f32
    %495 = vector.broadcast %494 : f32 to vector<16x128xf32>
    %496 = arith.mulf %343, %495 : vector<16x128xf32>
    %497 = arith.addf %492, %496 : vector<16x128xf32>
    %c2_185 = arith.constant 2 : index
    %c7_186 = arith.constant 7 : index
    %498 = memref.load %arg10[%c2_185, %c7_186] : memref<4x8xf32, #tpu.memory_space<smem>>
    %499 = arith.mulf %498, %97 : f32
    %500 = vector.broadcast %499 : f32 to vector<16x128xf32>
    %501 = arith.mulf %375, %500 : vector<16x128xf32>
    %502 = arith.addf %497, %501 : vector<16x128xf32>
    %503 = arith.addf %98, %502 : vector<16x128xf32>
    %c2_187 = arith.constant 2 : index
    %504 = memref.load %arg11[%c2_187] : memref<4xf32, #tpu.memory_space<smem>>
    %505 = arith.mulf %504, %97 : f32
    %506 = vector.broadcast %505 : f32 to vector<16x128xf32>
    %507 = arith.addf %503, %506 : vector<16x128xf32>
    %c3_188 = arith.constant 3 : index
    %c0_189 = arith.constant 0 : index
    %508 = memref.load %arg10[%c3_188, %c0_189] : memref<4x8xf32, #tpu.memory_space<smem>>
    %509 = arith.mulf %508, %117 : f32
    %510 = vector.broadcast %509 : f32 to vector<16x128xf32>
    %511 = arith.mulf %151, %510 : vector<16x128xf32>
    %c3_190 = arith.constant 3 : index
    %c1_191 = arith.constant 1 : index
    %512 = memref.load %arg10[%c3_190, %c1_191] : memref<4x8xf32, #tpu.memory_space<smem>>
    %513 = arith.mulf %512, %117 : f32
    %514 = vector.broadcast %513 : f32 to vector<16x128xf32>
    %515 = arith.mulf %183, %514 : vector<16x128xf32>
    %516 = arith.addf %511, %515 : vector<16x128xf32>
    %c3_192 = arith.constant 3 : index
    %c2_193 = arith.constant 2 : index
    %517 = memref.load %arg10[%c3_192, %c2_193] : memref<4x8xf32, #tpu.memory_space<smem>>
    %518 = arith.mulf %517, %117 : f32
    %519 = vector.broadcast %518 : f32 to vector<16x128xf32>
    %520 = arith.mulf %215, %519 : vector<16x128xf32>
    %521 = arith.addf %516, %520 : vector<16x128xf32>
    %c3_194 = arith.constant 3 : index
    %c3_195 = arith.constant 3 : index
    %522 = memref.load %arg10[%c3_194, %c3_195] : memref<4x8xf32, #tpu.memory_space<smem>>
    %523 = arith.mulf %522, %117 : f32
    %524 = vector.broadcast %523 : f32 to vector<16x128xf32>
    %525 = arith.mulf %247, %524 : vector<16x128xf32>
    %526 = arith.addf %521, %525 : vector<16x128xf32>
    %c3_196 = arith.constant 3 : index
    %c4_197 = arith.constant 4 : index
    %527 = memref.load %arg10[%c3_196, %c4_197] : memref<4x8xf32, #tpu.memory_space<smem>>
    %528 = arith.mulf %527, %117 : f32
    %529 = vector.broadcast %528 : f32 to vector<16x128xf32>
    %530 = arith.mulf %279, %529 : vector<16x128xf32>
    %531 = arith.addf %526, %530 : vector<16x128xf32>
    %c3_198 = arith.constant 3 : index
    %c5_199 = arith.constant 5 : index
    %532 = memref.load %arg10[%c3_198, %c5_199] : memref<4x8xf32, #tpu.memory_space<smem>>
    %533 = arith.mulf %532, %117 : f32
    %534 = vector.broadcast %533 : f32 to vector<16x128xf32>
    %535 = arith.mulf %311, %534 : vector<16x128xf32>
    %536 = arith.addf %531, %535 : vector<16x128xf32>
    %c3_200 = arith.constant 3 : index
    %c6_201 = arith.constant 6 : index
    %537 = memref.load %arg10[%c3_200, %c6_201] : memref<4x8xf32, #tpu.memory_space<smem>>
    %538 = arith.mulf %537, %117 : f32
    %539 = vector.broadcast %538 : f32 to vector<16x128xf32>
    %540 = arith.mulf %343, %539 : vector<16x128xf32>
    %541 = arith.addf %536, %540 : vector<16x128xf32>
    %c3_202 = arith.constant 3 : index
    %c7_203 = arith.constant 7 : index
    %542 = memref.load %arg10[%c3_202, %c7_203] : memref<4x8xf32, #tpu.memory_space<smem>>
    %543 = arith.mulf %542, %117 : f32
    %544 = vector.broadcast %543 : f32 to vector<16x128xf32>
    %545 = arith.mulf %375, %544 : vector<16x128xf32>
    %546 = arith.addf %541, %545 : vector<16x128xf32>
    %547 = arith.addf %118, %546 : vector<16x128xf32>
    %c3_204 = arith.constant 3 : index
    %548 = memref.load %arg11[%c3_204] : memref<4xf32, #tpu.memory_space<smem>>
    %549 = arith.mulf %548, %117 : f32
    %550 = vector.broadcast %549 : f32 to vector<16x128xf32>
    %551 = arith.addf %547, %550 : vector<16x128xf32>
    %552 = tpu.concatenate %419, %463 in 1 : vector<16x128xf32>, vector<16x128xf32> -> vector<16x256xf32>
    %553 = tpu.concatenate %507, %551 in 1 : vector<16x128xf32>, vector<16x128xf32> -> vector<16x256xf32>
    %cst_205 = arith.constant dense<0.000000e+00> : vector<16x256xf32>
    %554 = tpu.matmul %1, %552, %cst_205 {dimension_numbers = #tpu.dot_dimension_numbers<[1], [0], [0], [1], [0, 0, 1, 1], [], []>} : vector<16x16xf32>, vector<16x256xf32>, vector<16x256xf32> -> vector<16x256xf32>
    %cst_206 = arith.constant dense<0.000000e+00> : vector<16x256xf32>
    %555 = tpu.matmul %3, %553, %cst_206 {dimension_numbers = #tpu.dot_dimension_numbers<[1], [0], [0], [1], [0, 0, 1, 1], [], []>} : vector<16x16xf32>, vector<16x256xf32>, vector<16x256xf32> -> vector<16x256xf32>
    %556 = arith.subf %554, %555 : vector<16x256xf32>
    %557 = arith.addf %552, %553 : vector<16x256xf32>
    %cst_207 = arith.constant dense<0.000000e+00> : vector<16x256xf32>
    %558 = tpu.matmul %5, %557, %cst_207 {dimension_numbers = #tpu.dot_dimension_numbers<[1], [0], [0], [1], [0, 0, 1, 1], [], []>} : vector<16x16xf32>, vector<16x256xf32>, vector<16x256xf32> -> vector<16x256xf32>
    %559 = arith.subf %558, %554 : vector<16x256xf32>
    %560 = arith.subf %559, %555 : vector<16x256xf32>
    %cst_208 = arith.constant dense<0.000000e+00> : vector<16x256xf32>
    %561 = tpu.matmul %556, %7, %cst_208 {dimension_numbers = #tpu.dot_dimension_numbers<[1], [0], [0], [1], [0, 0, 1, 1], [], []>} : vector<16x256xf32>, vector<256x256xf32>, vector<16x256xf32> -> vector<16x256xf32>
    %cst_209 = arith.constant dense<0.000000e+00> : vector<16x256xf32>
    %562 = tpu.matmul %560, %9, %cst_209 {dimension_numbers = #tpu.dot_dimension_numbers<[1], [0], [0], [1], [0, 0, 1, 1], [], []>} : vector<16x256xf32>, vector<256x256xf32>, vector<16x256xf32> -> vector<16x256xf32>
    %563 = arith.subf %561, %562 : vector<16x256xf32>
    %564 = arith.addf %556, %560 : vector<16x256xf32>
    %cst_210 = arith.constant dense<0.000000e+00> : vector<16x256xf32>
    %565 = tpu.matmul %564, %11, %cst_210 {dimension_numbers = #tpu.dot_dimension_numbers<[1], [0], [0], [1], [0, 0, 1, 1], [], []>} : vector<16x256xf32>, vector<256x256xf32>, vector<16x256xf32> -> vector<16x256xf32>
    %566 = arith.subf %565, %561 : vector<16x256xf32>
    %567 = arith.subf %566, %562 : vector<16x256xf32>
    %c0_211 = arith.constant 0 : index
    %c0_212 = arith.constant 0 : index
    %568 = vector.load %arg5[%c0_211, %c0_212] : memref<1x256xf32, #tpu.memory_space<vmem>>, vector<1x256xf32>
    %c0_213 = arith.constant 0 : index
    %569 = memref.load %arg12[%c0_213] : memref<1xf32, #tpu.memory_space<smem>>
    %570 = vector.broadcast %569 : f32 to vector<1x256xf32>
    %571 = arith.mulf %568, %570 : vector<1x256xf32>
    %c0_214 = arith.constant 0 : index
    %c0_215 = arith.constant 0 : index
    %c0_216 = arith.constant 0 : index
    %572 = vector.load %arg3[%c0_214, %c0_215, %c0_216] : memref<1x16x256xf32, #tpu.memory_space<vmem>>, vector<1x16x256xf32>
    %573 = vector.shape_cast %572 : vector<1x16x256xf32> to vector<16x256xf32>
    %574 = arith.subf %563, %573 : vector<16x256xf32>
    %575 = vector.broadcast %571 : vector<1x256xf32> to vector<16x256xf32>
    %576 = arith.mulf %574, %575 : vector<16x256xf32>
    %577 = arith.subf %563, %576 : vector<16x256xf32>
    %c0_217 = arith.constant 0 : index
    %c0_218 = arith.constant 0 : index
    %c0_219 = arith.constant 0 : index
    %578 = vector.load %arg4[%c0_217, %c0_218, %c0_219] : memref<1x16x256xf32, #tpu.memory_space<vmem>>, vector<1x16x256xf32>
    %579 = vector.shape_cast %578 : vector<1x16x256xf32> to vector<16x256xf32>
    %580 = arith.subf %567, %579 : vector<16x256xf32>
    %581 = vector.broadcast %571 : vector<1x256xf32> to vector<16x256xf32>
    %582 = arith.mulf %580, %581 : vector<16x256xf32>
    %583 = arith.subf %567, %582 : vector<16x256xf32>
    %c0_220 = arith.constant 0 : index
    %c0_221 = arith.constant 0 : index
    %c0_222 = arith.constant 0 : index
    %584 = vector.load %arg13[%c0_220, %c0_221, %c0_222] : memref<1x16x256xf32, #tpu.memory_space<vmem>>, vector<1x16x256xf32>
    %585 = vector.shape_cast %584 : vector<1x16x256xf32> to vector<16x256xf32>
    %586 = vector.shape_cast %577 : vector<16x256xf32> to vector<1x16x256xf32>
    tpu.vector_store %arg13[%c0_220, %c0_221, %c0_222], %586 {strides = array<i32>} : memref<1x16x256xf32, #tpu.memory_space<vmem>>, vector<1x16x256xf32>,
    %c0_223 = arith.constant 0 : index
    %c0_224 = arith.constant 0 : index
    %c0_225 = arith.constant 0 : index
    %587 = vector.load %arg14[%c0_223, %c0_224, %c0_225] : memref<1x16x256xf32, #tpu.memory_space<vmem>>, vector<1x16x256xf32>
    %588 = vector.shape_cast %587 : vector<1x16x256xf32> to vector<16x256xf32>
    %589 = vector.shape_cast %583 : vector<16x256xf32> to vector<1x16x256xf32>
    tpu.vector_store %arg14[%c0_223, %c0_224, %c0_225], %589 {strides = array<i32>} : memref<1x16x256xf32, #tpu.memory_space<vmem>>, vector<1x16x256xf32>,
    %cst_226 = arith.constant dense<0.000000e+00> : vector<16x256xf32>
    %590 = tpu.matmul %1, %577, %cst_226 {dimension_numbers = #tpu.dot_dimension_numbers<[1], [0], [0], [1], [0, 0, 1, 1], [], []>} : vector<16x16xf32>, vector<16x256xf32>, vector<16x256xf32> -> vector<16x256xf32>
    %cst_227 = arith.constant dense<0.000000e+00> : vector<16x256xf32>
    %591 = tpu.matmul %3, %583, %cst_227 {dimension_numbers = #tpu.dot_dimension_numbers<[1], [0], [0], [1], [0, 0, 1, 1], [], []>} : vector<16x16xf32>, vector<16x256xf32>, vector<16x256xf32> -> vector<16x256xf32>
    %592 = arith.addf %590, %591 : vector<16x256xf32>
    %593 = arith.subf %583, %577 : vector<16x256xf32>
    %cst_228 = arith.constant dense<0.000000e+00> : vector<16x256xf32>
    %594 = tpu.matmul %5, %593, %cst_228 {dimension_numbers = #tpu.dot_dimension_numbers<[1], [0], [0], [1], [0, 0, 1, 1], [], []>} : vector<16x16xf32>, vector<16x256xf32>, vector<16x256xf32> -> vector<16x256xf32>
    %595 = arith.addf %594, %590 : vector<16x256xf32>
    %596 = arith.subf %595, %591 : vector<16x256xf32>
    %cst_229 = arith.constant dense<0.000000e+00> : vector<16x256xf32>
    %597 = tpu.matmul %592, %7, %cst_229 {dimension_numbers = #tpu.dot_dimension_numbers<[1], [0], [0], [1], [0, 0, 1, 1], [], []>} : vector<16x256xf32>, vector<256x256xf32>, vector<16x256xf32> -> vector<16x256xf32>
    %cst_230 = arith.constant dense<0.000000e+00> : vector<16x256xf32>
    %598 = tpu.matmul %596, %9, %cst_230 {dimension_numbers = #tpu.dot_dimension_numbers<[1], [0], [0], [1], [0, 0, 1, 1], [], []>} : vector<16x256xf32>, vector<256x256xf32>, vector<16x256xf32> -> vector<16x256xf32>
    %599 = arith.addf %597, %598 : vector<16x256xf32>
    %600 = arith.subf %596, %592 : vector<16x256xf32>
    %cst_231 = arith.constant dense<0.000000e+00> : vector<16x256xf32>
    %601 = tpu.matmul %600, %11, %cst_231 {dimension_numbers = #tpu.dot_dimension_numbers<[1], [0], [0], [1], [0, 0, 1, 1], [], []>} : vector<16x256xf32>, vector<256x256xf32>, vector<16x256xf32> -> vector<16x256xf32>
    %602 = arith.addf %601, %597 : vector<16x256xf32>
    %603 = arith.subf %602, %598 : vector<16x256xf32>
    %c0_232 = arith.constant 0 : index
    %c0_233 = arith.constant 0 : index
    %c0_234 = arith.constant 0 : index
    %604 = vector.load %arg15[%c0_232, %c0_233, %c0_234] : memref<1x16x256xf32, #tpu.memory_space<vmem>>, vector<1x16x256xf32>
    %605 = vector.shape_cast %604 : vector<1x16x256xf32> to vector<16x256xf32>
    %606 = vector.shape_cast %599 : vector<16x256xf32> to vector<1x16x256xf32>
    tpu.vector_store %arg15[%c0_232, %c0_233, %c0_234], %606 {strides = array<i32>} : memref<1x16x256xf32, #tpu.memory_space<vmem>>, vector<1x16x256xf32>,
    %c0_235 = arith.constant 0 : index
    %c0_236 = arith.constant 0 : index
    %c0_237 = arith.constant 0 : index
    %607 = vector.load %arg16[%c0_235, %c0_236, %c0_237] : memref<1x16x256xf32, #tpu.memory_space<vmem>>, vector<1x16x256xf32>
    %608 = vector.shape_cast %607 : vector<1x16x256xf32> to vector<16x256xf32>
    %609 = vector.shape_cast %603 : vector<16x256xf32> to vector<1x16x256xf32>
    tpu.vector_store %arg16[%c0_235, %c0_236, %c0_237], %609 {strides = array<i32>} : memref<1x16x256xf32, #tpu.memory_space<vmem>>, vector<1x16x256xf32>,
    return
  }
  func.func @transform_0(%arg0: i32) -> (i32, i32, i32) {
    %c0_i32 = arith.constant 0 : i32
    %c0_i32_0 = arith.constant 0 : i32
    %c0_i32_1 = arith.constant 0 : i32
    return %arg0, %c0_i32, %c0_i32_0 : i32, i32, i32
  }
  func.func @transform_1(%arg0: i32) -> (i32, i32, i32) {
    %c0_i32 = arith.constant 0 : i32
    %c0_i32_0 = arith.constant 0 : i32
    %c0_i32_1 = arith.constant 0 : i32
    return %arg0, %c0_i32, %c0_i32_0 : i32, i32, i32
  }
  func.func @transform_2(%arg0: i32) -> (i32, i32, i32) {
    %c0_i32 = arith.constant 0 : i32
    %c0_i32_0 = arith.constant 0 : i32
    %c0_i32_1 = arith.constant 0 : i32
    return %arg0, %c0_i32, %c0_i32_0 : i32, i32, i32
  }
  func.func @transform_3(%arg0: i32) -> (i32, i32, i32) {
    %c0_i32 = arith.constant 0 : i32
    %c0_i32_0 = arith.constant 0 : i32
    %c0_i32_1 = arith.constant 0 : i32
    return %arg0, %c0_i32, %c0_i32_0 : i32, i32, i32
  }
  func.func @transform_4(%arg0: i32) -> (i32, i32) {
    %c0_i32 = arith.constant 0 : i32
    %c0_i32_0 = arith.constant 0 : i32
    %c0_i32_1 = arith.constant 0 : i32
    return %c0_i32, %c0_i32_0 : i32, i32
  }
  func.func @transform_5(%arg0: i32) -> (i32, i32, i32) {
    %c0_i32 = arith.constant 0 : i32
    %c0_i32_0 = arith.constant 0 : i32
    %c0_i32_1 = arith.constant 0 : i32
    %c0_i32_2 = arith.constant 0 : i32
    return %c0_i32, %c0_i32_0, %c0_i32_1 : i32, i32, i32
  }
  func.func @transform_6(%arg0: i32) -> (i32, i32, i32) {
    %c0_i32 = arith.constant 0 : i32
    %c0_i32_0 = arith.constant 0 : i32
    %c0_i32_1 = arith.constant 0 : i32
    %c0_i32_2 = arith.constant 0 : i32
    return %c0_i32, %c0_i32_0, %c0_i32_1 : i32, i32, i32
  }
  func.func @transform_7(%arg0: i32) -> (i32, i32) {
    %c0_i32 = arith.constant 0 : i32
    %c0_i32_0 = arith.constant 0 : i32
    %c0_i32_1 = arith.constant 0 : i32
    return %c0_i32, %c0_i32_0 : i32, i32
  }
  func.func @transform_8(%arg0: i32) -> i32 {
    %c0_i32 = arith.constant 0 : i32
    %c0_i32_0 = arith.constant 0 : i32
    return %c0_i32 : i32
  }
  func.func @transform_9(%arg0: i32) -> (i32, i32) {
    %c0_i32 = arith.constant 0 : i32
    %c0_i32_0 = arith.constant 0 : i32
    %c0_i32_1 = arith.constant 0 : i32
    return %c0_i32, %c0_i32_0 : i32, i32
  }
  func.func @transform_10(%arg0: i32) -> i32 {
    %c0_i32 = arith.constant 0 : i32
    %c0_i32_0 = arith.constant 0 : i32
    return %c0_i32 : i32
  }
  func.func @transform_11(%arg0: i32) -> i32 {
    %c0_i32 = arith.constant 0 : i32
    %c0_i32_0 = arith.constant 0 : i32
    return %c0_i32 : i32
  }
  func.func @transform_12(%arg0: i32) -> (i32, i32, i32) {
    %c0_i32 = arith.constant 0 : i32
    %c0_i32_0 = arith.constant 0 : i32
    %c0_i32_1 = arith.constant 0 : i32
    return %arg0, %c0_i32, %c0_i32_0 : i32, i32, i32
  }
  func.func @transform_13(%arg0: i32) -> (i32, i32, i32) {
    %c0_i32 = arith.constant 0 : i32
    %c0_i32_0 = arith.constant 0 : i32
    %c0_i32_1 = arith.constant 0 : i32
    return %arg0, %c0_i32, %c0_i32_0 : i32, i32, i32
  }
  func.func @transform_14(%arg0: i32) -> (i32, i32, i32) {
    %c0_i32 = arith.constant 0 : i32
    %c0_i32_0 = arith.constant 0 : i32
    %c0_i32_1 = arith.constant 0 : i32
    return %arg0, %c0_i32, %c0_i32_0 : i32, i32, i32
  }
  func.func @transform_15(%arg0: i32) -> (i32, i32, i32) {
    %c0_i32 = arith.constant 0 : i32
    %c0_i32_0 = arith.constant 0 : i32
    %c0_i32_1 = arith.constant 0 : i32
    return %arg0, %c0_i32, %c0_i32_0 : i32, i32, i32
  }
}

</mosaic_0001>

<llo_original>
// kernel: tpu_custom_call.1
$region0: #{tpu_custom_call.1}
  #allocation0 [shape = 'u32[]', space=smem, size = 0x4, offset = 0x4, fixed_abs, tag = 'smem constant byte address 0x4 - core index']
  #allocation1 [shape = 'u32[144,128]{1,0:T(1,128)}', space=vmem, size = 0x12000, scoped, tag = 'internal scratch']
  #allocation2 [shape = 'f32[1]{0:T(128)S(6)}', space=smem, size = 0x200, scoped, tag = 'scoped memory for tpu_custom_call.1']
  %s0 = inlined_call_operand.hbm [shape: f32[2,16,256], index: 0, kind: input, shape index: {}]
  %s1 = inlined_call_operand.hbm [shape: f32[2,16,256], index: 1, kind: input, shape index: {}]
  %s2 = inlined_call_operand.hbm [shape: f32[2,16,256], index: 2, kind: input, shape index: {}]
  %s3 = inlined_call_operand.hbm [shape: f32[2,16,256], index: 3, kind: input, shape index: {}]
  %s4 = inlined_call_operand.vmem [shape: f32[1,256], index: 4, kind: input, shape index: {}]
  %s5 = inlined_call_operand.hbm [shape: f32[3,16,16], index: 5, kind: input, shape index: {}]
  %s6 = inlined_call_operand.hbm [shape: f32[3,256,256], index: 6, kind: input, shape index: {}]
  %s7 = inlined_call_operand.vmem [shape: f32[8,4], index: 7, kind: input, shape index: {}]
  %s8 = inlined_call_operand.vmem [shape: f32[8], index: 8, kind: input, shape index: {}]
  %s9 = inlined_call_operand.vmem [shape: f32[4,8], index: 9, kind: input, shape index: {}]
  %s10 = inlined_call_operand.vmem [shape: f32[4], index: 10, kind: input, shape index: {}]
  %s11 = inlined_call_operand.<no memory space> [shape: f32[1], index: 11, kind: input, shape index: {}]
  %s12 = inlined_call_operand.hbm [shape: f32[2,16,256], index: 12, kind: output, shape index: {0}]
  %s13 = inlined_call_operand.hbm [shape: f32[2,16,256], index: 13, kind: output, shape index: {1}]
  %s14 = inlined_call_operand.hbm [shape: f32[2,16,256], index: 14, kind: output, shape index: {2}]
  %s15 = inlined_call_operand.hbm [shape: f32[2,16,256], index: 15, kind: output, shape index: {3}]
  %16 = xla_tuple %s12, %s13, %s14, %s15
  %s17 = sld [smem:[#allocation0]]
  $region145: #{tpu_custom_call.1} parent=0
    _
  %s19 = ssub.s32 1, %s17
  %s20 = scalar_select 0, %s19, %s17
  %21 = sst [smem:[#allocation2]] %s11
  $region1: #{tpu_custom_call.1} parent=0
    #allocation3 [shape = 'u8[32768]{0}', space=vmem, size = 0x8000, scoped, tag = 'input window, operand 0']
    #allocation4 [shape = 's32[2]{0}', space=sflag, size = 0x8, scoped, tag = 'scoped memory for tpu_custom_call.1']
    #allocation5 [shape = 's32[2]{0}', space=sflag, size = 0x8, scoped, tag = 'scoped memory for tpu_custom_call.1']
    #allocation6 [shape = 's32[2]{0}', space=sflag, size = 0x8, scoped, tag = 'scoped memory for tpu_custom_call.1']
    #allocation7 [shape = 'u8[32768]{0}', space=vmem, size = 0x8000, scoped, tag = 'input window, operand 1']
    #allocation8 [shape = 's32[2]{0}', space=sflag, size = 0x8, scoped, tag = 'scoped memory for tpu_custom_call.1']
    #allocation9 [shape = 'u8[32768]{0}', space=vmem, size = 0x8000, scoped, tag = 'input window, operand 2']
    #allocation10 [shape = 'u8[32768]{0}', space=vmem, size = 0x8000, scoped, tag = 'input window, operand 3']
    #allocation11 [shape = 's32[2]{0}', space=sflag, size = 0x8, scoped, tag = 'scoped memory for tpu_custom_call.1']
    #allocation12 [shape = 'u8[24576]{0}', space=vmem, size = 0x6000, scoped, tag = 'input window, operand 5, single buffered']
    #allocation13 [shape = 'u8[786432]{0}', space=vmem, size = 0xc0000, scoped, tag = 'input window, operand 6, single buffered']
    #allocation14 [shape = 's32[1]{0}', space=sflag, size = 0x4, scoped, tag = 'scoped memory for tpu_custom_call.1']
    #allocation15 [shape = 'u8[4096]{0}', space=smem, size = 0x1000, scoped, tag = 'input window, operand 7, single buffered']
    #allocation16 [shape = 'u8[512]{0}', space=smem, size = 0x200, scoped, tag = 'input window, operand 8, single buffered']
    #allocation17 [shape = 's32[1]{0}', space=sflag, size = 0x4, scoped, tag = 'scoped memory for tpu_custom_call.1']
    #allocation18 [shape = 'u8[2048]{0}', space=smem, size = 0x800, scoped, tag = 'input window, operand 9, single buffered']
    #allocation19 [shape = 'u8[512]{0}', space=smem, size = 0x200, scoped, tag = 'input window, operand 10, single buffered']
    #allocation20 [shape = 's32[1]{0}', space=sflag, size = 0x4, scoped, tag = 'scoped memory for tpu_custom_call.1']
    #allocation21 [shape = 'u8[32768]{0}', space=vmem, size = 0x8000, scoped, tag = 'output window, operand 0']
    #allocation22 [shape = 'u8[32768]{0}', space=vmem, size = 0x8000, scoped, tag = 'output window, operand 1']
    #allocation23 [shape = 's32[2]{0}', space=sflag, size = 0x8, scoped, tag = 'scoped memory for tpu_custom_call.1']
    #allocation24 [shape = 'u8[32768]{0}', space=vmem, size = 0x8000, scoped, tag = 'output window, operand 2']
    #allocation25 [shape = 'u8[32768]{0}', space=vmem, size = 0x8000, scoped, tag = 'output window, operand 3']
    #allocation26 [shape = 's32[2]{0}', space=sflag, size = 0x8, scoped, tag = 'scoped memory for tpu_custom_call.1']
    %22 = vsyncpa [#allocation4], 0
    %s23 = scalar_lea.sflag [#allocation4], 1
    %24 = vsyncpa %s23, 0
    %25 = vsyncpa [#allocation8], 0
    %s26 = scalar_lea.sflag [#allocation8], 1
    %27 = vsyncpa %s26, 0
    %28 = vsyncpa [#allocation11], 0
    %s29 = scalar_lea.sflag [#allocation11], 1
    %30 = vsyncpa %s29, 0
    %31 = vsyncpa [#allocation14], 0
    %32 = vsyncpa [#allocation6], 0
    %33 = vsyncpa [#allocation17], 0
    %34 = vsyncpa [#allocation20], 0
    %35 = vsyncpa [#allocation5], 0
    %s36 = scalar_lea.sflag [#allocation5], 1
    %37 = vsyncpa %s36, 0
    %38 = vsyncpa [#allocation23], 0
    %s39 = scalar_lea.sflag [#allocation23], 1
    %40 = vsyncpa %s39, 0
    %41 = vsyncpa [#allocation26], 0
    %s42 = scalar_lea.sflag [#allocation26], 1
    %43 = vsyncpa %s42, 0
    loop: start=0, step=1, limit=4
    $region2: #{tpu_custom_call.1} parent=1 // loop_pre_header
      _
    $region3: #{tpu_custom_call.1} parent=1 // loop_header
      %s45 = sphi 0, %s49
      %p46 = scmp.ge.s32.totalorder %s45, 4
      %s55 = sphi 0, %s57
      %s58 = sphi 0, %s55
      %s59 = sphi 0, %s58
      %s75 = sphi 0, %s59
      %s81 = sphi 0, %s83
      %s84 = sphi 0, %s81
      %s85 = sphi 0, %s84
      %s101 = sphi 0, %s85
      %s107 = sphi 0, %s109
      %s110 = sphi 0, %s107
      %s111 = sphi 0, %s110
      %s127 = sphi 0, %s111
      %s133 = sphi 0, %s135
      %s136 = sphi 0, %s133
      %s137 = sphi 0, %s136
      %s153 = sphi 0, %s137
      %s157 = sphi 0, %s157
      %s159 = sphi 0, %s157
      %s160 = sphi 0, %s159
      %s174 = sphi 0, %s160
      %s178 = sphi 0, %s178
      %s180 = sphi 0, %s178
      %s181 = sphi 0, %s180
      %s195 = sphi 0, %s181
      %s199 = sphi 0, %s199
      %s201 = sphi 0, %s199
      %s202 = sphi 0, %s201
      %s216 = sphi 0, %s202
      %s220 = sphi 0, %s220
      %s222 = sphi 0, %s220
      %s223 = sphi 0, %s222
      %s237 = sphi 0, %s223
      %s241 = sphi 0, %s241
      %s243 = sphi 0, %s241
      %s244 = sphi 0, %s243
      %s258 = sphi 0, %s244
      %s262 = sphi 0, %s262
      %s264 = sphi 0, %s262
      %s265 = sphi 0, %s264
      %s279 = sphi 0, %s265
      %s283 = sphi 0, %s283
      %s285 = sphi 0, %s283
      %s286 = sphi 0, %s285
      %s300 = sphi 0, %s286
      %s304 = sphi 0, %s304
      %s306 = sphi 0, %s304
      %s307 = sphi 0, %s306
      %s321 = sphi 0, %s307
      %s327 = sphi 0, %s329
      %s330 = sphi 0, %s327
      %s331 = sphi 0, %s330
      %s347 = sphi 0, %s331
      %s353 = sphi 0, %s355
      %s356 = sphi 0, %s353
      %s357 = sphi 0, %s356
      %s373 = sphi 0, %s357
      %s379 = sphi 0, %s381
      %s382 = sphi 0, %s379
      %s383 = sphi 0, %s382
      %s399 = sphi 0, %s383
      %s405 = sphi 0, %s407
      %s408 = sphi 0, %s405
      %s409 = sphi 0, %s408
      %s425 = sphi 0, %s409
    $region4: #{tpu_custom_call.1} parent=1 // loop_header_branch
      %48 = sbr.rel (%p46) target = $region8
    $region5: #{tpu_custom_call.1} parent=1 // loop_body
      %s50 = ssub.s32 %s45, 1
      %s51 = ssub.s32 %s45, 2
      %s52 = sadd.s32 %s45, 1
      %s53 = ssub.s32 %s45, %s52
      %p54 = scmp.eq.s32.totalorder %s53, 0
      %s56 = sadd.s32 %s55, 1
      %s57 = scalar_select %p54, %s55, %s56
      %p60 = pneg %p54
      %p61 = scmp.eq.s32.totalorder %s45, 1
      %p62 = por %p60, %p61
      %p63 = scmp.ne.s32.totalorder %s55, %s58
      %p64 = scmp.eq.s32.totalorder %s45, 0
      %p65 = por %p63, %p64
      %p66 = scmp.ne.s32.totalorder %s55, %s58
      %p67 = scmp.eq.s32.totalorder %s50, 1
      %p68 = por %p66, %p67
      %p69 = scmp.ne.s32.totalorder %s58, %s59
      %p70 = scmp.eq.s32.totalorder %s50, 0
      %p71 = por %p69, %p70
      %p72 = scmp.ne.s32.totalorder %s58, %s59
      %p73 = scmp.eq.s32.totalorder %s51, 1
      %p74 = por %p72, %p73
      %p76 = scmp.ne.s32.totalorder %s59, %s75
      %p77 = scmp.eq.s32.totalorder %s51, 0
      %p78 = por %p76, %p77
      %s79 = ssub.s32 %s45, %s52
      %p80 = scmp.eq.s32.totalorder %s79, 0
      %s82 = sadd.s32 %s81, 1
      %s83 = scalar_select %p80, %s81, %s82
      %p86 = pneg %p80
      %p87 = scmp.eq.s32.totalorder %s45, 1
      %p88 = por %p86, %p87
      %p89 = scmp.ne.s32.totalorder %s81, %s84
      %p90 = scmp.eq.s32.totalorder %s45, 0
      %p91 = por %p89, %p90
      %p92 = scmp.ne.s32.totalorder %s81, %s84
      %p93 = scmp.eq.s32.totalorder %s50, 1
      %p94 = por %p92, %p93
      %p95 = scmp.ne.s32.totalorder %s84, %s85
      %p96 = scmp.eq.s32.totalorder %s50, 0
      %p97 = por %p95, %p96
      %p98 = scmp.ne.s32.totalorder %s84, %s85
      %p99 = scmp.eq.s32.totalorder %s51, 1
      %p100 = por %p98, %p99
      %p102 = scmp.ne.s32.totalorder %s85, %s101
      %p103 = scmp.eq.s32.totalorder %s51, 0
      %p104 = por %p102, %p103
      %s105 = ssub.s32 %s45, %s52
      %p106 = scmp.eq.s32.totalorder %s105, 0
      %s108 = sadd.s32 %s107, 1
      %s109 = scalar_select %p106, %s107, %s108
      %p112 = pneg %p106
      %p113 = scmp.eq.s32.totalorder %s45, 1
      %p114 = por %p112, %p113
      %p115 = scmp.ne.s32.totalorder %s107, %s110
      %p116 = scmp.eq.s32.totalorder %s45, 0
      %p117 = por %p115, %p116
      %p118 = scmp.ne.s32.totalorder %s107, %s110
      %p119 = scmp.eq.s32.totalorder %s50, 1
      %p120 = por %p118, %p119
      %p121 = scmp.ne.s32.totalorder %s110, %s111
      %p122 = scmp.eq.s32.totalorder %s50, 0
      %p123 = por %p121, %p122
      %p124 = scmp.ne.s32.totalorder %s110, %s111
      %p125 = scmp.eq.s32.totalorder %s51, 1
      %p126 = por %p124, %p125
      %p128 = scmp.ne.s32.totalorder %s111, %s127
      %p129 = scmp.eq.s32.totalorder %s51, 0
      %p130 = por %p128, %p129
      %s131 = ssub.s32 %s45, %s52
      %p132 = scmp.eq.s32.totalorder %s131, 0
      %s134 = sadd.s32 %s133, 1
      %s135 = scalar_select %p132, %s133, %s134
      %p138 = pneg %p132
      %p139 = scmp.eq.s32.totalorder %s45, 1
      %p140 = por %p138, %p139
      %p141 = scmp.ne.s32.totalorder %s133, %s136
      %p142 = scmp.eq.s32.totalorder %s45, 0
      %p143 = por %p141, %p142
      %p144 = scmp.ne.s32.totalorder %s133, %s136
      %p145 = scmp.eq.s32.totalorder %s50, 1
      %p146 = por %p144, %p145
      %p147 = scmp.ne.s32.totalorder %s136, %s137
      %p148 = scmp.eq.s32.totalorder %s50, 0
      %p149 = por %p147, %p148
      %p150 = scmp.ne.s32.totalorder %s136, %s137
      %p151 = scmp.eq.s32.totalorder %s51, 1
      %p152 = por %p150, %p151
      %p154 = scmp.ne.s32.totalorder %s137, %s153
      %p155 = scmp.eq.s32.totalorder %s51, 0
      %p156 = por %p154, %p155
      %s158 = sadd.s32 %s157, 1
      %p161 = scmp.eq.s32.totalorder %s45, 1
      %p162 = scmp.ne.s32.totalorder %s157, %s159
      %p163 = scmp.eq.s32.totalorder %s45, 0
      %p164 = por %p162, %p163
      %p165 = scmp.ne.s32.totalorder %s157, %s159
      %p166 = scmp.eq.s32.totalorder %s50, 1
      %p167 = por %p165, %p166
      %p168 = scmp.ne.s32.totalorder %s159, %s160
      %p169 = scmp.eq.s32.totalorder %s50, 0
      %p170 = por %p168, %p169
      %p171 = scmp.ne.s32.totalorder %s159, %s160
      %p172 = scmp.eq.s32.totalorder %s51, 1
      %p173 = por %p171, %p172
      %p175 = scmp.ne.s32.totalorder %s160, %s174
      %p176 = scmp.eq.s32.totalorder %s51, 0
      %p177 = por %p175, %p176
      %s179 = sadd.s32 %s178, 1
      %p182 = scmp.eq.s32.totalorder %s45, 1
      %p183 = scmp.ne.s32.totalorder %s178, %s180
      %p184 = scmp.eq.s32.totalorder %s45, 0
      %p185 = por %p183, %p184
      %p186 = scmp.ne.s32.totalorder %s178, %s180
      %p187 = scmp.eq.s32.totalorder %s50, 1
      %p188 = por %p186, %p187
      %p189 = scmp.ne.s32.totalorder %s180, %s181
      %p190 = scmp.eq.s32.totalorder %s50, 0
      %p191 = por %p189, %p190
      %p192 = scmp.ne.s32.totalorder %s180, %s181
      %p193 = scmp.eq.s32.totalorder %s51, 1
      %p194 = por %p192, %p193
      %p196 = scmp.ne.s32.totalorder %s181, %s195
      %p197 = scmp.eq.s32.totalorder %s51, 0
      %p198 = por %p196, %p197
      %s200 = sadd.s32 %s199, 1
      %p203 = scmp.eq.s32.totalorder %s45, 1
      %p204 = scmp.ne.s32.totalorder %s199, %s201
      %p205 = scmp.eq.s32.totalorder %s45, 0
      %p206 = por %p204, %p205
      %p207 = scmp.ne.s32.totalorder %s199, %s201
      %p208 = scmp.eq.s32.totalorder %s50, 1
      %p209 = por %p207, %p208
      %p210 = scmp.ne.s32.totalorder %s201, %s202
      %p211 = scmp.eq.s32.totalorder %s50, 0
      %p212 = por %p210, %p211
      %p213 = scmp.ne.s32.totalorder %s201, %s202
      %p214 = scmp.eq.s32.totalorder %s51, 1
      %p215 = por %p213, %p214
      %p217 = scmp.ne.s32.totalorder %s202, %s216
      %p218 = scmp.eq.s32.totalorder %s51, 0
      %p219 = por %p217, %p218
      %s221 = sadd.s32 %s220, 1
      %p224 = scmp.eq.s32.totalorder %s45, 1
      %p225 = scmp.ne.s32.totalorder %s220, %s222
      %p226 = scmp.eq.s32.totalorder %s45, 0
      %p227 = por %p225, %p226
      %p228 = scmp.ne.s32.totalorder %s220, %s222
      %p229 = scmp.eq.s32.totalorder %s50, 1
      %p230 = por %p228, %p229
      %p231 = scmp.ne.s32.totalorder %s222, %s223
      %p232 = scmp.eq.s32.totalorder %s50, 0
      %p233 = por %p231, %p232
      %p234 = scmp.ne.s32.totalorder %s222, %s223
      %p235 = scmp.eq.s32.totalorder %s51, 1
      %p236 = por %p234, %p235
      %p238 = scmp.ne.s32.totalorder %s223, %s237
      %p239 = scmp.eq.s32.totalorder %s51, 0
      %p240 = por %p238, %p239
      %s242 = sadd.s32 %s241, 1
      %p245 = scmp.eq.s32.totalorder %s45, 1
      %p246 = scmp.ne.s32.totalorder %s241, %s243
      %p247 = scmp.eq.s32.totalorder %s45, 0
      %p248 = por %p246, %p247
      %p249 = scmp.ne.s32.totalorder %s241, %s243
      %p250 = scmp.eq.s32.totalorder %s50, 1
      %p251 = por %p249, %p250
      %p252 = scmp.ne.s32.totalorder %s243, %s244
      %p253 = scmp.eq.s32.totalorder %s50, 0
      %p254 = por %p252, %p253
      %p255 = scmp.ne.s32.totalorder %s243, %s244
      %p256 = scmp.eq.s32.totalorder %s51, 1
      %p257 = por %p255, %p256
      %p259 = scmp.ne.s32.totalorder %s244, %s258
      %p260 = scmp.eq.s32.totalorder %s51, 0
      %p261 = por %p259, %p260
      %s263 = sadd.s32 %s262, 1
      %p266 = scmp.eq.s32.totalorder %s45, 1
      %p267 = scmp.ne.s32.totalorder %s262, %s264
      %p268 = scmp.eq.s32.totalorder %s45, 0
      %p269 = por %p267, %p268
      %p270 = scmp.ne.s32.totalorder %s262, %s264
      %p271 = scmp.eq.s32.totalorder %s50, 1
      %p272 = por %p270, %p271
      %p273 = scmp.ne.s32.totalorder %s264, %s265
      %p274 = scmp.eq.s32.totalorder %s50, 0
      %p275 = por %p273, %p274
      %p276 = scmp.ne.s32.totalorder %s264, %s265
      %p277 = scmp.eq.s32.totalorder %s51, 1
      %p278 = por %p276, %p277
      %p280 = scmp.ne.s32.totalorder %s265, %s279
      %p281 = scmp.eq.s32.totalorder %s51, 0
      %p282 = por %p280, %p281
      %s284 = sadd.s32 %s283, 1
      %p287 = scmp.eq.s32.totalorder %s45, 1
      %p288 = scmp.ne.s32.totalorder %s283, %s285
      %p289 = scmp.eq.s32.totalorder %s45, 0
      %p290 = por %p288, %p289
      %p291 = scmp.ne.s32.totalorder %s283, %s285
      %p292 = scmp.eq.s32.totalorder %s50, 1
      %p293 = por %p291, %p292
      %p294 = scmp.ne.s32.totalorder %s285, %s286
      %p295 = scmp.eq.s32.totalorder %s50, 0
      %p296 = por %p294, %p295
      %p297 = scmp.ne.s32.totalorder %s285, %s286
      %p298 = scmp.eq.s32.totalorder %s51, 1
      %p299 = por %p297, %p298
      %p301 = scmp.ne.s32.totalorder %s286, %s300
      %p302 = scmp.eq.s32.totalorder %s51, 0
      %p303 = por %p301, %p302
      %s305 = sadd.s32 %s304, 1
      %p308 = scmp.eq.s32.totalorder %s45, 1
      %p309 = scmp.ne.s32.totalorder %s304, %s306
      %p310 = scmp.eq.s32.totalorder %s45, 0
      %p311 = por %p309, %p310
      %p312 = scmp.ne.s32.totalorder %s304, %s306
      %p313 = scmp.eq.s32.totalorder %s50, 1
      %p314 = por %p312, %p313
      %p315 = scmp.ne.s32.totalorder %s306, %s307
      %p316 = scmp.eq.s32.totalorder %s50, 0
      %p317 = por %p315, %p316
      %p318 = scmp.ne.s32.totalorder %s306, %s307
      %p319 = scmp.eq.s32.totalorder %s51, 1
      %p320 = por %p318, %p319
      %p322 = scmp.ne.s32.totalorder %s307, %s321
      %p323 = scmp.eq.s32.totalorder %s51, 0
      %p324 = por %p322, %p323
      %s325 = ssub.s32 %s45, %s52
      %p326 = scmp.eq.s32.totalorder %s325, 0
      %s328 = sadd.s32 %s327, 1
      %s329 = scalar_select %p326, %s327, %s328
      %p332 = pneg %p326
      %p333 = scmp.eq.s32.totalorder %s45, 1
      %p334 = por %p332, %p333
      %p335 = scmp.ne.s32.totalorder %s327, %s330
      %p336 = scmp.eq.s32.totalorder %s45, 0
      %p337 = por %p335, %p336
      %p338 = scmp.ne.s32.totalorder %s327, %s330
      %p339 = scmp.eq.s32.totalorder %s50, 1
      %p340 = por %p338, %p339
      %p341 = scmp.ne.s32.totalorder %s330, %s331
      %p342 = scmp.eq.s32.totalorder %s50, 0
      %p343 = por %p341, %p342
      %p344 = scmp.ne.s32.totalorder %s330, %s331
      %p345 = scmp.eq.s32.totalorder %s51, 1
      %p346 = por %p344, %p345
      %p348 = scmp.ne.s32.totalorder %s331, %s347
      %p349 = scmp.eq.s32.totalorder %s51, 0
      %p350 = por %p348, %p349
      %s351 = ssub.s32 %s45, %s52
      %p352 = scmp.eq.s32.totalorder %s351, 0
      %s354 = sadd.s32 %s353, 1
      %s355 = scalar_select %p352, %s353, %s354
      %p358 = pneg %p352
      %p359 = scmp.eq.s32.totalorder %s45, 1
      %p360 = por %p358, %p359
      %p361 = scmp.ne.s32.totalorder %s353, %s356
      %p362 = scmp.eq.s32.totalorder %s45, 0
      %p363 = por %p361, %p362
      %p364 = scmp.ne.s32.totalorder %s353, %s356
      %p365 = scmp.eq.s32.totalorder %s50, 1
      %p366 = por %p364, %p365
      %p367 = scmp.ne.s32.totalorder %s356, %s357
      %p368 = scmp.eq.s32.totalorder %s50, 0
      %p369 = por %p367, %p368
      %p370 = scmp.ne.s32.totalorder %s356, %s357
      %p371 = scmp.eq.s32.totalorder %s51, 1
      %p372 = por %p370, %p371
      %p374 = scmp.ne.s32.totalorder %s357, %s373
      %p375 = scmp.eq.s32.totalorder %s51, 0
      %p376 = por %p374, %p375
      %s377 = ssub.s32 %s45, %s52
      %p378 = scmp.eq.s32.totalorder %s377, 0
      %s380 = sadd.s32 %s379, 1
      %s381 = scalar_select %p378, %s379, %s380
      %p384 = pneg %p378
      %p385 = scmp.eq.s32.totalorder %s45, 1
      %p386 = por %p384, %p385
      %p387 = scmp.ne.s32.totalorder %s379, %s382
      %p388 = scmp.eq.s32.totalorder %s45, 0
      %p389 = por %p387, %p388
      %p390 = scmp.ne.s32.totalorder %s379, %s382
      %p391 = scmp.eq.s32.totalorder %s50, 1
      %p392 = por %p390, %p391
      %p393 = scmp.ne.s32.totalorder %s382, %s383
      %p394 = scmp.eq.s32.totalorder %s50, 0
      %p395 = por %p393, %p394
      %p396 = scmp.ne.s32.totalorder %s382, %s383
      %p397 = scmp.eq.s32.totalorder %s51, 1
      %p398 = por %p396, %p397
      %p400 = scmp.ne.s32.totalorder %s383, %s399
      %p401 = scmp.eq.s32.totalorder %s51, 0
      %p402 = por %p400, %p401
      %s403 = ssub.s32 %s45, %s52
      %p404 = scmp.eq.s32.totalorder %s403, 0
      %s406 = sadd.s32 %s405, 1
      %s407 = scalar_select %p404, %s405, %s406
      %p410 = pneg %p404
      %p411 = scmp.eq.s32.totalorder %s45, 1
      %p412 = por %p410, %p411
      %p413 = scmp.ne.s32.totalorder %s405, %s408
      %p414 = scmp.eq.s32.totalorder %s45, 0
      %p415 = por %p413, %p414
      %p416 = scmp.ne.s32.totalorder %s405, %s408
      %p417 = scmp.eq.s32.totalorder %s50, 1
      %p418 = por %p416, %p417
      %p419 = scmp.ne.s32.totalorder %s408, %s409
      %p420 = scmp.eq.s32.totalorder %s50, 0
      %p421 = por %p419, %p420
      %p422 = scmp.ne.s32.totalorder %s408, %s409
      %p423 = scmp.eq.s32.totalorder %s51, 1
      %p424 = por %p422, %p423
      %p426 = scmp.ne.s32.totalorder %s409, %s425
      %p427 = scmp.eq.s32.totalorder %s51, 0
      %p428 = por %p426, %p427
      %p429 = scmp.le.s32.totalorder 1, %s45
      %p430 = scmp.lt.s32.totalorder %s45, 3
      %p431 = pnand %p429, %p430
      %p432 = pneg %p431
      // Predicated region
      $region9: #{tpu_custom_call.1} parent=5 // pred_check
        _
      $region10: #{tpu_custom_call.1} parent=5 // pred_check_branch
        %434 = sbr.rel (%p431) target = $region12
      $region11: #{tpu_custom_call.1} parent=5 // pred_region
        %s435 = ssub.s32 %s45, 1
        // Predicated region
        $region13: #{tpu_custom_call.1} parent=11 // pred_check
          %p436 = pneg %p170
        $region14: #{tpu_custom_call.1} parent=11 // pred_check_branch
          %438 = sbr.rel (%p436) target = $region16
        $region15: #{tpu_custom_call.1} parent=11 // pred_region
          _
        $region16: #{tpu_custom_call.1} parent=11 // pred_fallthru
          _
        // Predicated region
        $region17: #{tpu_custom_call.1} parent=11 // pred_check
          %p439 = pneg %p191
        $region18: #{tpu_custom_call.1} parent=11 // pred_check_branch
          %441 = sbr.rel (%p439) target = $region20
        $region19: #{tpu_custom_call.1} parent=11 // pred_region
          %s443 = ssub.s32 768, 768
          %444 = vsyncadd [#allocation11], %s443
          %s445 = sshll.u32 [#allocation12], 4
          %s446 = int_to_ptr.vmem [resolvable:$true] %s445
          %451 = dma.hbm_to_vmem [thread:$0]  %s5, 768, %s446, [#allocation11], 128, 128, 8
        $region20: #{tpu_custom_call.1} parent=11 // pred_fallthru
          _
        // Predicated region
        $region21: #{tpu_custom_call.1} parent=11 // pred_check
          %p452 = pneg %p212
        $region22: #{tpu_custom_call.1} parent=11 // pred_check_branch
          %454 = sbr.rel (%p452) target = $region24
        $region23: #{tpu_custom_call.1} parent=11 // pred_region
          %s456 = ssub.s32 24576, 24576
          %457 = vsyncadd [#allocation14], %s456
          %s458 = sshll.u32 [#allocation13], 4
          %s459 = int_to_ptr.vmem [resolvable:$true] %s458
          %464 = dma.hbm_to_vmem [thread:$0]  %s6, 24576, %s459, [#allocation14], 256, 256, 16
        $region24: #{tpu_custom_call.1} parent=11 // pred_fallthru
          _
        // Predicated region
        $region25: #{tpu_custom_call.1} parent=11 // pred_check
          %p465 = pneg %p233
        $region26: #{tpu_custom_call.1} parent=11 // pred_check_branch
          %467 = sbr.rel (%p465) target = $region28
        $region27: #{tpu_custom_call.1} parent=11 // pred_region
          %s469 = ssub.s32 128, 128
          %470 = vsyncadd [#allocation6], %s469
          %s472 = sshll.u32 %s7, 4
          %s473 = int_to_ptr.vmem [resolvable:$true] %s472
          %475 = dma.vmem_to_smem %s473, 128, [#allocation15], [#allocation6]
        $region28: #{tpu_custom_call.1} parent=11 // pred_fallthru
          _
        // Predicated region
        $region29: #{tpu_custom_call.1} parent=11 // pred_check
          %p476 = pneg %p254
        $region30: #{tpu_custom_call.1} parent=11 // pred_check_branch
          %478 = sbr.rel (%p476) target = $region32
        $region31: #{tpu_custom_call.1} parent=11 // pred_region
          %s480 = ssub.s32 16, 16
          %481 = vsyncadd [#allocation17], %s480
          %s483 = sshll.u32 %s8, 4
          %s484 = int_to_ptr.vmem [resolvable:$true] %s483
          %486 = dma.vmem_to_smem %s484, 16, [#allocation16], [#allocation17]
        $region32: #{tpu_custom_call.1} parent=11 // pred_fallthru
          _
        // Predicated region
        $region33: #{tpu_custom_call.1} parent=11 // pred_check
          %p487 = pneg %p275
        $region34: #{tpu_custom_call.1} parent=11 // pred_check_branch
          %489 = sbr.rel (%p487) target = $region36
        $region35: #{tpu_custom_call.1} parent=11 // pred_region
          %s491 = ssub.s32 64, 64
          %492 = vsyncadd [#allocation17], %s491
          %s494 = sshll.u32 %s9, 4
          %s495 = int_to_ptr.vmem [resolvable:$true] %s494
          %497 = dma.vmem_to_smem %s495, 64, [#allocation18], [#allocation17]
        $region36: #{tpu_custom_call.1} parent=11 // pred_fallthru
          _
        // Predicated region
        $region37: #{tpu_custom_call.1} parent=11 // pred_check
          %p498 = pneg %p296
        $region38: #{tpu_custom_call.1} parent=11 // pred_check_branch
          %500 = sbr.rel (%p498) target = $region40
        $region39: #{tpu_custom_call.1} parent=11 // pred_region
          %s502 = ssub.s32 16, 16
          %503 = vsyncadd [#allocation20], %s502
          %s505 = sshll.u32 %s10, 4
          %s506 = int_to_ptr.vmem [resolvable:$true] %s505
          %508 = dma.vmem_to_smem %s506, 16, [#allocation19], [#allocation20]
        $region40: #{tpu_custom_call.1} parent=11 // pred_fallthru
          _
        // Predicated region
        $region41: #{tpu_custom_call.1} parent=11 // pred_check
          %p509 = pneg %p317
        $region42: #{tpu_custom_call.1} parent=11 // pred_check_branch
          %511 = sbr.rel (%p509) target = $region44
        $region43: #{tpu_custom_call.1} parent=11 // pred_region
          _
        $region44: #{tpu_custom_call.1} parent=11 // pred_fallthru
          _
      $region12: #{tpu_custom_call.1} parent=5 // pred_fallthru
        _
      %p512 = scmp.lt.s32.totalorder %s45, 2
      // Predicated region
      $region45: #{tpu_custom_call.1} parent=5 // pred_check
        %p513 = pneg %p512
      $region46: #{tpu_custom_call.1} parent=5 // pred_check_branch
        %515 = sbr.rel (%p513) target = $region48
      $region47: #{tpu_custom_call.1} parent=5 // pred_region
        // Predicated region
        $region49: #{tpu_custom_call.1} parent=47 // pred_check
          %p516 = pneg %p65
        $region50: #{tpu_custom_call.1} parent=47 // pred_check_branch
          %518 = sbr.rel (%p516) target = $region52
        $region51: #{tpu_custom_call.1} parent=47 // pred_region
          %s519 = sand.u32 %s55, 1
          %s520 = scalar_lea.sflag [#allocation4], %s519
          %s521 = sand.u32 %s55, 1
          %s522 = smul.addr %s521, 32
          %s523 = scalar_lea.vmem [#allocation3], %s522
          %s525 = ssub.s32 512, 512
          %526 = vsyncadd %s520, %s525
          %s527 = smul.addr %s45, 4
          %s528 = smul.addr %s527, 128
          %s529 = scalar_lea.hbm %s0, %s528
          %s530 = sshll.u32 %s523, 4
          %s531 = int_to_ptr.vmem [resolvable:$true] %s530
          %536 = dma.hbm_to_vmem [thread:$0]  %s529, 512, %s531, %s520, 256, 256, 16
        $region52: #{tpu_custom_call.1} parent=47 // pred_fallthru
          _
        // Predicated region
        $region53: #{tpu_custom_call.1} parent=47 // pred_check
          %p537 = pneg %p91
        $region54: #{tpu_custom_call.1} parent=47 // pred_check_branch
          %539 = sbr.rel (%p537) target = $region56
        $region55: #{tpu_custom_call.1} parent=47 // pred_region
          %s540 = sand.u32 %s45, 1
          %s541 = scalar_lea.sflag [#allocation8], %s540
          %s542 = sand.u32 %s81, 1
          %s543 = smul.addr %s542, 32
          %s544 = scalar_lea.vmem [#allocation7], %s543
          %s546 = ssub.s32 512, 512
          %547 = vsyncadd %s541, %s546
          %s548 = smul.addr %s45, 4
          %s549 = smul.addr %s548, 128
          %s550 = scalar_lea.hbm %s1, %s549
          %s551 = sshll.u32 %s544, 4
          %s552 = int_to_ptr.vmem [resolvable:$true] %s551
          %557 = dma.hbm_to_vmem [thread:$0]  %s550, 512, %s552, %s541, 256, 256, 16
        $region56: #{tpu_custom_call.1} parent=47 // pred_fallthru
          _
        // Predicated region
        $region57: #{tpu_custom_call.1} parent=47 // pred_check
          %p558 = pneg %p117
        $region58: #{tpu_custom_call.1} parent=47 // pred_check_branch
          %560 = sbr.rel (%p558) target = $region60
        $region59: #{tpu_custom_call.1} parent=47 // pred_region
          %s561 = sand.u32 %s45, 1
          %s562 = scalar_lea.sflag [#allocation8], %s561
          %s563 = sand.u32 %s107, 1
          %s564 = smul.addr %s563, 32
          %s565 = scalar_lea.vmem [#allocation9], %s564
          %s567 = ssub.s32 512, 512
          %568 = vsyncadd %s562, %s567
          %s569 = smul.addr %s45, 4
          %s570 = smul.addr %s569, 128
          %s571 = scalar_lea.hbm %s2, %s570
          %s572 = sshll.u32 %s565, 4
          %s573 = int_to_ptr.vmem [resolvable:$true] %s572
          %578 = dma.hbm_to_vmem [thread:$0]  %s571, 512, %s573, %s562, 256, 256, 16
        $region60: #{tpu_custom_call.1} parent=47 // pred_fallthru
          _
        // Predicated region
        $region61: #{tpu_custom_call.1} parent=47 // pred_check
          %p579 = pneg %p143
        $region62: #{tpu_custom_call.1} parent=47 // pred_check_branch
          %581 = sbr.rel (%p579) target = $region64
        $region63: #{tpu_custom_call.1} parent=47 // pred_region
          %s582 = sand.u32 %s45, 1
          %s583 = scalar_lea.sflag [#allocation11], %s582
          %s584 = sand.u32 %s133, 1
          %s585 = smul.addr %s584, 32
          %s586 = scalar_lea.vmem [#allocation10], %s585
          %s588 = ssub.s32 512, 512
          %589 = vsyncadd %s583, %s588
          %s590 = smul.addr %s45, 4
          %s591 = smul.addr %s590, 128
          %s592 = scalar_lea.hbm %s3, %s591
          %s593 = sshll.u32 %s586, 4
          %s594 = int_to_ptr.vmem [resolvable:$true] %s593
          %599 = dma.hbm_to_vmem [thread:$0]  %s592, 512, %s594, %s583, 256, 256, 16
        $region64: #{tpu_custom_call.1} parent=47 // pred_fallthru
          _
      $region48: #{tpu_custom_call.1} parent=5 // pred_fallthru
        _
      %p600 = scmp.le.s32.totalorder 1, %s45
      %p601 = scmp.lt.s32.totalorder %s45, 3
      %p602 = pnand %p600, %p601
      %p603 = pneg %p602
      // Predicated region
      $region65: #{tpu_custom_call.1} parent=5 // pred_check
        _
      $region66: #{tpu_custom_call.1} parent=5 // pred_check_branch
        %605 = sbr.rel (%p602) target = $region68
      $region67: #{tpu_custom_call.1} parent=5 // pred_region
        %s606 = ssub.s32 %s45, 1
        %s607 = sand.u32 %s58, 1
        %s608 = scalar_lea.sflag [#allocation4], %s607
        %s609 = sand.u32 %s58, 1
        %s610 = smul.addr %s609, 32
        %s611 = scalar_lea.vmem [#allocation3], %s610
        // Predicated region
        $region69: #{tpu_custom_call.1} parent=67 // pred_check
          %p612 = pneg %p71
        $region70: #{tpu_custom_call.1} parent=67 // pred_check_branch
          %614 = sbr.rel (%p612) target = $region72
        $region71: #{tpu_custom_call.1} parent=67 // pred_region
          %615 = dma.done %s608, 512
        $region72: #{tpu_custom_call.1} parent=67 // pred_fallthru
          _
        %s616 = sand.u32 %s50, 1
        %s617 = scalar_lea.sflag [#allocation8], %s616
        %s618 = sand.u32 %s84, 1
        %s619 = smul.addr %s618, 32
        %s620 = scalar_lea.vmem [#allocation7], %s619
        // Predicated region
        $region73: #{tpu_custom_call.1} parent=67 // pred_check
          %p621 = pneg %p97
        $region74: #{tpu_custom_call.1} parent=67 // pred_check_branch
          %623 = sbr.rel (%p621) target = $region76
        $region75: #{tpu_custom_call.1} parent=67 // pred_region
          %624 = dma.done %s617, 512
        $region76: #{tpu_custom_call.1} parent=67 // pred_fallthru
          _
        %s625 = sand.u32 %s50, 1
        %s626 = scalar_lea.sflag [#allocation8], %s625
        %s627 = sand.u32 %s110, 1
        %s628 = smul.addr %s627, 32
        %s629 = scalar_lea.vmem [#allocation9], %s628
        // Predicated region
        $region77: #{tpu_custom_call.1} parent=67 // pred_check
          %p630 = pneg %p123
        $region78: #{tpu_custom_call.1} parent=67 // pred_check_branch
          %632 = sbr.rel (%p630) target = $region80
        $region79: #{tpu_custom_call.1} parent=67 // pred_region
          %633 = dma.done %s626, 512
        $region80: #{tpu_custom_call.1} parent=67 // pred_fallthru
          _
        %s634 = sand.u32 %s50, 1
        %s635 = scalar_lea.sflag [#allocation11], %s634
        %s636 = sand.u32 %s136, 1
        %s637 = smul.addr %s636, 32
        %s638 = scalar_lea.vmem [#allocation10], %s637
        // Predicated region
        $region81: #{tpu_custom_call.1} parent=67 // pred_check
          %p639 = pneg %p149
        $region82: #{tpu_custom_call.1} parent=67 // pred_check_branch
          %641 = sbr.rel (%p639) target = $region84
        $region83: #{tpu_custom_call.1} parent=67 // pred_region
          %642 = dma.done %s635, 512
        $region84: #{tpu_custom_call.1} parent=67 // pred_fallthru
          _
        // Predicated region
        $region85: #{tpu_custom_call.1} parent=67 // pred_check
          %p643 = pneg %p191
        $region86: #{tpu_custom_call.1} parent=67 // pred_check_branch
          %645 = sbr.rel (%p643) target = $region88
        $region87: #{tpu_custom_call.1} parent=67 // pred_region
          %646 = dma.done [#allocation11], 768
        $region88: #{tpu_custom_call.1} parent=67 // pred_fallthru
          _
        // Predicated region
        $region89: #{tpu_custom_call.1} parent=67 // pred_check
          %p647 = pneg %p212
        $region90: #{tpu_custom_call.1} parent=67 // pred_check_branch
          %649 = sbr.rel (%p647) target = $region92
        $region91: #{tpu_custom_call.1} parent=67 // pred_region
          %650 = dma.done [#allocation14], 24576
        $region92: #{tpu_custom_call.1} parent=67 // pred_fallthru
          _
        // Predicated region
        $region93: #{tpu_custom_call.1} parent=67 // pred_check
          %p651 = pneg %p233
        $region94: #{tpu_custom_call.1} parent=67 // pred_check_branch
          %653 = sbr.rel (%p651) target = $region96
        $region95: #{tpu_custom_call.1} parent=67 // pred_region
          %654 = dma.done [#allocation6], 128
        $region96: #{tpu_custom_call.1} parent=67 // pred_fallthru
          _
        // Predicated region
        $region97: #{tpu_custom_call.1} parent=67 // pred_check
          %p655 = pneg %p254
        $region98: #{tpu_custom_call.1} parent=67 // pred_check_branch
          %657 = sbr.rel (%p655) target = $region100
        $region99: #{tpu_custom_call.1} parent=67 // pred_region
          %658 = dma.done [#allocation17], 16
        $region100: #{tpu_custom_call.1} parent=67 // pred_fallthru
          _
        // Predicated region
        $region101: #{tpu_custom_call.1} parent=67 // pred_check
          %p659 = pneg %p275
        $region102: #{tpu_custom_call.1} parent=67 // pred_check_branch
          %661 = sbr.rel (%p659) target = $region104
        $region103: #{tpu_custom_call.1} parent=67 // pred_region
          %662 = dma.done [#allocation17], 64
        $region104: #{tpu_custom_call.1} parent=67 // pred_fallthru
          _
        // Predicated region
        $region105: #{tpu_custom_call.1} parent=67 // pred_check
          %p663 = pneg %p296
        $region106: #{tpu_custom_call.1} parent=67 // pred_check_branch
          %665 = sbr.rel (%p663) target = $region108
        $region107: #{tpu_custom_call.1} parent=67 // pred_region
          %666 = dma.done [#allocation20], 16
        $region108: #{tpu_custom_call.1} parent=67 // pred_fallthru
          _
        %667 = sfence
        %s668 = sand.u32 %s58, 1
        %s669 = scalar_lea.sflag [#allocation4], %s668
        %s670 = sand.u32 %s58, 1
        %s671 = smul.addr %s670, 32
        %s672 = scalar_lea.vmem [#allocation3], %s671
        %p673 = pneg %p71
        %p674 = pneg %p68
        %s675 = sand.u32 %s50, 1
        %s676 = scalar_lea.sflag [#allocation8], %s675
        %s677 = sand.u32 %s84, 1
        %s678 = smul.addr %s677, 32
        %s679 = scalar_lea.vmem [#allocation7], %s678
        %p680 = pneg %p97
        %p681 = pneg %p94
        %s682 = sand.u32 %s50, 1
        %s683 = scalar_lea.sflag [#allocation8], %s682
        %s684 = sand.u32 %s110, 1
        %s685 = smul.addr %s684, 32
        %s686 = scalar_lea.vmem [#allocation9], %s685
        %p687 = pneg %p123
        %p688 = pneg %p120
        %s689 = sand.u32 %s50, 1
        %s690 = scalar_lea.sflag [#allocation11], %s689
        %s691 = sand.u32 %s136, 1
        %s692 = smul.addr %s691, 32
        %s693 = scalar_lea.vmem [#allocation10], %s692
        %p694 = pneg %p149
        %p695 = pneg %p146
        %p696 = pneg %p170
        %p697 = pneg %p167
        %p698 = pneg %p191
        %p699 = pneg %p188
        %p700 = pneg %p212
        %p701 = pneg %p209
        %p702 = pneg %p233
        %p703 = pneg %p230
        %p704 = pneg %p254
        %p705 = pneg %p251
        %p706 = pneg %p275
        %p707 = pneg %p272
        %p708 = pneg %p296
        %p709 = pneg %p293
        %p710 = pneg %p317
        %p711 = pneg %p314
        %p712 = pneg %p343
        %p713 = pneg %p340
        %s714 = sand.u32 %s330, 1
        %s715 = scalar_lea.sflag [#allocation5], %s714
        %s716 = sand.u32 %s330, 1
        %s717 = smul.addr %s716, 32
        %s718 = scalar_lea.vmem [#allocation21], %s717
        %p719 = pneg %p369
        %p720 = pneg %p366
        %s721 = sand.u32 %s50, 1
        %s722 = scalar_lea.sflag [#allocation23], %s721
        %s723 = sand.u32 %s356, 1
        %s724 = smul.addr %s723, 32
        %s725 = scalar_lea.vmem [#allocation22], %s724
        %p726 = pneg %p395
        %p727 = pneg %p392
        %s728 = sand.u32 %s50, 1
        %s729 = scalar_lea.sflag [#allocation23], %s728
        %s730 = sand.u32 %s382, 1
        %s731 = smul.addr %s730, 32
        %s732 = scalar_lea.vmem [#allocation24], %s731
        %p733 = pneg %p421
        %p734 = pneg %p418
        %s735 = sand.u32 %s408, 1
        %s736 = scalar_lea.sflag [#allocation26], %s735
        %s737 = sand.u32 %s408, 1
        %s738 = smul.addr %s737, 32
        %s739 = scalar_lea.vmem [#allocation25], %s738
        %v740 = vld [vmem:[#allocation12] sm:$0xff]
        %v741 = vld [vmem:[#allocation12 + $0x8] sm:$0xff]
        %s742 = scalar_lea.vmem [#allocation12], 16
        %v743 = vld [vmem:[%s742] sm:$0xff]
        %v744 = vld [vmem:[%s742 + $0x8] sm:$0xff]
        %s745 = scalar_lea.vmem [#allocation12], 32
        %v746 = vld [vmem:[%s745] sm:$0xff]
        %v747 = vld [vmem:[%s745 + $0x8] sm:$0xff]
        %v748 = vld [vmem:[#allocation13] sm:$0xff]
        %v749 = vld [vmem:[#allocation13 + $0x8] sm:$0xff]
        %v750 = vld [vmem:[#allocation13 + $0x10] sm:$0xff]
        %v751 = vld [vmem:[#allocation13 + $0x18] sm:$0xff]
        %v752 = vld [vmem:[#allocation13 + $0x20] sm:$0xff]
        %v753 = vld [vmem:[#allocation13 + $0x28] sm:$0xff]
        %v754 = vld [vmem:[#allocation13 + $0x30] sm:$0xff]
        %v755 = vld [vmem:[#allocation13 + $0x38] sm:$0xff]
        %v756 = vld [vmem:[#allocation13 + $0x40] sm:$0xff]
        %v757 = vld [vmem:[#allocation13 + $0x48] sm:$0xff]
        %v758 = vld [vmem:[#allocation13 + $0x50] sm:$0xff]
        %v759 = vld [vmem:[#allocation13 + $0x58] sm:$0xff]
        %v760 = vld [vmem:[#allocation13 + $0x60] sm:$0xff]
        %v761 = vld [vmem:[#allocation13 + $0x68] sm:$0xff]
        %v762 = vld [vmem:[#allocation13 + $0x70] sm:$0xff]
        %v763 = vld [vmem:[#allocation13 + $0x78] sm:$0xff]
        %v764 = vld [vmem:[#allocation13 + $0x80] sm:$0xff]
        %v765 = vld [vmem:[#allocation13 + $0x88] sm:$0xff]
        %v766 = vld [vmem:[#allocation13 + $0x90] sm:$0xff]
        %v767 = vld [vmem:[#allocation13 + $0x98] sm:$0xff]
        %v768 = vld [vmem:[#allocation13 + $0xa0] sm:$0xff]
        %v769 = vld [vmem:[#allocation13 + $0xa8] sm:$0xff]
        %v770 = vld [vmem:[#allocation13 + $0xb0] sm:$0xff]
        %v771 = vld [vmem:[#allocation13 + $0xb8] sm:$0xff]
        %v772 = vld [vmem:[#allocation13 + $0xc0] sm:$0xff]
        %v773 = vld [vmem:[#allocation13 + $0xc8] sm:$0xff]
        %v774 = vld [vmem:[#allocation13 + $0xd0] sm:$0xff]
        %v775 = vld [vmem:[#allocation13 + $0xd8] sm:$0xff]
        %v776 = vld [vmem:[#allocation13 + $0xe0] sm:$0xff]
        %v777 = vld [vmem:[#allocation13 + $0xe8] sm:$0xff]
        %v778 = vld [vmem:[#allocation13 + $0xf0] sm:$0xff]
        %v779 = vld [vmem:[#allocation13 + $0xf8] sm:$0xff]
        %v780 = vld [vmem:[#allocation13 + $0x100] sm:$0xff]
        %v781 = vld [vmem:[#allocation13 + $0x108] sm:$0xff]
        %v782 = vld [vmem:[#allocation13 + $0x110] sm:$0xff]
        %v783 = vld [vmem:[#allocation13 + $0x118] sm:$0xff]
        %v784 = vld [vmem:[#allocation13 + $0x120] sm:$0xff]
        %v785 = vld [vmem:[#allocation13 + $0x128] sm:$0xff]
        %v786 = vld [vmem:[#allocation13 + $0x130] sm:$0xff]
        %v787 = vld [vmem:[#allocation13 + $0x138] sm:$0xff]
        %v788 = vld [vmem:[#allocation13 + $0x140] sm:$0xff]
        %v789 = vld [vmem:[#allocation13 + $0x148] sm:$0xff]
        %v790 = vld [vmem:[#allocation13 + $0x150] sm:$0xff]
        %v791 = vld [vmem:[#allocation13 + $0x158] sm:$0xff]
        %v792 = vld [vmem:[#allocation13 + $0x160] sm:$0xff]
        %v793 = vld [vmem:[#allocation13 + $0x168] sm:$0xff]
        %v794 = vld [vmem:[#allocation13 + $0x170] sm:$0xff]
        %v795 = vld [vmem:[#allocation13 + $0x178] sm:$0xff]
        %v796 = vld [vmem:[#allocation13 + $0x180] sm:$0xff]
        %v797 = vld [vmem:[#allocation13 + $0x188] sm:$0xff]
        %v798 = vld [vmem:[#allocation13 + $0x190] sm:$0xff]
        %v799 = vld [vmem:[#allocation13 + $0x198] sm:$0xff]
        %v800 = vld [vmem:[#allocation13 + $0x1a0] sm:$0xff]
        %v801 = vld [vmem:[#allocation13 + $0x1a8] sm:$0xff]
        %v802 = vld [vmem:[#allocation13 + $0x1b0] sm:$0xff]
        %v803 = vld [vmem:[#allocation13 + $0x1b8] sm:$0xff]
        %v804 = vld [vmem:[#allocation13 + $0x1c0] sm:$0xff]
        %v805 = vld [vmem:[#allocation13 + $0x1c8] sm:$0xff]
        %v806 = vld [vmem:[#allocation13 + $0x1d0] sm:$0xff]
        %v807 = vld [vmem:[#allocation13 + $0x1d8] sm:$0xff]
        %v808 = vld [vmem:[#allocation13 + $0x1e0] sm:$0xff]
        %v809 = vld [vmem:[#allocation13 + $0x1e8] sm:$0xff]
        %v810 = vld [vmem:[#allocation13 + $0x1f0] sm:$0xff]
        %v811 = vld [vmem:[#allocation13 + $0x1f8] sm:$0xff]
        %s812 = scalar_lea.vmem [#allocation13], 512
        %v813 = vld [vmem:[%s812] sm:$0xff]
        %v814 = vld [vmem:[%s812 + $0x8] sm:$0xff]
        %v815 = vld [vmem:[%s812 + $0x10] sm:$0xff]
        %v816 = vld [vmem:[%s812 + $0x18] sm:$0xff]
        %v817 = vld [vmem:[%s812 + $0x20] sm:$0xff]
        %v818 = vld [vmem:[%s812 + $0x28] sm:$0xff]
        %v819 = vld [vmem:[%s812 + $0x30] sm:$0xff]
        %v820 = vld [vmem:[%s812 + $0x38] sm:$0xff]
        %v821 = vld [vmem:[%s812 + $0x40] sm:$0xff]
        %v822 = vld [vmem:[%s812 + $0x48] sm:$0xff]
        %v823 = vld [vmem:[%s812 + $0x50] sm:$0xff]
        %v824 = vld [vmem:[%s812 + $0x58] sm:$0xff]
        %v825 = vld [vmem:[%s812 + $0x60] sm:$0xff]
        %v826 = vld [vmem:[%s812 + $0x68] sm:$0xff]
        %v827 = vld [vmem:[%s812 + $0x70] sm:$0xff]
        %v828 = vld [vmem:[%s812 + $0x78] sm:$0xff]
        %v829 = vld [vmem:[%s812 + $0x80] sm:$0xff]
        %v830 = vld [vmem:[%s812 + $0x88] sm:$0xff]
        %v831 = vld [vmem:[%s812 + $0x90] sm:$0xff]
        %v832 = vld [vmem:[%s812 + $0x98] sm:$0xff]
        %v833 = vld [vmem:[%s812 + $0xa0] sm:$0xff]
        %v834 = vld [vmem:[%s812 + $0xa8] sm:$0xff]
        %v835 = vld [vmem:[%s812 + $0xb0] sm:$0xff]
        %v836 = vld [vmem:[%s812 + $0xb8] sm:$0xff]
        %v837 = vld [vmem:[%s812 + $0xc0] sm:$0xff]
        %v838 = vld [vmem:[%s812 + $0xc8] sm:$0xff]
        %v839 = vld [vmem:[%s812 + $0xd0] sm:$0xff]
        %v840 = vld [vmem:[%s812 + $0xd8] sm:$0xff]
        %v841 = vld [vmem:[%s812 + $0xe0] sm:$0xff]
        %v842 = vld [vmem:[%s812 + $0xe8] sm:$0xff]
        %v843 = vld [vmem:[%s812 + $0xf0] sm:$0xff]
        %v844 = vld [vmem:[%s812 + $0xf8] sm:$0xff]
        %v845 = vld [vmem:[%s812 + $0x100] sm:$0xff]
        %v846 = vld [vmem:[%s812 + $0x108] sm:$0xff]
        %v847 = vld [vmem:[%s812 + $0x110] sm:$0xff]
        %v848 = vld [vmem:[%s812 + $0x118] sm:$0xff]
        %v849 = vld [vmem:[%s812 + $0x120] sm:$0xff]
        %v850 = vld [vmem:[%s812 + $0x128] sm:$0xff]
        %v851 = vld [vmem:[%s812 + $0x130] sm:$0xff]
        %v852 = vld [vmem:[%s812 + $0x138] sm:$0xff]
        %v853 = vld [vmem:[%s812 + $0x140] sm:$0xff]
        %v854 = vld [vmem:[%s812 + $0x148] sm:$0xff]
        %v855 = vld [vmem:[%s812 + $0x150] sm:$0xff]
        %v856 = vld [vmem:[%s812 + $0x158] sm:$0xff]
        %v857 = vld [vmem:[%s812 + $0x160] sm:$0xff]
        %v858 = vld [vmem:[%s812 + $0x168] sm:$0xff]
        %v859 = vld [vmem:[%s812 + $0x170] sm:$0xff]
        %v860 = vld [vmem:[%s812 + $0x178] sm:$0xff]
        %v861 = vld [vmem:[%s812 + $0x180] sm:$0xff]
        %v862 = vld [vmem:[%s812 + $0x188] sm:$0xff]
        %v863 = vld [vmem:[%s812 + $0x190] sm:$0xff]
        %v864 = vld [vmem:[%s812 + $0x198] sm:$0xff]
        %v865 = vld [vmem:[%s812 + $0x1a0] sm:$0xff]
        %v866 = vld [vmem:[%s812 + $0x1a8] sm:$0xff]
        %v867 = vld [vmem:[%s812 + $0x1b0] sm:$0xff]
        %v868 = vld [vmem:[%s812 + $0x1b8] sm:$0xff]
        %v869 = vld [vmem:[%s812 + $0x1c0] sm:$0xff]
        %v870 = vld [vmem:[%s812 + $0x1c8] sm:$0xff]
        %v871 = vld [vmem:[%s812 + $0x1d0] sm:$0xff]
        %v872 = vld [vmem:[%s812 + $0x1d8] sm:$0xff]
        %v873 = vld [vmem:[%s812 + $0x1e0] sm:$0xff]
        %v874 = vld [vmem:[%s812 + $0x1e8] sm:$0xff]
        %v875 = vld [vmem:[%s812 + $0x1f0] sm:$0xff]
        %v876 = vld [vmem:[%s812 + $0x1f8] sm:$0xff]
        %s877 = scalar_lea.vmem [#allocation13], 1024
        %v878 = vld [vmem:[%s877] sm:$0xff]
        %v879 = vld [vmem:[%s877 + $0x8] sm:$0xff]
        %v880 = vld [vmem:[%s877 + $0x10] sm:$0xff]
        %v881 = vld [vmem:[%s877 + $0x18] sm:$0xff]
        %v882 = vld [vmem:[%s877 + $0x20] sm:$0xff]
        %v883 = vld [vmem:[%s877 + $0x28] sm:$0xff]
        %v884 = vld [vmem:[%s877 + $0x30] sm:$0xff]
        %v885 = vld [vmem:[%s877 + $0x38] sm:$0xff]
        %v886 = vld [vmem:[%s877 + $0x40] sm:$0xff]
        %v887 = vld [vmem:[%s877 + $0x48] sm:$0xff]
        %v888 = vld [vmem:[%s877 + $0x50] sm:$0xff]
        %v889 = vld [vmem:[%s877 + $0x58] sm:$0xff]
        %v890 = vld [vmem:[%s877 + $0x60] sm:$0xff]
        %v891 = vld [vmem:[%s877 + $0x68] sm:$0xff]
        %v892 = vld [vmem:[%s877 + $0x70] sm:$0xff]
        %v893 = vld [vmem:[%s877 + $0x78] sm:$0xff]
        %v894 = vld [vmem:[%s877 + $0x80] sm:$0xff]
        %v895 = vld [vmem:[%s877 + $0x88] sm:$0xff]
        %v896 = vld [vmem:[%s877 + $0x90] sm:$0xff]
        %v897 = vld [vmem:[%s877 + $0x98] sm:$0xff]
        %v898 = vld [vmem:[%s877 + $0xa0] sm:$0xff]
        %v899 = vld [vmem:[%s877 + $0xa8] sm:$0xff]
        %v900 = vld [vmem:[%s877 + $0xb0] sm:$0xff]
        %v901 = vld [vmem:[%s877 + $0xb8] sm:$0xff]
        %v902 = vld [vmem:[%s877 + $0xc0] sm:$0xff]
        %v903 = vld [vmem:[%s877 + $0xc8] sm:$0xff]
        %v904 = vld [vmem:[%s877 + $0xd0] sm:$0xff]
        %v905 = vld [vmem:[%s877 + $0xd8] sm:$0xff]
        %v906 = vld [vmem:[%s877 + $0xe0] sm:$0xff]
        %v907 = vld [vmem:[%s877 + $0xe8] sm:$0xff]
        %v908 = vld [vmem:[%s877 + $0xf0] sm:$0xff]
        %v909 = vld [vmem:[%s877 + $0xf8] sm:$0xff]
        %v910 = vld [vmem:[%s877 + $0x100] sm:$0xff]
        %v911 = vld [vmem:[%s877 + $0x108] sm:$0xff]
        %v912 = vld [vmem:[%s877 + $0x110] sm:$0xff]
        %v913 = vld [vmem:[%s877 + $0x118] sm:$0xff]
        %v914 = vld [vmem:[%s877 + $0x120] sm:$0xff]
        %v915 = vld [vmem:[%s877 + $0x128] sm:$0xff]
        %v916 = vld [vmem:[%s877 + $0x130] sm:$0xff]
        %v917 = vld [vmem:[%s877 + $0x138] sm:$0xff]
        %v918 = vld [vmem:[%s877 + $0x140] sm:$0xff]
        %v919 = vld [vmem:[%s877 + $0x148] sm:$0xff]
        %v920 = vld [vmem:[%s877 + $0x150] sm:$0xff]
        %v921 = vld [vmem:[%s877 + $0x158] sm:$0xff]
        %v922 = vld [vmem:[%s877 + $0x160] sm:$0xff]
        %v923 = vld [vmem:[%s877 + $0x168] sm:$0xff]
        %v924 = vld [vmem:[%s877 + $0x170] sm:$0xff]
        %v925 = vld [vmem:[%s877 + $0x178] sm:$0xff]
        %v926 = vld [vmem:[%s877 + $0x180] sm:$0xff]
        %v927 = vld [vmem:[%s877 + $0x188] sm:$0xff]
        %v928 = vld [vmem:[%s877 + $0x190] sm:$0xff]
        %v929 = vld [vmem:[%s877 + $0x198] sm:$0xff]
        %v930 = vld [vmem:[%s877 + $0x1a0] sm:$0xff]
        %v931 = vld [vmem:[%s877 + $0x1a8] sm:$0xff]
        %v932 = vld [vmem:[%s877 + $0x1b0] sm:$0xff]
        %v933 = vld [vmem:[%s877 + $0x1b8] sm:$0xff]
        %v934 = vld [vmem:[%s877 + $0x1c0] sm:$0xff]
        %v935 = vld [vmem:[%s877 + $0x1c8] sm:$0xff]
        %v936 = vld [vmem:[%s877 + $0x1d0] sm:$0xff]
        %v937 = vld [vmem:[%s877 + $0x1d8] sm:$0xff]
        %v938 = vld [vmem:[%s877 + $0x1e0] sm:$0xff]
        %v939 = vld [vmem:[%s877 + $0x1e8] sm:$0xff]
        %v940 = vld [vmem:[%s877 + $0x1f0] sm:$0xff]
        %v941 = vld [vmem:[%s877 + $0x1f8] sm:$0xff]
        %v942 = vld [vmem:[%s611] sm:$0xff]
        %v943 = vld [vmem:[%s611 + $0x8] sm:$0xff]
        %v944 = vld [vmem:[%s611 + $0x10] sm:$0xff]
        %v945 = vld [vmem:[%s611 + $0x18] sm:$0xff]
        %v946 = vld [vmem:[%s620] sm:$0xff]
        %v947 = vld [vmem:[%s620 + $0x8] sm:$0xff]
        %v948 = vld [vmem:[%s620 + $0x10] sm:$0xff]
        %v949 = vld [vmem:[%s620 + $0x18] sm:$0xff]
        %vm950 = vcmask 130048
        %v952 = vsel %vm950, %v740, 0
        %v955 = vsel %vm950, %v741, 0
        %957 = vmatprep.subr.mxu0 0.0
        %958 = vmatpush1.msra.mxu0 0.0
        %959 = vmatprep.subr.mxu0 0.0
        %960 = vmatpush1.msra.mxu0 0.0
        %961 = vmatprep.subr.mxu0 0.0
        %962 = vmatpush1.msra.mxu0 0.0
        %963 = vmatprep.subr.mxu0 0.0
        %964 = vmatpush1.msra.mxu0 0.0
        %965 = vmatprep.subr.mxu0 0.0
        %966 = vmatpush1.msra.mxu0 0.0
        %967 = vmatprep.subr.mxu0 0.0
        %968 = vmatpush1.msra.mxu0 0.0
        %969 = vmatprep.subr.mxu0 0.0
        %970 = vmatpush1.msra.mxu0 0.0
        %971 = vmatprep.subr.mxu0 0.0
        %972 = vmatpush1.msra.mxu0 0.0
        %973 = vmatprep.subr.mxu0 0.0
        %974 = vmatpush1.msra.mxu0 0.0
        %975 = vmatprep.subr.mxu0 0.0
        %976 = vmatpush1.msra.mxu0 0.0
        %977 = vmatprep.subr.mxu0 0.0
        %978 = vmatpush1.msra.mxu0 0.0
        %979 = vmatprep.subr.mxu0 0.0
        %980 = vmatpush1.msra.mxu0 0.0
        %981 = vmatprep.subr.mxu0 0.0
        %982 = vmatpush1.msra.mxu0 0.0
        %983 = vmatprep.subr.mxu0 0.0
        %984 = vmatpush1.msra.mxu0 0.0
        %985 = vmatprep.subr.mxu0 %v945
        %986 = vmatpush1.msra.mxu0 %v944
        %987 = vmatprep.subr.mxu0 %v943
        %988 = vmatpush1.msra.mxu0 %v942
        %989 = vmatprep.subr.mxu0 0.0
        %990 = vmatpush2.msra.mxu0 0.0
        %991 = vmatprep.subr.mxu0 0.0
        %992 = vmatpush2.msra.mxu0 0.0
        %993 = vmatprep.subr.mxu0 0.0
        %994 = vmatpush2.msra.mxu0 0.0
        %995 = vmatprep.subr.mxu0 0.0
        %996 = vmatpush2.msra.mxu0 0.0
        %997 = vmatprep.subr.mxu0 0.0
        %998 = vmatpush2.msra.mxu0 0.0
        %999 = vmatprep.subr.mxu0 0.0
        %1000 = vmatpush2.msra.mxu0 0.0
        %1001 = vmatprep.subr.mxu0 0.0
        %1002 = vmatpush2.msra.mxu0 0.0
        %1003 = vmatprep.subr.mxu0 0.0
        %1004 = vmatpush2.msra.mxu0 0.0
        %1005 = vmatprep.subr.mxu0 0.0
        %1006 = vmatpush2.msra.mxu0 0.0
        %1007 = vmatprep.subr.mxu0 0.0
        %1008 = vmatpush2.msra.mxu0 0.0
        %1009 = vmatprep.subr.mxu0 0.0
        %1010 = vmatpush2.msra.mxu0 0.0
        %1011 = vmatprep.subr.mxu0 0.0
        %1012 = vmatpush2.msra.mxu0 0.0
        %1013 = vmatprep.subr.mxu0 0.0
        %1014 = vmatpush2.msra.mxu0 0.0
        %1015 = vmatprep.subr.mxu0 0.0
        %1016 = vmatpush2.msra.mxu0 0.0
        %1017 = vmatprep.subr.mxu0 0.0
        %1018 = vmatpush2.msra.mxu0 0.0
        %1019 = vmatprep.subr.mxu0 0.0
        %1020 = vmatpush2.msra.mxu0 0.0
        %1021 = vmatprep.mubr.f32.mxu0 0.0
        %1022 = vmatmul.mubr.f32.gmra.mxu0 %v952
        %v1023 = vpop.f32.mrf.mxu0
        %v1024 = vadd.f32 0.0, %v1023
        %v1025 = vpop.f32.mrf.mxu0
        %v1026 = vadd.f32 0.0, %v1025
        %1027 = vmatprep.mubr.f32.mxu0 0.0
        %1028 = vmatmul.mubr.f32.gmra.mxu0 %v955
        %v1029 = vpop.f32.mrf.mxu0
        %v1030 = vadd.f32 0.0, %v1029
        %v1031 = vpop.f32.mrf.mxu0
        %v1032 = vadd.f32 0.0, %v1031
        %1033 = vdwg.mxu0
        %v1035 = vsel %vm950, %v743, 0
        %v1038 = vsel %vm950, %v744, 0
        %1040 = vmatprep.subr.mxu0 0.0
        %1041 = vmatpush1.msra.mxu0 0.0
        %1042 = vmatprep.subr.mxu0 0.0
        %1043 = vmatpush1.msra.mxu0 0.0
        %1044 = vmatprep.subr.mxu0 0.0
        %1045 = vmatpush1.msra.mxu0 0.0
        %1046 = vmatprep.subr.mxu0 0.0
        %1047 = vmatpush1.msra.mxu0 0.0
        %1048 = vmatprep.subr.mxu0 0.0
        %1049 = vmatpush1.msra.mxu0 0.0
        %1050 = vmatprep.subr.mxu0 0.0
        %1051 = vmatpush1.msra.mxu0 0.0
        %1052 = vmatprep.subr.mxu0 0.0
        %1053 = vmatpush1.msra.mxu0 0.0
        %1054 = vmatprep.subr.mxu0 0.0
        %1055 = vmatpush1.msra.mxu0 0.0
        %1056 = vmatprep.subr.mxu0 0.0
        %1057 = vmatpush1.msra.mxu0 0.0
        %1058 = vmatprep.subr.mxu0 0.0
        %1059 = vmatpush1.msra.mxu0 0.0
        %1060 = vmatprep.subr.mxu0 0.0
        %1061 = vmatpush1.msra.mxu0 0.0
        %1062 = vmatprep.subr.mxu0 0.0
        %1063 = vmatpush1.msra.mxu0 0.0
        %1064 = vmatprep.subr.mxu0 0.0
        %1065 = vmatpush1.msra.mxu0 0.0
        %1066 = vmatprep.subr.mxu0 0.0
        %1067 = vmatpush1.msra.mxu0 0.0
        %1068 = vmatprep.subr.mxu0 %v949
        %1069 = vmatpush1.msra.mxu0 %v948
        %1070 = vmatprep.subr.mxu0 %v947
        %1071 = vmatpush1.msra.mxu0 %v946
        %1072 = vmatprep.subr.mxu0 0.0
        %1073 = vmatpush2.msra.mxu0 0.0
        %1074 = vmatprep.subr.mxu0 0.0
        %1075 = vmatpush2.msra.mxu0 0.0
        %1076 = vmatprep.subr.mxu0 0.0
        %1077 = vmatpush2.msra.mxu0 0.0
        %1078 = vmatprep.subr.mxu0 0.0
        %1079 = vmatpush2.msra.mxu0 0.0
        %1080 = vmatprep.subr.mxu0 0.0
        %1081 = vmatpush2.msra.mxu0 0.0
        %1082 = vmatprep.subr.mxu0 0.0
        %1083 = vmatpush2.msra.mxu0 0.0
        %1084 = vmatprep.subr.mxu0 0.0
        %1085 = vmatpush2.msra.mxu0 0.0
        %1086 = vmatprep.subr.mxu0 0.0
        %1087 = vmatpush2.msra.mxu0 0.0
        %1088 = vmatprep.subr.mxu0 0.0
        %1089 = vmatpush2.msra.mxu0 0.0
        %1090 = vmatprep.subr.mxu0 0.0
        %1091 = vmatpush2.msra.mxu0 0.0
        %1092 = vmatprep.subr.mxu0 0.0
        %1093 = vmatpush2.msra.mxu0 0.0
        %1094 = vmatprep.subr.mxu0 0.0
        %1095 = vmatpush2.msra.mxu0 0.0
        %1096 = vmatprep.subr.mxu0 0.0
        %1097 = vmatpush2.msra.mxu0 0.0
        %1098 = vmatprep.subr.mxu0 0.0
        %1099 = vmatpush2.msra.mxu0 0.0
        %1100 = vmatprep.subr.mxu0 0.0
        %1101 = vmatpush2.msra.mxu0 0.0
        %1102 = vmatprep.subr.mxu0 0.0
        %1103 = vmatpush2.msra.mxu0 0.0
        %1104 = vmatprep.mubr.f32.mxu0 0.0
        %1105 = vmatmul.mubr.f32.gmra.mxu0 %v1035
        %v1106 = vpop.f32.mrf.mxu0
        %v1107 = vadd.f32 0.0, %v1106
        %v1108 = vpop.f32.mrf.mxu0
        %v1109 = vadd.f32 0.0, %v1108
        %1110 = vmatprep.mubr.f32.mxu0 0.0
        %1111 = vmatmul.mubr.f32.gmra.mxu0 %v1038
        %v1112 = vpop.f32.mrf.mxu0
        %v1113 = vadd.f32 0.0, %v1112
        %v1114 = vpop.f32.mrf.mxu0
        %v1115 = vadd.f32 0.0, %v1114
        %1116 = vdwg.mxu0
        %v1117 = vadd.f32 %v1024, %v1107
        %v1118 = vadd.f32 %v1026, %v1109
        %v1119 = vadd.f32 %v1030, %v1113
        %v1120 = vadd.f32 %v1032, %v1115
        %v1121 = vsub.f32 %v946, %v942
        %v1122 = vsub.f32 %v947, %v943
        %v1123 = vsub.f32 %v948, %v944
        %v1124 = vsub.f32 %v949, %v945
        %v1126 = vsel %vm950, %v746, 0
        %v1129 = vsel %vm950, %v747, 0
        %1131 = vmatprep.subr.mxu0 0.0
        %1132 = vmatpush1.msra.mxu0 0.0
        %1133 = vmatprep.subr.mxu0 0.0
        %1134 = vmatpush1.msra.mxu0 0.0
        %1135 = vmatprep.subr.mxu0 0.0
        %1136 = vmatpush1.msra.mxu0 0.0
        %1137 = vmatprep.subr.mxu0 0.0
        %1138 = vmatpush1.msra.mxu0 0.0
        %1139 = vmatprep.subr.mxu0 0.0
        %1140 = vmatpush1.msra.mxu0 0.0
        %1141 = vmatprep.subr.mxu0 0.0
        %1142 = vmatpush1.msra.mxu0 0.0
        %1143 = vmatprep.subr.mxu0 0.0
        %1144 = vmatpush1.msra.mxu0 0.0
        %1145 = vmatprep.subr.mxu0 0.0
        %1146 = vmatpush1.msra.mxu0 0.0
        %1147 = vmatprep.subr.mxu0 0.0
        %1148 = vmatpush1.msra.mxu0 0.0
        %1149 = vmatprep.subr.mxu0 0.0
        %1150 = vmatpush1.msra.mxu0 0.0
        %1151 = vmatprep.subr.mxu0 0.0
        %1152 = vmatpush1.msra.mxu0 0.0
        %1153 = vmatprep.subr.mxu0 0.0
        %1154 = vmatpush1.msra.mxu0 0.0
        %1155 = vmatprep.subr.mxu0 0.0
        %1156 = vmatpush1.msra.mxu0 0.0
        %1157 = vmatprep.subr.mxu0 0.0
        %1158 = vmatpush1.msra.mxu0 0.0
        %1159 = vmatprep.subr.mxu0 %v1124
        %1160 = vmatpush1.msra.mxu0 %v1123
        %1161 = vmatprep.subr.mxu0 %v1122
        %1162 = vmatpush1.msra.mxu0 %v1121
        %1163 = vmatprep.subr.mxu0 0.0
        %1164 = vmatpush2.msra.mxu0 0.0
        %1165 = vmatprep.subr.mxu0 0.0
        %1166 = vmatpush2.msra.mxu0 0.0
        %1167 = vmatprep.subr.mxu0 0.0
        %1168 = vmatpush2.msra.mxu0 0.0
        %1169 = vmatprep.subr.mxu0 0.0
        %1170 = vmatpush2.msra.mxu0 0.0
        %1171 = vmatprep.subr.mxu0 0.0
        %1172 = vmatpush2.msra.mxu0 0.0
        %1173 = vmatprep.subr.mxu0 0.0
        %1174 = vmatpush2.msra.mxu0 0.0
        %1175 = vmatprep.subr.mxu0 0.0
        %1176 = vmatpush2.msra.mxu0 0.0
        %1177 = vmatprep.subr.mxu0 0.0
        %1178 = vmatpush2.msra.mxu0 0.0
        %1179 = vmatprep.subr.mxu0 0.0
        %1180 = vmatpush2.msra.mxu0 0.0
        %1181 = vmatprep.subr.mxu0 0.0
        %1182 = vmatpush2.msra.mxu0 0.0
        %1183 = vmatprep.subr.mxu0 0.0
        %1184 = vmatpush2.msra.mxu0 0.0
        %1185 = vmatprep.subr.mxu0 0.0
        %1186 = vmatpush2.msra.mxu0 0.0
        %1187 = vmatprep.subr.mxu0 0.0
        %1188 = vmatpush2.msra.mxu0 0.0
        %1189 = vmatprep.subr.mxu0 0.0
        %1190 = vmatpush2.msra.mxu0 0.0
        %1191 = vmatprep.subr.mxu0 0.0
        %1192 = vmatpush2.msra.mxu0 0.0
        %1193 = vmatprep.subr.mxu0 0.0
        %1194 = vmatpush2.msra.mxu0 0.0
        %1195 = vmatprep.mubr.f32.mxu0 0.0
        %1196 = vmatmul.mubr.f32.gmra.mxu0 %v1126
        %v1197 = vpop.f32.mrf.mxu0
        %v1198 = vadd.f32 %v1024, %v1197
        %v1199 = vpop.f32.mrf.mxu0
        %v1200 = vadd.f32 %v1026, %v1199
        %1201 = vmatprep.mubr.f32.mxu0 0.0
        %1202 = vmatmul.mubr.f32.gmra.mxu0 %v1129
        %v1203 = vpop.f32.mrf.mxu0
        %v1204 = vadd.f32 %v1030, %v1203
        %v1205 = vpop.f32.mrf.mxu0
        %v1206 = vadd.f32 %v1032, %v1205
        %1207 = vdwg.mxu0
        %v1208 = vsub.f32 %v1198, %v1107
        %v1209 = vsub.f32 %v1200, %v1109
        %v1210 = vsub.f32 %v1204, %v1113
        %v1211 = vsub.f32 %v1206, %v1115
        %1212 = vmatprep.subr.mxu0 %v779
        %1213 = vmatpush1.msra.mxu0 %v778
        %1214 = vmatprep.subr.mxu0 %v777
        %1215 = vmatpush1.msra.mxu0 %v776
        %1216 = vmatprep.subr.mxu0 %v775
        %1217 = vmatpush1.msra.mxu0 %v774
        %1218 = vmatprep.subr.mxu0 %v773
        %1219 = vmatpush1.msra.mxu0 %v772
        %1220 = vmatprep.subr.mxu0 %v771
        %1221 = vmatpush1.msra.mxu0 %v770
        %1222 = vmatprep.subr.mxu0 %v769
        %1223 = vmatpush1.msra.mxu0 %v768
        %1224 = vmatprep.subr.mxu0 %v767
        %1225 = vmatpush1.msra.mxu0 %v766
        %1226 = vmatprep.subr.mxu0 %v765
        %1227 = vmatpush1.msra.mxu0 %v764
        %1228 = vmatprep.subr.mxu0 %v763
        %1229 = vmatpush1.msra.mxu0 %v762
        %1230 = vmatprep.subr.mxu0 %v761
        %1231 = vmatpush1.msra.mxu0 %v760
        %1232 = vmatprep.subr.mxu0 %v759
        %1233 = vmatpush1.msra.mxu0 %v758
        %1234 = vmatprep.subr.mxu0 %v757
        %1235 = vmatpush1.msra.mxu0 %v756
        %1236 = vmatprep.subr.mxu0 %v755
        %1237 = vmatpush1.msra.mxu0 %v754
        %1238 = vmatprep.subr.mxu0 %v753
        %1239 = vmatpush1.msra.mxu0 %v752
        %1240 = vmatprep.subr.mxu0 %v751
        %1241 = vmatpush1.msra.mxu0 %v750
        %1242 = vmatprep.subr.mxu0 %v749
        %1243 = vmatpush1.msra.mxu0 %v748
        %1244 = vmatprep.subr.mxu0 %v811
        %1245 = vmatpush2.msra.mxu0 %v810
        %1246 = vmatprep.subr.mxu0 %v809
        %1247 = vmatpush2.msra.mxu0 %v808
        %1248 = vmatprep.subr.mxu0 %v807
        %1249 = vmatpush2.msra.mxu0 %v806
        %1250 = vmatprep.subr.mxu0 %v805
        %1251 = vmatpush2.msra.mxu0 %v804
        %1252 = vmatprep.subr.mxu0 %v803
        %1253 = vmatpush2.msra.mxu0 %v802
        %1254 = vmatprep.subr.mxu0 %v801
        %1255 = vmatpush2.msra.mxu0 %v800
        %1256 = vmatprep.subr.mxu0 %v799
        %1257 = vmatpush2.msra.mxu0 %v798
        %1258 = vmatprep.subr.mxu0 %v797
        %1259 = vmatpush2.msra.mxu0 %v796
        %1260 = vmatprep.subr.mxu0 %v795
        %1261 = vmatpush2.msra.mxu0 %v794
        %1262 = vmatprep.subr.mxu0 %v793
        %1263 = vmatpush2.msra.mxu0 %v792
        %1264 = vmatprep.subr.mxu0 %v791
        %1265 = vmatpush2.msra.mxu0 %v790
        %1266 = vmatprep.subr.mxu0 %v789
        %1267 = vmatpush2.msra.mxu0 %v788
        %1268 = vmatprep.subr.mxu0 %v787
        %1269 = vmatpush2.msra.mxu0 %v786
        %1270 = vmatprep.subr.mxu0 %v785
        %1271 = vmatpush2.msra.mxu0 %v784
        %1272 = vmatprep.subr.mxu0 %v783
        %1273 = vmatpush2.msra.mxu0 %v782
        %1274 = vmatprep.subr.mxu0 %v781
        %1275 = vmatpush2.msra.mxu0 %v780
        %1276 = vmatprep.mubr.f32.mxu0 %v1118
        %1277 = vmatmul.mubr.f32.gmra.mxu0 %v1117
        %v1278 = vpop.f32.mrf.mxu0
        %v1279 = vadd.f32 0.0, %v1278
        %v1280 = vpop.f32.mrf.mxu0
        %v1281 = vadd.f32 0.0, %v1280
        %1282 = vmatprep.mubr.f32.mxu0 %v1120
        %1283 = vmatmul.mubr.f32.gmra.mxu0 %v1119
        %v1284 = vpop.f32.mrf.mxu0
        %v1285 = vadd.f32 0.0, %v1284
        %v1286 = vpop.f32.mrf.mxu0
        %v1287 = vadd.f32 0.0, %v1286
        %1288 = vdwg.mxu0
        %1289 = vmatprep.subr.mxu0 %v844
        %1290 = vmatpush1.msra.mxu0 %v843
        %1291 = vmatprep.subr.mxu0 %v842
        %1292 = vmatpush1.msra.mxu0 %v841
        %1293 = vmatprep.subr.mxu0 %v840
        %1294 = vmatpush1.msra.mxu0 %v839
        %1295 = vmatprep.subr.mxu0 %v838
        %1296 = vmatpush1.msra.mxu0 %v837
        %1297 = vmatprep.subr.mxu0 %v836
        %1298 = vmatpush1.msra.mxu0 %v835
        %1299 = vmatprep.subr.mxu0 %v834
        %1300 = vmatpush1.msra.mxu0 %v833
        %1301 = vmatprep.subr.mxu0 %v832
        %1302 = vmatpush1.msra.mxu0 %v831
        %1303 = vmatprep.subr.mxu0 %v830
        %1304 = vmatpush1.msra.mxu0 %v829
        %1305 = vmatprep.subr.mxu0 %v828
        %1306 = vmatpush1.msra.mxu0 %v827
        %1307 = vmatprep.subr.mxu0 %v826
        %1308 = vmatpush1.msra.mxu0 %v825
        %1309 = vmatprep.subr.mxu0 %v824
        %1310 = vmatpush1.msra.mxu0 %v823
        %1311 = vmatprep.subr.mxu0 %v822
        %1312 = vmatpush1.msra.mxu0 %v821
        %1313 = vmatprep.subr.mxu0 %v820
        %1314 = vmatpush1.msra.mxu0 %v819
        %1315 = vmatprep.subr.mxu0 %v818
        %1316 = vmatpush1.msra.mxu0 %v817
        %1317 = vmatprep.subr.mxu0 %v816
        %1318 = vmatpush1.msra.mxu0 %v815
        %1319 = vmatprep.subr.mxu0 %v814
        %1320 = vmatpush1.msra.mxu0 %v813
        %1321 = vmatprep.subr.mxu0 %v876
        %1322 = vmatpush2.msra.mxu0 %v875
        %1323 = vmatprep.subr.mxu0 %v874
        %1324 = vmatpush2.msra.mxu0 %v873
        %1325 = vmatprep.subr.mxu0 %v872
        %1326 = vmatpush2.msra.mxu0 %v871
        %1327 = vmatprep.subr.mxu0 %v870
        %1328 = vmatpush2.msra.mxu0 %v869
        %1329 = vmatprep.subr.mxu0 %v868
        %1330 = vmatpush2.msra.mxu0 %v867
        %1331 = vmatprep.subr.mxu0 %v866
        %1332 = vmatpush2.msra.mxu0 %v865
        %1333 = vmatprep.subr.mxu0 %v864
        %1334 = vmatpush2.msra.mxu0 %v863
        %1335 = vmatprep.subr.mxu0 %v862
        %1336 = vmatpush2.msra.mxu0 %v861
        %1337 = vmatprep.subr.mxu0 %v860
        %1338 = vmatpush2.msra.mxu0 %v859
        %1339 = vmatprep.subr.mxu0 %v858
        %1340 = vmatpush2.msra.mxu0 %v857
        %1341 = vmatprep.subr.mxu0 %v856
        %1342 = vmatpush2.msra.mxu0 %v855
        %1343 = vmatprep.subr.mxu0 %v854
        %1344 = vmatpush2.msra.mxu0 %v853
        %1345 = vmatprep.subr.mxu0 %v852
        %1346 = vmatpush2.msra.mxu0 %v851
        %1347 = vmatprep.subr.mxu0 %v850
        %1348 = vmatpush2.msra.mxu0 %v849
        %1349 = vmatprep.subr.mxu0 %v848
        %1350 = vmatpush2.msra.mxu0 %v847
        %1351 = vmatprep.subr.mxu0 %v846
        %1352 = vmatpush2.msra.mxu0 %v845
        %1353 = vmatprep.mubr.f32.mxu0 %v1209
        %1354 = vmatmul.mubr.f32.gmra.mxu0 %v1208
        %v1355 = vpop.f32.mrf.mxu0
        %v1356 = vadd.f32 0.0, %v1355
        %v1357 = vpop.f32.mrf.mxu0
        %v1358 = vadd.f32 0.0, %v1357
        %1359 = vmatprep.mubr.f32.mxu0 %v1211
        %1360 = vmatmul.mubr.f32.gmra.mxu0 %v1210
        %v1361 = vpop.f32.mrf.mxu0
        %v1362 = vadd.f32 0.0, %v1361
        %v1363 = vpop.f32.mrf.mxu0
        %v1364 = vadd.f32 0.0, %v1363
        %1365 = vdwg.mxu0
        %v1366 = vadd.f32 %v1279, %v1356
        %v1367 = vadd.f32 %v1281, %v1358
        %v1368 = vadd.f32 %v1285, %v1362
        %v1369 = vadd.f32 %v1287, %v1364
        %v1370 = vsub.f32 %v1208, %v1117
        %v1371 = vsub.f32 %v1209, %v1118
        %v1372 = vsub.f32 %v1210, %v1119
        %v1373 = vsub.f32 %v1211, %v1120
        %1374 = vmatprep.subr.mxu0 %v909
        %1375 = vmatpush1.msra.mxu0 %v908
        %1376 = vmatprep.subr.mxu0 %v907
        %1377 = vmatpush1.msra.mxu0 %v906
        %1378 = vmatprep.subr.mxu0 %v905
        %1379 = vmatpush1.msra.mxu0 %v904
        %1380 = vmatprep.subr.mxu0 %v903
        %1381 = vmatpush1.msra.mxu0 %v902
        %1382 = vmatprep.subr.mxu0 %v901
        %1383 = vmatpush1.msra.mxu0 %v900
        %1384 = vmatprep.subr.mxu0 %v899
        %1385 = vmatpush1.msra.mxu0 %v898
        %1386 = vmatprep.subr.mxu0 %v897
        %1387 = vmatpush1.msra.mxu0 %v896
        %1388 = vmatprep.subr.mxu0 %v895
        %1389 = vmatpush1.msra.mxu0 %v894
        %1390 = vmatprep.subr.mxu0 %v893
        %1391 = vmatpush1.msra.mxu0 %v892
        %1392 = vmatprep.subr.mxu0 %v891
        %1393 = vmatpush1.msra.mxu0 %v890
        %1394 = vmatprep.subr.mxu0 %v889
        %1395 = vmatpush1.msra.mxu0 %v888
        %1396 = vmatprep.subr.mxu0 %v887
        %1397 = vmatpush1.msra.mxu0 %v886
        %1398 = vmatprep.subr.mxu0 %v885
        %1399 = vmatpush1.msra.mxu0 %v884
        %1400 = vmatprep.subr.mxu0 %v883
        %1401 = vmatpush1.msra.mxu0 %v882
        %1402 = vmatprep.subr.mxu0 %v881
        %1403 = vmatpush1.msra.mxu0 %v880
        %1404 = vmatprep.subr.mxu0 %v879
        %1405 = vmatpush1.msra.mxu0 %v878
        %1406 = vmatprep.subr.mxu0 %v941
        %1407 = vmatpush2.msra.mxu0 %v940
        %1408 = vmatprep.subr.mxu0 %v939
        %1409 = vmatpush2.msra.mxu0 %v938
        %1410 = vmatprep.subr.mxu0 %v937
        %1411 = vmatpush2.msra.mxu0 %v936
        %1412 = vmatprep.subr.mxu0 %v935
        %1413 = vmatpush2.msra.mxu0 %v934
        %1414 = vmatprep.subr.mxu0 %v933
        %1415 = vmatpush2.msra.mxu0 %v932
        %1416 = vmatprep.subr.mxu0 %v931
        %1417 = vmatpush2.msra.mxu0 %v930
        %1418 = vmatprep.subr.mxu0 %v929
        %1419 = vmatpush2.msra.mxu0 %v928
        %1420 = vmatprep.subr.mxu0 %v927
        %1421 = vmatpush2.msra.mxu0 %v926
        %1422 = vmatprep.subr.mxu0 %v925
        %1423 = vmatpush2.msra.mxu0 %v924
        %1424 = vmatprep.subr.mxu0 %v923
        %1425 = vmatpush2.msra.mxu0 %v922
        %1426 = vmatprep.subr.mxu0 %v921
        %1427 = vmatpush2.msra.mxu0 %v920
        %1428 = vmatprep.subr.mxu0 %v919
        %1429 = vmatpush2.msra.mxu0 %v918
        %1430 = vmatprep.subr.mxu0 %v917
        %1431 = vmatpush2.msra.mxu0 %v916
        %1432 = vmatprep.subr.mxu0 %v915
        %1433 = vmatpush2.msra.mxu0 %v914
        %1434 = vmatprep.subr.mxu0 %v913
        %1435 = vmatpush2.msra.mxu0 %v912
        %1436 = vmatprep.subr.mxu0 %v911
        %1437 = vmatpush2.msra.mxu0 %v910
        %1438 = vmatprep.mubr.f32.mxu0 %v1371
        %1439 = vmatmul.mubr.f32.gmra.mxu0 %v1370
        %v1440 = vpop.f32.mrf.mxu0
        %v1441 = vadd.f32 %v1279, %v1440
        %v1442 = vpop.f32.mrf.mxu0
        %v1443 = vadd.f32 %v1281, %v1442
        %1444 = vmatprep.mubr.f32.mxu0 %v1373
        %1445 = vmatmul.mubr.f32.gmra.mxu0 %v1372
        %v1446 = vpop.f32.mrf.mxu0
        %v1447 = vadd.f32 %v1285, %v1446
        %v1448 = vpop.f32.mrf.mxu0
        %v1449 = vadd.f32 %v1287, %v1448
        %1450 = vdwg.mxu0
        %v1451 = vsub.f32 %v1441, %v1356
        %v1452 = vsub.f32 %v1443, %v1358
        %v1453 = vsub.f32 %v1447, %v1362
        %v1454 = vsub.f32 %v1449, %v1364
        %v1455 = vadd.f32 %v1366, %v1368
        %v1456 = vrot.slane %v1455, 4
        %v1457 = vadd.f32 %v1455, %v1456
        %v1458 = vrot.slane %v1457, 2
        %v1459 = vadd.f32 %v1457, %v1458
        %v1460 = vrot.slane %v1459, 1
        %v1461 = vadd.f32 %v1459, %v1460
        %v1462 = vadd.f32 %v1367, %v1369
        %v1463 = vrot.slane %v1462, 4
        %v1464 = vadd.f32 %v1462, %v1463
        %v1465 = vrot.slane %v1464, 2
        %v1466 = vadd.f32 %v1464, %v1465
        %v1467 = vrot.slane %v1466, 1
        %v1468 = vadd.f32 %v1466, %v1467
        %v1469 = vmul.f32 %v1366, %v1366
        %v1470 = vmul.f32 %v1367, %v1367
        %v1471 = vmul.f32 %v1368, %v1368
        %v1472 = vmul.f32 %v1369, %v1369
        %v1473 = vadd.f32 %v1469, %v1471
        %v1474 = vrot.slane %v1473, 4
        %v1475 = vadd.f32 %v1473, %v1474
        %v1476 = vrot.slane %v1475, 2
        %v1477 = vadd.f32 %v1475, %v1476
        %v1478 = vrot.slane %v1477, 1
        %v1479 = vadd.f32 %v1477, %v1478
        %v1480 = vadd.f32 %v1470, %v1472
        %v1481 = vrot.slane %v1480, 4
        %v1482 = vadd.f32 %v1480, %v1481
        %v1483 = vrot.slane %v1482, 2
        %v1484 = vadd.f32 %v1482, %v1483
        %v1485 = vrot.slane %v1484, 1
        %v1486 = vadd.f32 %v1484, %v1485
        %v1487 = vadd.f32 %v1451, %v1453
        %v1488 = vrot.slane %v1487, 4
        %v1489 = vadd.f32 %v1487, %v1488
        %v1490 = vrot.slane %v1489, 2
        %v1491 = vadd.f32 %v1489, %v1490
        %v1492 = vrot.slane %v1491, 1
        %v1493 = vadd.f32 %v1491, %v1492
        %v1494 = vadd.f32 %v1452, %v1454
        %v1495 = vrot.slane %v1494, 4
        %v1496 = vadd.f32 %v1494, %v1495
        %v1497 = vrot.slane %v1496, 2
        %v1498 = vadd.f32 %v1496, %v1497
        %v1499 = vrot.slane %v1498, 1
        %v1500 = vadd.f32 %v1498, %v1499
        %v1501 = vmul.f32 %v1451, %v1451
        %v1502 = vmul.f32 %v1452, %v1452
        %v1503 = vmul.f32 %v1453, %v1453
        %v1504 = vmul.f32 %v1454, %v1454
        %v1505 = vadd.f32 %v1501, %v1503
        %v1506 = vrot.slane %v1505, 4
        %v1507 = vadd.f32 %v1505, %v1506
        %v1508 = vrot.slane %v1507, 2
        %v1509 = vadd.f32 %v1507, %v1508
        %v1510 = vrot.slane %v1509, 1
        %v1511 = vadd.f32 %v1509, %v1510
        %v1512 = vadd.f32 %v1502, %v1504
        %v1513 = vrot.slane %v1512, 4
        %v1514 = vadd.f32 %v1512, %v1513
        %v1515 = vrot.slane %v1514, 2
        %v1516 = vadd.f32 %v1514, %v1515
        %v1517 = vrot.slane %v1516, 1
        %v1518 = vadd.f32 %v1516, %v1517
        %vm1519 = vcmask 1040384
        %v1520 = vsel %vm1519, %v1461, 0.0
        %1521 = vadd.xlane.f32.xlu0 %v1520
        %v1522 = vpop.xlane.xlu0 %1521
        %v1523 = vrot.slane %v1522, 4
        %v1524 = vadd.f32 %v1522, %v1523
        %v1525 = vrot.slane %v1524, 2
        %v1526 = vadd.f32 %v1524, %v1525
        %v1527 = vrot.slane %v1526, 1
        %v1528 = vadd.f32 %v1526, %v1527
        %s1529 = vtos %v1528
        %v1530 = vsel %vm1519, %v1479, 0.0
        %1531 = vadd.xlane.f32.xlu0 %v1530
        %v1532 = vpop.xlane.xlu0 %1531
        %v1533 = vrot.slane %v1532, 4
        %v1534 = vadd.f32 %v1532, %v1533
        %v1535 = vrot.slane %v1534, 2
        %v1536 = vadd.f32 %v1534, %v1535
        %v1537 = vrot.slane %v1536, 1
        %v1538 = vadd.f32 %v1536, %v1537
        %s1539 = vtos %v1538
        %v1540 = vrcp.pop 256.0
        %s1541 = vtos %v1540
        %s1542 = smul.f32 %s1529, %s1541
        %s1543 = smul.f32 %s1542, 256.0
        %s1544 = smul.f32 %s1543, %s1542
        %s1545 = ssub.f32 %s1539, %s1544
        %v1546 = vrcp.pop 255.0
        %s1547 = vtos %v1546
        %s1548 = smul.f32 %s1545, %s1547
        %s1549 = smax.f32 %s1548, 0.0
        %v1550 = vstv %s1549
        %v1551 = vrsqrt.pop %v1550
        %v1552 = vmul.f32 %v1550, %v1551
        %vm1553 = vcmp.eq.f32.partialorder %v1550, inf
        %v1554 = vsel %vm1553, %v1550, %v1552
        %vm1555 = vcmp.eq.f32.partialorder %v1550, 0.0
        %v1556 = vand.u32 %v1550, 2147483648
        %v1557 = vsel %vm1555, %v1556, %v1554
        %s1558 = vtos %v1557
        %s1559 = smax.f32 %s1558, 1e-12
        %v1560 = vstv %s1559
        %v1561 = vrcp.pop %v1560
        %s1562 = vtos %v1561
        %v1563 = vsel %vm1519, %v1468, 0.0
        %1564 = vadd.xlane.f32.xlu0 %v1563
        %v1565 = vpop.xlane.xlu0 %1564
        %v1566 = vrot.slane %v1565, 4
        %v1567 = vadd.f32 %v1565, %v1566
        %v1568 = vrot.slane %v1567, 2
        %v1569 = vadd.f32 %v1567, %v1568
        %v1570 = vrot.slane %v1569, 1
        %v1571 = vadd.f32 %v1569, %v1570
        %s1572 = vtos %v1571
        %v1573 = vsel %vm1519, %v1486, 0.0
        %1574 = vadd.xlane.f32.xlu0 %v1573
        %v1575 = vpop.xlane.xlu0 %1574
        %v1576 = vrot.slane %v1575, 4
        %v1577 = vadd.f32 %v1575, %v1576
        %v1578 = vrot.slane %v1577, 2
        %v1579 = vadd.f32 %v1577, %v1578
        %v1580 = vrot.slane %v1579, 1
        %v1581 = vadd.f32 %v1579, %v1580
        %s1582 = vtos %v1581
        %v1583 = vrcp.pop 256.0
        %s1584 = vtos %v1583
        %s1585 = smul.f32 %s1572, %s1584
        %s1586 = smul.f32 %s1585, 256.0
        %s1587 = smul.f32 %s1586, %s1585
        %s1588 = ssub.f32 %s1582, %s1587
        %v1589 = vrcp.pop 255.0
        %s1590 = vtos %v1589
        %s1591 = smul.f32 %s1588, %s1590
        %s1592 = smax.f32 %s1591, 0.0
        %v1593 = vstv %s1592
        %v1594 = vrsqrt.pop %v1593
        %v1595 = vmul.f32 %v1593, %v1594
        %vm1596 = vcmp.eq.f32.partialorder %v1593, inf
        %v1597 = vsel %vm1596, %v1593, %v1595
        %vm1598 = vcmp.eq.f32.partialorder %v1593, 0.0
        %v1599 = vand.u32 %v1593, 2147483648
        %v1600 = vsel %vm1598, %v1599, %v1597
        %s1601 = vtos %v1600
        %s1602 = smax.f32 %s1601, 1e-12
        %v1603 = vstv %s1602
        %v1604 = vrcp.pop %v1603
        %s1605 = vtos %v1604
        %v1606 = vsel %vm1519, %v1493, 0.0
        %1607 = vadd.xlane.f32.xlu0 %v1606
        %v1608 = vpop.xlane.xlu0 %1607
        %v1609 = vrot.slane %v1608, 4
        %v1610 = vadd.f32 %v1608, %v1609
        %v1611 = vrot.slane %v1610, 2
        %v1612 = vadd.f32 %v1610, %v1611
        %v1613 = vrot.slane %v1612, 1
        %v1614 = vadd.f32 %v1612, %v1613
        %s1615 = vtos %v1614
        %v1616 = vsel %vm1519, %v1511, 0.0
        %1617 = vadd.xlane.f32.xlu0 %v1616
        %v1618 = vpop.xlane.xlu0 %1617
        %v1619 = vrot.slane %v1618, 4
        %v1620 = vadd.f32 %v1618, %v1619
        %v1621 = vrot.slane %v1620, 2
        %v1622 = vadd.f32 %v1620, %v1621
        %v1623 = vrot.slane %v1622, 1
        %v1624 = vadd.f32 %v1622, %v1623
        %s1625 = vtos %v1624
        %v1626 = vrcp.pop 256.0
        %s1627 = vtos %v1626
        %s1628 = smul.f32 %s1615, %s1627
        %s1629 = smul.f32 %s1628, 256.0
        %s1630 = smul.f32 %s1629, %s1628
        %s1631 = ssub.f32 %s1625, %s1630
        %v1632 = vrcp.pop 255.0
        %s1633 = vtos %v1632
        %s1634 = smul.f32 %s1631, %s1633
        %s1635 = smax.f32 %s1634, 0.0
        %v1636 = vstv %s1635
        %v1637 = vrsqrt.pop %v1636
        %v1638 = vmul.f32 %v1636, %v1637
        %vm1639 = vcmp.eq.f32.partialorder %v1636, inf
        %v1640 = vsel %vm1639, %v1636, %v1638
        %vm1641 = vcmp.eq.f32.partialorder %v1636, 0.0
        %v1642 = vand.u32 %v1636, 2147483648
        %v1643 = vsel %vm1641, %v1642, %v1640
        %s1644 = vtos %v1643
        %s1645 = smax.f32 %s1644, 1e-12
        %v1646 = vstv %s1645
        %v1647 = vrcp.pop %v1646
        %s1648 = vtos %v1647
        %v1649 = vsel %vm1519, %v1500, 0.0
        %1650 = vadd.xlane.f32.xlu0 %v1649
        %v1651 = vpop.xlane.xlu0 %1650
        %v1652 = vrot.slane %v1651, 4
        %v1653 = vadd.f32 %v1651, %v1652
        %v1654 = vrot.slane %v1653, 2
        %v1655 = vadd.f32 %v1653, %v1654
        %v1656 = vrot.slane %v1655, 1
        %v1657 = vadd.f32 %v1655, %v1656
        %s1658 = vtos %v1657
        %v1659 = vsel %vm1519, %v1518, 0.0
        %1660 = vadd.xlane.f32.xlu0 %v1659
        %v1661 = vpop.xlane.xlu0 %1660
        %v1662 = vrot.slane %v1661, 4
        %v1663 = vadd.f32 %v1661, %v1662
        %v1664 = vrot.slane %v1663, 2
        %v1665 = vadd.f32 %v1663, %v1664
        %v1666 = vrot.slane %v1665, 1
        %v1667 = vadd.f32 %v1665, %v1666
        %s1668 = vtos %v1667
        %v1669 = vrcp.pop 256.0
        %s1670 = vtos %v1669
        %s1671 = smul.f32 %s1658, %s1670
        %s1672 = smul.f32 %s1671, 256.0
        %s1673 = smul.f32 %s1672, %s1671
        %s1674 = ssub.f32 %s1668, %s1673
        %v1675 = vrcp.pop 255.0
        %s1676 = vtos %v1675
        %s1677 = smul.f32 %s1674, %s1676
        %s1678 = smax.f32 %s1677, 0.0
        %v1679 = vstv %s1678
        %v1680 = vrsqrt.pop %v1679
        %v1681 = vmul.f32 %v1679, %v1680
        %vm1682 = vcmp.eq.f32.partialorder %v1679, inf
        %v1683 = vsel %vm1682, %v1679, %v1681
        %vm1684 = vcmp.eq.f32.partialorder %v1679, 0.0
        %v1685 = vand.u32 %v1679, 2147483648
        %v1686 = vsel %vm1684, %v1685, %v1683
        %s1687 = vtos %v1686
        %s1688 = smax.f32 %s1687, 1e-12
        %v1689 = vstv %s1688
        %v1690 = vrcp.pop %v1689
        %s1691 = vtos %v1690
        %s1692 = sld [smem:[#allocation16]]
        %s1693 = sld [smem:[#allocation15]]
        %s1694 = smul.f32 %s1693, %s1562
        %s1695 = smul.f32 %s1694, %s1542
        %s1696 = ssub.f32 %s1692, %s1695
        %v1697 = vstv %s1694
        %v1698 = vmul.f32 %v1366, %v1697
        %v1699 = vmul.f32 %v1368, %v1697
        %s1700 = sld [smem:[#allocation15 + $0x1]]
        %s1701 = smul.f32 %s1700, %s1605
        %s1702 = smul.f32 %s1701, %s1585
        %s1703 = ssub.f32 %s1696, %s1702
        %v1704 = vstv %s1701
        %v1705 = vmul.f32 %v1367, %v1704
        %v1706 = vmul.f32 %v1369, %v1704
        %v1707 = vadd.f32 %v1698, %v1705
        %v1708 = vadd.f32 %v1699, %v1706
        %s1709 = sld [smem:[#allocation15 + $0x2]]
        %s1710 = smul.f32 %s1709, %s1648
        %s1711 = smul.f32 %s1710, %s1628
        %s1712 = ssub.f32 %s1703, %s1711
        %v1713 = vstv %s1710
        %v1714 = vmul.f32 %v1451, %v1713
        %v1715 = vmul.f32 %v1453, %v1713
        %v1716 = vadd.f32 %v1707, %v1714
        %v1717 = vadd.f32 %v1708, %v1715
        %s1718 = sld [smem:[#allocation15 + $0x3]]
        %s1719 = smul.f32 %s1718, %s1691
        %s1720 = smul.f32 %s1719, %s1671
        %s1721 = ssub.f32 %s1712, %s1720
        %v1722 = vstv %s1719
        %v1723 = vmul.f32 %v1452, %v1722
        %v1724 = vmul.f32 %v1454, %v1722
        %v1725 = vadd.f32 %v1716, %v1723
        %v1726 = vadd.f32 %v1717, %v1724
        %v1727 = vstv %s1721
        %v1728 = vadd.f32 %v1725, %v1727
        %v1729 = vadd.f32 %v1726, %v1727
        %v1730 = vmax.f32 %v1728, 0.0
        %v1731 = vmax.f32 %v1729, 0.0
        %s1732 = sld [smem:[#allocation16 + $0x1]]
        %s1733 = sld [smem:[#allocation15 + $0x80]]
        %s1734 = smul.f32 %s1733, %s1562
        %s1735 = smul.f32 %s1734, %s1542
        %s1736 = ssub.f32 %s1732, %s1735
        %v1737 = vstv %s1734
        %v1738 = vmul.f32 %v1366, %v1737
        %v1739 = vmul.f32 %v1368, %v1737
        %s1740 = sld [smem:[#allocation15 + $0x81]]
        %s1741 = smul.f32 %s1740, %s1605
        %s1742 = smul.f32 %s1741, %s1585
        %s1743 = ssub.f32 %s1736, %s1742
        %v1744 = vstv %s1741
        %v1745 = vmul.f32 %v1367, %v1744
        %v1746 = vmul.f32 %v1369, %v1744
        %v1747 = vadd.f32 %v1738, %v1745
        %v1748 = vadd.f32 %v1739, %v1746
        %s1749 = sld [smem:[#allocation15 + $0x82]]
        %s1750 = smul.f32 %s1749, %s1648
        %s1751 = smul.f32 %s1750, %s1628
        %s1752 = ssub.f32 %s1743, %s1751
        %v1753 = vstv %s1750
        %v1754 = vmul.f32 %v1451, %v1753
        %v1755 = vmul.f32 %v1453, %v1753
        %v1756 = vadd.f32 %v1747, %v1754
        %v1757 = vadd.f32 %v1748, %v1755
        %s1758 = sld [smem:[#allocation15 + $0x83]]
        %s1759 = smul.f32 %s1758, %s1691
        %s1760 = smul.f32 %s1759, %s1671
        %s1761 = ssub.f32 %s1752, %s1760
        %v1762 = vstv %s1759
        %v1763 = vmul.f32 %v1452, %v1762
        %v1764 = vmul.f32 %v1454, %v1762
        %v1765 = vadd.f32 %v1756, %v1763
        %v1766 = vadd.f32 %v1757, %v1764
        %v1767 = vstv %s1761
        %v1768 = vadd.f32 %v1765, %v1767
        %v1769 = vadd.f32 %v1766, %v1767
        %v1770 = vmax.f32 %v1768, 0.0
        %v1771 = vmax.f32 %v1769, 0.0
        %s1772 = sld [smem:[#allocation16 + $0x2]]
        %s1773 = sld [smem:[#allocation15 + $0x100]]
        %s1774 = smul.f32 %s1773, %s1562
        %s1775 = smul.f32 %s1774, %s1542
        %s1776 = ssub.f32 %s1772, %s1775
        %v1777 = vstv %s1774
        %v1778 = vmul.f32 %v1366, %v1777
        %v1779 = vmul.f32 %v1368, %v1777
        %s1780 = sld [smem:[#allocation15 + $0x101]]
        %s1781 = smul.f32 %s1780, %s1605
        %s1782 = smul.f32 %s1781, %s1585
        %s1783 = ssub.f32 %s1776, %s1782
        %v1784 = vstv %s1781
        %v1785 = vmul.f32 %v1367, %v1784
        %v1786 = vmul.f32 %v1369, %v1784
        %v1787 = vadd.f32 %v1778, %v1785
        %v1788 = vadd.f32 %v1779, %v1786
        %s1789 = sld [smem:[#allocation15 + $0x102]]
        %s1790 = smul.f32 %s1789, %s1648
        %s1791 = smul.f32 %s1790, %s1628
        %s1792 = ssub.f32 %s1783, %s1791
        %v1793 = vstv %s1790
        %v1794 = vmul.f32 %v1451, %v1793
        %v1795 = vmul.f32 %v1453, %v1793
        %v1796 = vadd.f32 %v1787, %v1794
        %v1797 = vadd.f32 %v1788, %v1795
        %s1798 = sld [smem:[#allocation15 + $0x103]]
        %s1799 = smul.f32 %s1798, %s1691
        %s1800 = smul.f32 %s1799, %s1671
        %s1801 = ssub.f32 %s1792, %s1800
        %v1802 = vstv %s1799
        %v1803 = vmul.f32 %v1452, %v1802
        %v1804 = vmul.f32 %v1454, %v1802
        %v1805 = vadd.f32 %v1796, %v1803
        %v1806 = vadd.f32 %v1797, %v1804
        %v1807 = vstv %s1801
        %v1808 = vadd.f32 %v1805, %v1807
        %v1809 = vadd.f32 %v1806, %v1807
        %v1810 = vmax.f32 %v1808, 0.0
        %v1811 = vmax.f32 %v1809, 0.0
        %s1812 = sld [smem:[#allocation16 + $0x3]]
        %s1813 = sld [smem:[#allocation15 + $0x180]]
        %s1814 = smul.f32 %s1813, %s1562
        %s1815 = smul.f32 %s1814, %s1542
        %s1816 = ssub.f32 %s1812, %s1815
        %v1817 = vstv %s1814
        %v1818 = vmul.f32 %v1366, %v1817
        %v1819 = vmul.f32 %v1368, %v1817
        %s1820 = sld [smem:[#allocation15 + $0x181]]
        %s1821 = smul.f32 %s1820, %s1605
        %s1822 = smul.f32 %s1821, %s1585
        %s1823 = ssub.f32 %s1816, %s1822
        %v1824 = vstv %s1821
        %v1825 = vmul.f32 %v1367, %v1824
        %v1826 = vmul.f32 %v1369, %v1824
        %v1827 = vadd.f32 %v1818, %v1825
        %v1828 = vadd.f32 %v1819, %v1826
        %s1829 = sld [smem:[#allocation15 + $0x182]]
        %s1830 = smul.f32 %s1829, %s1648
        %s1831 = smul.f32 %s1830, %s1628
        %s1832 = ssub.f32 %s1823, %s1831
        %v1833 = vstv %s1830
        %v1834 = vmul.f32 %v1451, %v1833
        %v1835 = vmul.f32 %v1453, %v1833
        %v1836 = vadd.f32 %v1827, %v1834
        %v1837 = vadd.f32 %v1828, %v1835
        %s1838 = sld [smem:[#allocation15 + $0x183]]
        %s1839 = smul.f32 %s1838, %s1691
        %s1840 = smul.f32 %s1839, %s1671
        %s1841 = ssub.f32 %s1832, %s1840
        %v1842 = vstv %s1839
        %v1843 = vmul.f32 %v1452, %v1842
        %v1844 = vmul.f32 %v1454, %v1842
        %v1845 = vadd.f32 %v1836, %v1843
        %v1846 = vadd.f32 %v1837, %v1844
        %v1847 = vstv %s1841
        %v1848 = vadd.f32 %v1845, %v1847
        %v1849 = vadd.f32 %v1846, %v1847
        %v1850 = vmax.f32 %v1848, 0.0
        %v1851 = vmax.f32 %v1849, 0.0
        %s1852 = sld [smem:[#allocation16 + $0x4]]
        %s1853 = sld [smem:[#allocation15 + $0x200]]
        %s1854 = smul.f32 %s1853, %s1562
        %s1855 = smul.f32 %s1854, %s1542
        %s1856 = ssub.f32 %s1852, %s1855
        %v1857 = vstv %s1854
        %v1858 = vmul.f32 %v1366, %v1857
        %v1859 = vmul.f32 %v1368, %v1857
        %s1860 = sld [smem:[#allocation15 + $0x201]]
        %s1861 = smul.f32 %s1860, %s1605
        %s1862 = smul.f32 %s1861, %s1585
        %s1863 = ssub.f32 %s1856, %s1862
        %v1864 = vstv %s1861
        %v1865 = vmul.f32 %v1367, %v1864
        %v1866 = vmul.f32 %v1369, %v1864
        %v1867 = vadd.f32 %v1858, %v1865
        %v1868 = vadd.f32 %v1859, %v1866
        %s1869 = sld [smem:[#allocation15 + $0x202]]
        %s1870 = smul.f32 %s1869, %s1648
        %s1871 = smul.f32 %s1870, %s1628
        %s1872 = ssub.f32 %s1863, %s1871
        %v1873 = vstv %s1870
        %v1874 = vmul.f32 %v1451, %v1873
        %v1875 = vmul.f32 %v1453, %v1873
        %v1876 = vadd.f32 %v1867, %v1874
        %v1877 = vadd.f32 %v1868, %v1875
        %s1878 = sld [smem:[#allocation15 + $0x203]]
        %s1879 = smul.f32 %s1878, %s1691
        %s1880 = smul.f32 %s1879, %s1671
        %s1881 = ssub.f32 %s1872, %s1880
        %v1882 = vstv %s1879
        %v1883 = vmul.f32 %v1452, %v1882
        %v1884 = vmul.f32 %v1454, %v1882
        %v1885 = vadd.f32 %v1876, %v1883
        %v1886 = vadd.f32 %v1877, %v1884
        %v1887 = vstv %s1881
        %v1888 = vadd.f32 %v1885, %v1887
        %v1889 = vadd.f32 %v1886, %v1887
        %v1890 = vmax.f32 %v1888, 0.0
        %v1891 = vmax.f32 %v1889, 0.0
        %s1892 = sld [smem:[#allocation16 + $0x5]]
        %s1893 = sld [smem:[#allocation15 + $0x280]]
        %s1894 = smul.f32 %s1893, %s1562
        %s1895 = smul.f32 %s1894, %s1542
        %s1896 = ssub.f32 %s1892, %s1895
        %v1897 = vstv %s1894
        %v1898 = vmul.f32 %v1366, %v1897
        %v1899 = vmul.f32 %v1368, %v1897
        %s1900 = sld [smem:[#allocation15 + $0x281]]
        %s1901 = smul.f32 %s1900, %s1605
        %s1902 = smul.f32 %s1901, %s1585
        %s1903 = ssub.f32 %s1896, %s1902
        %v1904 = vstv %s1901
        %v1905 = vmul.f32 %v1367, %v1904
        %v1906 = vmul.f32 %v1369, %v1904
        %v1907 = vadd.f32 %v1898, %v1905
        %v1908 = vadd.f32 %v1899, %v1906
        %s1909 = sld [smem:[#allocation15 + $0x282]]
        %s1910 = smul.f32 %s1909, %s1648
        %s1911 = smul.f32 %s1910, %s1628
        %s1912 = ssub.f32 %s1903, %s1911
        %v1913 = vstv %s1910
        %v1914 = vmul.f32 %v1451, %v1913
        %v1915 = vmul.f32 %v1453, %v1913
        %v1916 = vadd.f32 %v1907, %v1914
        %v1917 = vadd.f32 %v1908, %v1915
        %s1918 = sld [smem:[#allocation15 + $0x283]]
        %s1919 = smul.f32 %s1918, %s1691
        %s1920 = smul.f32 %s1919, %s1671
        %s1921 = ssub.f32 %s1912, %s1920
        %v1922 = vstv %s1919
        %v1923 = vmul.f32 %v1452, %v1922
        %v1924 = vmul.f32 %v1454, %v1922
        %v1925 = vadd.f32 %v1916, %v1923
        %v1926 = vadd.f32 %v1917, %v1924
        %v1927 = vstv %s1921
        %v1928 = vadd.f32 %v1925, %v1927
        %v1929 = vadd.f32 %v1926, %v1927
        %v1930 = vmax.f32 %v1928, 0.0
        %v1931 = vmax.f32 %v1929, 0.0
        %s1932 = sld [smem:[#allocation16 + $0x6]]
        %s1933 = sld [smem:[#allocation15 + $0x300]]
        %s1934 = smul.f32 %s1933, %s1562
        %s1935 = smul.f32 %s1934, %s1542
        %s1936 = ssub.f32 %s1932, %s1935
        %v1937 = vstv %s1934
        %v1938 = vmul.f32 %v1366, %v1937
        %v1939 = vmul.f32 %v1368, %v1937
        %s1940 = sld [smem:[#allocation15 + $0x301]]
        %s1941 = smul.f32 %s1940, %s1605
        %s1942 = smul.f32 %s1941, %s1585
        %s1943 = ssub.f32 %s1936, %s1942
        %v1944 = vstv %s1941
        %v1945 = vmul.f32 %v1367, %v1944
        %v1946 = vmul.f32 %v1369, %v1944
        %v1947 = vadd.f32 %v1938, %v1945
        %v1948 = vadd.f32 %v1939, %v1946
        %s1949 = sld [smem:[#allocation15 + $0x302]]
        %s1950 = smul.f32 %s1949, %s1648
        %s1951 = smul.f32 %s1950, %s1628
        %s1952 = ssub.f32 %s1943, %s1951
        %v1953 = vstv %s1950
        %v1954 = vmul.f32 %v1451, %v1953
        %v1955 = vmul.f32 %v1453, %v1953
        %v1956 = vadd.f32 %v1947, %v1954
        %v1957 = vadd.f32 %v1948, %v1955
        %s1958 = sld [smem:[#allocation15 + $0x303]]
        %s1959 = smul.f32 %s1958, %s1691
        %s1960 = smul.f32 %s1959, %s1671
        %s1961 = ssub.f32 %s1952, %s1960
        %v1962 = vstv %s1959
        %v1963 = vmul.f32 %v1452, %v1962
        %v1964 = vmul.f32 %v1454, %v1962
        %v1965 = vadd.f32 %v1956, %v1963
        %v1966 = vadd.f32 %v1957, %v1964
        %v1967 = vstv %s1961
        %v1968 = vadd.f32 %v1965, %v1967
        %v1969 = vadd.f32 %v1966, %v1967
        %v1970 = vmax.f32 %v1968, 0.0
        %v1971 = vmax.f32 %v1969, 0.0
        %s1972 = sld [smem:[#allocation16 + $0x7]]
        %s1973 = sld [smem:[#allocation15 + $0x380]]
        %s1974 = smul.f32 %s1973, %s1562
        %s1975 = smul.f32 %s1974, %s1542
        %s1976 = ssub.f32 %s1972, %s1975
        %v1977 = vstv %s1974
        %v1978 = vmul.f32 %v1366, %v1977
        %v1979 = vmul.f32 %v1368, %v1977
        %s1980 = sld [smem:[#allocation15 + $0x381]]
        %s1981 = smul.f32 %s1980, %s1605
        %s1982 = smul.f32 %s1981, %s1585
        %s1983 = ssub.f32 %s1976, %s1982
        %v1984 = vstv %s1981
        %v1985 = vmul.f32 %v1367, %v1984
        %v1986 = vmul.f32 %v1369, %v1984
        %v1987 = vadd.f32 %v1978, %v1985
        %v1988 = vadd.f32 %v1979, %v1986
        %s1989 = sld [smem:[#allocation15 + $0x382]]
        %s1990 = smul.f32 %s1989, %s1648
        %s1991 = smul.f32 %s1990, %s1628
        %s1992 = ssub.f32 %s1983, %s1991
        %v1993 = vstv %s1990
        %v1994 = vmul.f32 %v1451, %v1993
        %v1995 = vmul.f32 %v1453, %v1993
        %v1996 = vadd.f32 %v1987, %v1994
        %v1997 = vadd.f32 %v1988, %v1995
        %s1998 = sld [smem:[#allocation15 + $0x383]]
        %s1999 = smul.f32 %s1998, %s1691
        %s2000 = smul.f32 %s1999, %s1671
        %s2001 = ssub.f32 %s1992, %s2000
        %v2002 = vstv %s1999
        %v2003 = vmul.f32 %v1452, %v2002
        %v2004 = vmul.f32 %v1454, %v2002
        %v2005 = vadd.f32 %v1996, %v2003
        %v2006 = vadd.f32 %v1997, %v2004
        %v2007 = vstv %s2001
        %v2008 = vadd.f32 %v2005, %v2007
        %v2009 = vadd.f32 %v2006, %v2007
        %v2010 = vmax.f32 %v2008, 0.0
        %v2011 = vmax.f32 %v2009, 0.0
        %s2012 = sld [smem:[#allocation18]]
        %s2013 = smul.f32 %s2012, %s1559
        %v2014 = vstv %s2013
        %v2015 = vmul.f32 %v1730, %v2014
        %v2016 = vmul.f32 %v1731, %v2014
        %s2017 = sld [smem:[#allocation18 + $0x1]]
        %s2018 = smul.f32 %s2017, %s1559
        %v2019 = vstv %s2018
        %v2020 = vmul.f32 %v1770, %v2019
        %v2021 = vmul.f32 %v1771, %v2019
        %v2022 = vadd.f32 %v2015, %v2020
        %v2023 = vadd.f32 %v2016, %v2021
        %s2024 = sld [smem:[#allocation18 + $0x2]]
        %s2025 = smul.f32 %s2024, %s1559
        %v2026 = vstv %s2025
        %v2027 = vmul.f32 %v1810, %v2026
        %v2028 = vmul.f32 %v1811, %v2026
        %v2029 = vadd.f32 %v2022, %v2027
        %v2030 = vadd.f32 %v2023, %v2028
        %s2031 = sld [smem:[#allocation18 + $0x3]]
        %s2032 = smul.f32 %s2031, %s1559
        %v2033 = vstv %s2032
        %v2034 = vmul.f32 %v1850, %v2033
        %v2035 = vmul.f32 %v1851, %v2033
        %v2036 = vadd.f32 %v2029, %v2034
        %v2037 = vadd.f32 %v2030, %v2035
        %s2038 = sld [smem:[#allocation18 + $0x4]]
        %s2039 = smul.f32 %s2038, %s1559
        %v2040 = vstv %s2039
        %v2041 = vmul.f32 %v1890, %v2040
        %v2042 = vmul.f32 %v1891, %v2040
        %v2043 = vadd.f32 %v2036, %v2041
        %v2044 = vadd.f32 %v2037, %v2042
        %s2045 = sld [smem:[#allocation18 + $0x5]]
        %s2046 = smul.f32 %s2045, %s1559
        %v2047 = vstv %s2046
        %v2048 = vmul.f32 %v1930, %v2047
        %v2049 = vmul.f32 %v1931, %v2047
        %v2050 = vadd.f32 %v2043, %v2048
        %v2051 = vadd.f32 %v2044, %v2049
        %s2052 = sld [smem:[#allocation18 + $0x6]]
        %s2053 = smul.f32 %s2052, %s1559
        %v2054 = vstv %s2053
        %v2055 = vmul.f32 %v1970, %v2054
        %v2056 = vmul.f32 %v1971, %v2054
        %v2057 = vadd.f32 %v2050, %v2055
        %v2058 = vadd.f32 %v2051, %v2056
        %s2059 = sld [smem:[#allocation18 + $0x7]]
        %s2060 = smul.f32 %s2059, %s1559
        %v2061 = vstv %s2060
        %v2062 = vmul.f32 %v2010, %v2061
        %v2063 = vmul.f32 %v2011, %v2061
        %v2064 = vadd.f32 %v2057, %v2062
        %v2065 = vadd.f32 %v2058, %v2063
        %v2066 = vadd.f32 %v1366, %v2064
        %v2067 = vadd.f32 %v1368, %v2065
        %s2068 = sld [smem:[#allocation19]]
        %s2069 = smul.f32 %s2068, %s1559
        %v2070 = vstv %s2069
        %v2071 = vadd.f32 %v2066, %v2070
        %v2072 = vadd.f32 %v2067, %v2070
        %s2073 = sld [smem:[#allocation18 + $0x80]]
        %s2074 = smul.f32 %s2073, %s1602
        %v2075 = vstv %s2074
        %v2076 = vmul.f32 %v1730, %v2075
        %v2077 = vmul.f32 %v1731, %v2075
        %s2078 = sld [smem:[#allocation18 + $0x81]]
        %s2079 = smul.f32 %s2078, %s1602
        %v2080 = vstv %s2079
        %v2081 = vmul.f32 %v1770, %v2080
        %v2082 = vmul.f32 %v1771, %v2080
        %v2083 = vadd.f32 %v2076, %v2081
        %v2084 = vadd.f32 %v2077, %v2082
        %s2085 = sld [smem:[#allocation18 + $0x82]]
        %s2086 = smul.f32 %s2085, %s1602
        %v2087 = vstv %s2086
        %v2088 = vmul.f32 %v1810, %v2087
        %v2089 = vmul.f32 %v1811, %v2087
        %v2090 = vadd.f32 %v2083, %v2088
        %v2091 = vadd.f32 %v2084, %v2089
        %s2092 = sld [smem:[#allocation18 + $0x83]]
        %s2093 = smul.f32 %s2092, %s1602
        %v2094 = vstv %s2093
        %v2095 = vmul.f32 %v1850, %v2094
        %v2096 = vmul.f32 %v1851, %v2094
        %v2097 = vadd.f32 %v2090, %v2095
        %v2098 = vadd.f32 %v2091, %v2096
        %s2099 = sld [smem:[#allocation18 + $0x84]]
        %s2100 = smul.f32 %s2099, %s1602
        %v2101 = vstv %s2100
        %v2102 = vmul.f32 %v1890, %v2101
        %v2103 = vmul.f32 %v1891, %v2101
        %v2104 = vadd.f32 %v2097, %v2102
        %v2105 = vadd.f32 %v2098, %v2103
        %s2106 = sld [smem:[#allocation18 + $0x85]]
        %s2107 = smul.f32 %s2106, %s1602
        %v2108 = vstv %s2107
        %v2109 = vmul.f32 %v1930, %v2108
        %v2110 = vmul.f32 %v1931, %v2108
        %v2111 = vadd.f32 %v2104, %v2109
        %v2112 = vadd.f32 %v2105, %v2110
        %s2113 = sld [smem:[#allocation18 + $0x86]]
        %s2114 = smul.f32 %s2113, %s1602
        %v2115 = vstv %s2114
        %v2116 = vmul.f32 %v1970, %v2115
        %v2117 = vmul.f32 %v1971, %v2115
        %v2118 = vadd.f32 %v2111, %v2116
        %v2119 = vadd.f32 %v2112, %v2117
        %s2120 = sld [smem:[#allocation18 + $0x87]]
        %s2121 = smul.f32 %s2120, %s1602
        %v2122 = vstv %s2121
        %v2123 = vmul.f32 %v2010, %v2122
        %v2124 = vmul.f32 %v2011, %v2122
        %v2125 = vadd.f32 %v2118, %v2123
        %v2126 = vadd.f32 %v2119, %v2124
        %v2127 = vadd.f32 %v1367, %v2125
        %v2128 = vadd.f32 %v1369, %v2126
        %s2129 = sld [smem:[#allocation19 + $0x1]]
        %s2130 = smul.f32 %s2129, %s1602
        %v2131 = vstv %s2130
        %v2132 = vadd.f32 %v2127, %v2131
        %v2133 = vadd.f32 %v2128, %v2131
        %s2134 = sld [smem:[#allocation18 + $0x100]]
        %s2135 = smul.f32 %s2134, %s1645
        %v2136 = vstv %s2135
        %v2137 = vmul.f32 %v1730, %v2136
        %v2138 = vmul.f32 %v1731, %v2136
        %s2139 = sld [smem:[#allocation18 + $0x101]]
        %s2140 = smul.f32 %s2139, %s1645
        %v2141 = vstv %s2140
        %v2142 = vmul.f32 %v1770, %v2141
        %v2143 = vmul.f32 %v1771, %v2141
        %v2144 = vadd.f32 %v2137, %v2142
        %v2145 = vadd.f32 %v2138, %v2143
        %s2146 = sld [smem:[#allocation18 + $0x102]]
        %s2147 = smul.f32 %s2146, %s1645
        %v2148 = vstv %s2147
        %v2149 = vmul.f32 %v1810, %v2148
        %v2150 = vmul.f32 %v1811, %v2148
        %v2151 = vadd.f32 %v2144, %v2149
        %v2152 = vadd.f32 %v2145, %v2150
        %s2153 = sld [smem:[#allocation18 + $0x103]]
        %s2154 = smul.f32 %s2153, %s1645
        %v2155 = vstv %s2154
        %v2156 = vmul.f32 %v1850, %v2155
        %v2157 = vmul.f32 %v1851, %v2155
        %v2158 = vadd.f32 %v2151, %v2156
        %v2159 = vadd.f32 %v2152, %v2157
        %s2160 = sld [smem:[#allocation18 + $0x104]]
        %s2161 = smul.f32 %s2160, %s1645
        %v2162 = vstv %s2161
        %v2163 = vmul.f32 %v1890, %v2162
        %v2164 = vmul.f32 %v1891, %v2162
        %v2165 = vadd.f32 %v2158, %v2163
        %v2166 = vadd.f32 %v2159, %v2164
        %s2167 = sld [smem:[#allocation18 + $0x105]]
        %s2168 = smul.f32 %s2167, %s1645
        %v2169 = vstv %s2168
        %v2170 = vmul.f32 %v1930, %v2169
        %v2171 = vmul.f32 %v1931, %v2169
        %v2172 = vadd.f32 %v2165, %v2170
        %v2173 = vadd.f32 %v2166, %v2171
        %s2174 = sld [smem:[#allocation18 + $0x106]]
        %s2175 = smul.f32 %s2174, %s1645
        %v2176 = vstv %s2175
        %v2177 = vmul.f32 %v1970, %v2176
        %v2178 = vmul.f32 %v1971, %v2176
        %v2179 = vadd.f32 %v2172, %v2177
        %v2180 = vadd.f32 %v2173, %v2178
        %s2181 = sld [smem:[#allocation18 + $0x107]]
        %s2182 = smul.f32 %s2181, %s1645
        %v2183 = vstv %s2182
        %v2184 = vmul.f32 %v2010, %v2183
        %v2185 = vmul.f32 %v2011, %v2183
        %v2186 = vadd.f32 %v2179, %v2184
        %v2187 = vadd.f32 %v2180, %v2185
        %v2188 = vadd.f32 %v1451, %v2186
        %v2189 = vadd.f32 %v1453, %v2187
        %s2190 = sld [smem:[#allocation19 + $0x2]]
        %s2191 = smul.f32 %s2190, %s1645
        %v2192 = vstv %s2191
        %v2193 = vadd.f32 %v2188, %v2192
        %v2194 = vadd.f32 %v2189, %v2192
        %s2195 = sld [smem:[#allocation18 + $0x180]]
        %s2196 = smul.f32 %s2195, %s1688
        %v2197 = vstv %s2196
        %v2198 = vmul.f32 %v1730, %v2197
        %v2199 = vmul.f32 %v1731, %v2197
        %s2200 = sld [smem:[#allocation18 + $0x181]]
        %s2201 = smul.f32 %s2200, %s1688
        %v2202 = vstv %s2201
        %v2203 = vmul.f32 %v1770, %v2202
        %v2204 = vmul.f32 %v1771, %v2202
        %v2205 = vadd.f32 %v2198, %v2203
        %v2206 = vadd.f32 %v2199, %v2204
        %s2207 = sld [smem:[#allocation18 + $0x182]]
        %s2208 = smul.f32 %s2207, %s1688
        %v2209 = vstv %s2208
        %v2210 = vmul.f32 %v1810, %v2209
        %v2211 = vmul.f32 %v1811, %v2209
        %v2212 = vadd.f32 %v2205, %v2210
        %v2213 = vadd.f32 %v2206, %v2211
        %s2214 = sld [smem:[#allocation18 + $0x183]]
        %s2215 = smul.f32 %s2214, %s1688
        %v2216 = vstv %s2215
        %v2217 = vmul.f32 %v1850, %v2216
        %v2218 = vmul.f32 %v1851, %v2216
        %v2219 = vadd.f32 %v2212, %v2217
        %v2220 = vadd.f32 %v2213, %v2218
        %s2221 = sld [smem:[#allocation18 + $0x184]]
        %s2222 = smul.f32 %s2221, %s1688
        %v2223 = vstv %s2222
        %v2224 = vmul.f32 %v1890, %v2223
        %v2225 = vmul.f32 %v1891, %v2223
        %v2226 = vadd.f32 %v2219, %v2224
        %v2227 = vadd.f32 %v2220, %v2225
        %s2228 = sld [smem:[#allocation18 + $0x185]]
        %s2229 = smul.f32 %s2228, %s1688
        %v2230 = vstv %s2229
        %v2231 = vmul.f32 %v1930, %v2230
        %v2232 = vmul.f32 %v1931, %v2230
        %v2233 = vadd.f32 %v2226, %v2231
        %v2234 = vadd.f32 %v2227, %v2232
        %s2235 = sld [smem:[#allocation18 + $0x186]]
        %s2236 = smul.f32 %s2235, %s1688
        %v2237 = vstv %s2236
        %v2238 = vmul.f32 %v1970, %v2237
        %v2239 = vmul.f32 %v1971, %v2237
        %v2240 = vadd.f32 %v2233, %v2238
        %v2241 = vadd.f32 %v2234, %v2239
        %s2242 = sld [smem:[#allocation18 + $0x187]]
        %s2243 = smul.f32 %s2242, %s1688
        %v2244 = vstv %s2243
        %v2245 = vmul.f32 %v2010, %v2244
        %v2246 = vmul.f32 %v2011, %v2244
        %v2247 = vadd.f32 %v2240, %v2245
        %v2248 = vadd.f32 %v2241, %v2246
        %v2249 = vadd.f32 %v1452, %v2247
        %v2250 = vadd.f32 %v1454, %v2248
        %s2251 = sld [smem:[#allocation19 + $0x3]]
        %s2252 = smul.f32 %s2251, %s1688
        %v2253 = vstv %s2252
        %v2254 = vadd.f32 %v2249, %v2253
        %v2255 = vadd.f32 %v2250, %v2253
        %2256 = vmatprep.subr.mxu0 0.0
        %2257 = vmatpush1.msra.mxu0 0.0
        %2258 = vmatprep.subr.mxu0 0.0
        %2259 = vmatpush1.msra.mxu0 0.0
        %2260 = vmatprep.subr.mxu0 0.0
        %2261 = vmatpush1.msra.mxu0 0.0
        %2262 = vmatprep.subr.mxu0 0.0
        %2263 = vmatpush1.msra.mxu0 0.0
        %2264 = vmatprep.subr.mxu0 0.0
        %2265 = vmatpush1.msra.mxu0 0.0
        %2266 = vmatprep.subr.mxu0 0.0
        %2267 = vmatpush1.msra.mxu0 0.0
        %2268 = vmatprep.subr.mxu0 0.0
        %2269 = vmatpush1.msra.mxu0 0.0
        %2270 = vmatprep.subr.mxu0 0.0
        %2271 = vmatpush1.msra.mxu0 0.0
        %2272 = vmatprep.subr.mxu0 0.0
        %2273 = vmatpush1.msra.mxu0 0.0
        %2274 = vmatprep.subr.mxu0 0.0
        %2275 = vmatpush1.msra.mxu0 0.0
        %2276 = vmatprep.subr.mxu0 0.0
        %2277 = vmatpush1.msra.mxu0 0.0
        %2278 = vmatprep.subr.mxu0 0.0
        %2279 = vmatpush1.msra.mxu0 0.0
        %2280 = vmatprep.subr.mxu0 0.0
        %2281 = vmatpush1.msra.mxu0 0.0
        %2282 = vmatprep.subr.mxu0 0.0
        %2283 = vmatpush1.msra.mxu0 0.0
        %2284 = vmatprep.subr.mxu0 %v2133
        %2285 = vmatpush1.msra.mxu0 %v2072
        %2286 = vmatprep.subr.mxu0 %v2132
        %2287 = vmatpush1.msra.mxu0 %v2071
        %2288 = vmatprep.subr.mxu0 0.0
        %2289 = vmatpush2.msra.mxu0 0.0
        %2290 = vmatprep.subr.mxu0 0.0
        %2291 = vmatpush2.msra.mxu0 0.0
        %2292 = vmatprep.subr.mxu0 0.0
        %2293 = vmatpush2.msra.mxu0 0.0
        %2294 = vmatprep.subr.mxu0 0.0
        %2295 = vmatpush2.msra.mxu0 0.0
        %2296 = vmatprep.subr.mxu0 0.0
        %2297 = vmatpush2.msra.mxu0 0.0
        %2298 = vmatprep.subr.mxu0 0.0
        %2299 = vmatpush2.msra.mxu0 0.0
        %2300 = vmatprep.subr.mxu0 0.0
        %2301 = vmatpush2.msra.mxu0 0.0
        %2302 = vmatprep.subr.mxu0 0.0
        %2303 = vmatpush2.msra.mxu0 0.0
        %2304 = vmatprep.subr.mxu0 0.0
        %2305 = vmatpush2.msra.mxu0 0.0
        %2306 = vmatprep.subr.mxu0 0.0
        %2307 = vmatpush2.msra.mxu0 0.0
        %2308 = vmatprep.subr.mxu0 0.0
        %2309 = vmatpush2.msra.mxu0 0.0
        %2310 = vmatprep.subr.mxu0 0.0
        %2311 = vmatpush2.msra.mxu0 0.0
        %2312 = vmatprep.subr.mxu0 0.0
        %2313 = vmatpush2.msra.mxu0 0.0
        %2314 = vmatprep.subr.mxu0 0.0
        %2315 = vmatpush2.msra.mxu0 0.0
        %2316 = vmatprep.subr.mxu0 0.0
        %2317 = vmatpush2.msra.mxu0 0.0
        %2318 = vmatprep.subr.mxu0 0.0
        %2319 = vmatpush2.msra.mxu0 0.0
        %2320 = vmatprep.mubr.f32.mxu0 0.0
        %2321 = vmatmul.mubr.f32.gmra.mxu0 %v952
        %v2322 = vpop.f32.mrf.mxu0
        %v2323 = vadd.f32 0.0, %v2322
        %v2324 = vpop.f32.mrf.mxu0
        %v2325 = vadd.f32 0.0, %v2324
        %2326 = vmatprep.mubr.f32.mxu0 0.0
        %2327 = vmatmul.mubr.f32.gmra.mxu0 %v955
        %v2328 = vpop.f32.mrf.mxu0
        %v2329 = vadd.f32 0.0, %v2328
        %v2330 = vpop.f32.mrf.mxu0
        %v2331 = vadd.f32 0.0, %v2330
        %2332 = vdwg.mxu0
        %2333 = vmatprep.subr.mxu0 0.0
        %2334 = vmatpush1.msra.mxu0 0.0
        %2335 = vmatprep.subr.mxu0 0.0
        %2336 = vmatpush1.msra.mxu0 0.0
        %2337 = vmatprep.subr.mxu0 0.0
        %2338 = vmatpush1.msra.mxu0 0.0
        %2339 = vmatprep.subr.mxu0 0.0
        %2340 = vmatpush1.msra.mxu0 0.0
        %2341 = vmatprep.subr.mxu0 0.0
        %2342 = vmatpush1.msra.mxu0 0.0
        %2343 = vmatprep.subr.mxu0 0.0
        %2344 = vmatpush1.msra.mxu0 0.0
        %2345 = vmatprep.subr.mxu0 0.0
        %2346 = vmatpush1.msra.mxu0 0.0
        %2347 = vmatprep.subr.mxu0 0.0
        %2348 = vmatpush1.msra.mxu0 0.0
        %2349 = vmatprep.subr.mxu0 0.0
        %2350 = vmatpush1.msra.mxu0 0.0
        %2351 = vmatprep.subr.mxu0 0.0
        %2352 = vmatpush1.msra.mxu0 0.0
        %2353 = vmatprep.subr.mxu0 0.0
        %2354 = vmatpush1.msra.mxu0 0.0
        %2355 = vmatprep.subr.mxu0 0.0
        %2356 = vmatpush1.msra.mxu0 0.0
        %2357 = vmatprep.subr.mxu0 0.0
        %2358 = vmatpush1.msra.mxu0 0.0
        %2359 = vmatprep.subr.mxu0 0.0
        %2360 = vmatpush1.msra.mxu0 0.0
        %2361 = vmatprep.subr.mxu0 %v2255
        %2362 = vmatpush1.msra.mxu0 %v2194
        %2363 = vmatprep.subr.mxu0 %v2254
        %2364 = vmatpush1.msra.mxu0 %v2193
        %2365 = vmatprep.subr.mxu0 0.0
        %2366 = vmatpush2.msra.mxu0 0.0
        %2367 = vmatprep.subr.mxu0 0.0
        %2368 = vmatpush2.msra.mxu0 0.0
        %2369 = vmatprep.subr.mxu0 0.0
        %2370 = vmatpush2.msra.mxu0 0.0
        %2371 = vmatprep.subr.mxu0 0.0
        %2372 = vmatpush2.msra.mxu0 0.0
        %2373 = vmatprep.subr.mxu0 0.0
        %2374 = vmatpush2.msra.mxu0 0.0
        %2375 = vmatprep.subr.mxu0 0.0
        %2376 = vmatpush2.msra.mxu0 0.0
        %2377 = vmatprep.subr.mxu0 0.0
        %2378 = vmatpush2.msra.mxu0 0.0
        %2379 = vmatprep.subr.mxu0 0.0
        %2380 = vmatpush2.msra.mxu0 0.0
        %2381 = vmatprep.subr.mxu0 0.0
        %2382 = vmatpush2.msra.mxu0 0.0
        %2383 = vmatprep.subr.mxu0 0.0
        %2384 = vmatpush2.msra.mxu0 0.0
        %2385 = vmatprep.subr.mxu0 0.0
        %2386 = vmatpush2.msra.mxu0 0.0
        %2387 = vmatprep.subr.mxu0 0.0
        %2388 = vmatpush2.msra.mxu0 0.0
        %2389 = vmatprep.subr.mxu0 0.0
        %2390 = vmatpush2.msra.mxu0 0.0
        %2391 = vmatprep.subr.mxu0 0.0
        %2392 = vmatpush2.msra.mxu0 0.0
        %2393 = vmatprep.subr.mxu0 0.0
        %2394 = vmatpush2.msra.mxu0 0.0
        %2395 = vmatprep.subr.mxu0 0.0
        %2396 = vmatpush2.msra.mxu0 0.0
        %2397 = vmatprep.mubr.f32.mxu0 0.0
        %2398 = vmatmul.mubr.f32.gmra.mxu0 %v1035
        %v2399 = vpop.f32.mrf.mxu0
        %v2400 = vadd.f32 0.0, %v2399
        %v2401 = vpop.f32.mrf.mxu0
        %v2402 = vadd.f32 0.0, %v2401
        %2403 = vmatprep.mubr.f32.mxu0 0.0
        %2404 = vmatmul.mubr.f32.gmra.mxu0 %v1038
        %v2405 = vpop.f32.mrf.mxu0
        %v2406 = vadd.f32 0.0, %v2405
        %v2407 = vpop.f32.mrf.mxu0
        %v2408 = vadd.f32 0.0, %v2407
        %2409 = vdwg.mxu0
        %v2410 = vsub.f32 %v2323, %v2400
        %v2411 = vsub.f32 %v2325, %v2402
        %v2412 = vsub.f32 %v2329, %v2406
        %v2413 = vsub.f32 %v2331, %v2408
        %v2414 = vadd.f32 %v2071, %v2193
        %v2415 = vadd.f32 %v2132, %v2254
        %v2416 = vadd.f32 %v2072, %v2194
        %v2417 = vadd.f32 %v2133, %v2255
        %2418 = vmatprep.subr.mxu0 0.0
        %2419 = vmatpush1.msra.mxu0 0.0
        %2420 = vmatprep.subr.mxu0 0.0
        %2421 = vmatpush1.msra.mxu0 0.0
        %2422 = vmatprep.subr.mxu0 0.0
        %2423 = vmatpush1.msra.mxu0 0.0
        %2424 = vmatprep.subr.mxu0 0.0
        %2425 = vmatpush1.msra.mxu0 0.0
        %2426 = vmatprep.subr.mxu0 0.0
        %2427 = vmatpush1.msra.mxu0 0.0
        %2428 = vmatprep.subr.mxu0 0.0
        %2429 = vmatpush1.msra.mxu0 0.0
        %2430 = vmatprep.subr.mxu0 0.0
        %2431 = vmatpush1.msra.mxu0 0.0
        %2432 = vmatprep.subr.mxu0 0.0
        %2433 = vmatpush1.msra.mxu0 0.0
        %2434 = vmatprep.subr.mxu0 0.0
        %2435 = vmatpush1.msra.mxu0 0.0
        %2436 = vmatprep.subr.mxu0 0.0
        %2437 = vmatpush1.msra.mxu0 0.0
        %2438 = vmatprep.subr.mxu0 0.0
        %2439 = vmatpush1.msra.mxu0 0.0
        %2440 = vmatprep.subr.mxu0 0.0
        %2441 = vmatpush1.msra.mxu0 0.0
        %2442 = vmatprep.subr.mxu0 0.0
        %2443 = vmatpush1.msra.mxu0 0.0
        %2444 = vmatprep.subr.mxu0 0.0
        %2445 = vmatpush1.msra.mxu0 0.0
        %2446 = vmatprep.subr.mxu0 %v2417
        %2447 = vmatpush1.msra.mxu0 %v2416
        %2448 = vmatprep.subr.mxu0 %v2415
        %2449 = vmatpush1.msra.mxu0 %v2414
        %2450 = vmatprep.subr.mxu0 0.0
        %2451 = vmatpush2.msra.mxu0 0.0
        %2452 = vmatprep.subr.mxu0 0.0
        %2453 = vmatpush2.msra.mxu0 0.0
        %2454 = vmatprep.subr.mxu0 0.0
        %2455 = vmatpush2.msra.mxu0 0.0
        %2456 = vmatprep.subr.mxu0 0.0
        %2457 = vmatpush2.msra.mxu0 0.0
        %2458 = vmatprep.subr.mxu0 0.0
        %2459 = vmatpush2.msra.mxu0 0.0
        %2460 = vmatprep.subr.mxu0 0.0
        %2461 = vmatpush2.msra.mxu0 0.0
        %2462 = vmatprep.subr.mxu0 0.0
        %2463 = vmatpush2.msra.mxu0 0.0
        %2464 = vmatprep.subr.mxu0 0.0
        %2465 = vmatpush2.msra.mxu0 0.0
        %2466 = vmatprep.subr.mxu0 0.0
        %2467 = vmatpush2.msra.mxu0 0.0
        %2468 = vmatprep.subr.mxu0 0.0
        %2469 = vmatpush2.msra.mxu0 0.0
        %2470 = vmatprep.subr.mxu0 0.0
        %2471 = vmatpush2.msra.mxu0 0.0
        %2472 = vmatprep.subr.mxu0 0.0
        %2473 = vmatpush2.msra.mxu0 0.0
        %2474 = vmatprep.subr.mxu0 0.0
        %2475 = vmatpush2.msra.mxu0 0.0
        %2476 = vmatprep.subr.mxu0 0.0
        %2477 = vmatpush2.msra.mxu0 0.0
        %2478 = vmatprep.subr.mxu0 0.0
        %2479 = vmatpush2.msra.mxu0 0.0
        %2480 = vmatprep.subr.mxu0 0.0
        %2481 = vmatpush2.msra.mxu0 0.0
        %2482 = vmatprep.mubr.f32.mxu0 0.0
        %2483 = vmatmul.mubr.f32.gmra.mxu0 %v1126
        %v2484 = vpop.f32.mrf.mxu0
        %v2485 = vadd.f32 0.0, %v2484
        %v2486 = vpop.f32.mrf.mxu0
        %v2487 = vadd.f32 0.0, %v2486
        %2488 = vmatprep.mubr.f32.mxu0 0.0
        %2489 = vmatmul.mubr.f32.gmra.mxu0 %v1129
        %v2490 = vpop.f32.mrf.mxu0
        %v2491 = vadd.f32 0.0, %v2490
        %v2492 = vpop.f32.mrf.mxu0
        %v2493 = vadd.f32 0.0, %v2492
        %2494 = vdwg.mxu0
        %v2495 = vsub.f32 %v2485, %v2323
        %v2496 = vsub.f32 %v2487, %v2325
        %v2497 = vsub.f32 %v2491, %v2329
        %v2498 = vsub.f32 %v2493, %v2331
        %v2499 = vsub.f32 %v2495, %v2400
        %v2500 = vsub.f32 %v2496, %v2402
        %v2501 = vsub.f32 %v2497, %v2406
        %v2502 = vsub.f32 %v2498, %v2408
        %2503 = vmatprep.subr.mxu0 %v779
        %2504 = vmatpush1.msra.mxu0 %v778
        %2505 = vmatprep.subr.mxu0 %v777
        %2506 = vmatpush1.msra.mxu0 %v776
        %2507 = vmatprep.subr.mxu0 %v775
        %2508 = vmatpush1.msra.mxu0 %v774
        %2509 = vmatprep.subr.mxu0 %v773
        %2510 = vmatpush1.msra.mxu0 %v772
        %2511 = vmatprep.subr.mxu0 %v771
        %2512 = vmatpush1.msra.mxu0 %v770
        %2513 = vmatprep.subr.mxu0 %v769
        %2514 = vmatpush1.msra.mxu0 %v768
        %2515 = vmatprep.subr.mxu0 %v767
        %2516 = vmatpush1.msra.mxu0 %v766
        %2517 = vmatprep.subr.mxu0 %v765
        %2518 = vmatpush1.msra.mxu0 %v764
        %2519 = vmatprep.subr.mxu0 %v763
        %2520 = vmatpush1.msra.mxu0 %v762
        %2521 = vmatprep.subr.mxu0 %v761
        %2522 = vmatpush1.msra.mxu0 %v760
        %2523 = vmatprep.subr.mxu0 %v759
        %2524 = vmatpush1.msra.mxu0 %v758
        %2525 = vmatprep.subr.mxu0 %v757
        %2526 = vmatpush1.msra.mxu0 %v756
        %2527 = vmatprep.subr.mxu0 %v755
        %2528 = vmatpush1.msra.mxu0 %v754
        %2529 = vmatprep.subr.mxu0 %v753
        %2530 = vmatpush1.msra.mxu0 %v752
        %2531 = vmatprep.subr.mxu0 %v751
        %2532 = vmatpush1.msra.mxu0 %v750
        %2533 = vmatprep.subr.mxu0 %v749
        %2534 = vmatpush1.msra.mxu0 %v748
        %2535 = vmatprep.subr.mxu0 %v811
        %2536 = vmatpush2.msra.mxu0 %v810
        %2537 = vmatprep.subr.mxu0 %v809
        %2538 = vmatpush2.msra.mxu0 %v808
        %2539 = vmatprep.subr.mxu0 %v807
        %2540 = vmatpush2.msra.mxu0 %v806
        %2541 = vmatprep.subr.mxu0 %v805
        %2542 = vmatpush2.msra.mxu0 %v804
        %2543 = vmatprep.subr.mxu0 %v803
        %2544 = vmatpush2.msra.mxu0 %v802
        %2545 = vmatprep.subr.mxu0 %v801
        %2546 = vmatpush2.msra.mxu0 %v800
        %2547 = vmatprep.subr.mxu0 %v799
        %2548 = vmatpush2.msra.mxu0 %v798
        %2549 = vmatprep.subr.mxu0 %v797
        %2550 = vmatpush2.msra.mxu0 %v796
        %2551 = vmatprep.subr.mxu0 %v795
        %2552 = vmatpush2.msra.mxu0 %v794
        %2553 = vmatprep.subr.mxu0 %v793
        %2554 = vmatpush2.msra.mxu0 %v792
        %2555 = vmatprep.subr.mxu0 %v791
        %2556 = vmatpush2.msra.mxu0 %v790
        %2557 = vmatprep.subr.mxu0 %v789
        %2558 = vmatpush2.msra.mxu0 %v788
        %2559 = vmatprep.subr.mxu0 %v787
        %2560 = vmatpush2.msra.mxu0 %v786
        %2561 = vmatprep.subr.mxu0 %v785
        %2562 = vmatpush2.msra.mxu0 %v784
        %2563 = vmatprep.subr.mxu0 %v783
        %2564 = vmatpush2.msra.mxu0 %v782
        %2565 = vmatprep.subr.mxu0 %v781
        %2566 = vmatpush2.msra.mxu0 %v780
        %2567 = vmatprep.mubr.f32.mxu0 %v2411
        %2568 = vmatmul.mubr.f32.gmra.mxu0 %v2410
        %v2569 = vpop.f32.mrf.mxu0
        %v2570 = vadd.f32 0.0, %v2569
        %v2571 = vpop.f32.mrf.mxu0
        %v2572 = vadd.f32 0.0, %v2571
        %2573 = vmatprep.mubr.f32.mxu0 %v2413
        %2574 = vmatmul.mubr.f32.gmra.mxu0 %v2412
        %v2575 = vpop.f32.mrf.mxu0
        %v2576 = vadd.f32 0.0, %v2575
        %v2577 = vpop.f32.mrf.mxu0
        %v2578 = vadd.f32 0.0, %v2577
        %2579 = vdwg.mxu0
        %2580 = vmatprep.subr.mxu0 %v844
        %2581 = vmatpush1.msra.mxu0 %v843
        %2582 = vmatprep.subr.mxu0 %v842
        %2583 = vmatpush1.msra.mxu0 %v841
        %2584 = vmatprep.subr.mxu0 %v840
        %2585 = vmatpush1.msra.mxu0 %v839
        %2586 = vmatprep.subr.mxu0 %v838
        %2587 = vmatpush1.msra.mxu0 %v837
        %2588 = vmatprep.subr.mxu0 %v836
        %2589 = vmatpush1.msra.mxu0 %v835
        %2590 = vmatprep.subr.mxu0 %v834
        %2591 = vmatpush1.msra.mxu0 %v833
        %2592 = vmatprep.subr.mxu0 %v832
        %2593 = vmatpush1.msra.mxu0 %v831
        %2594 = vmatprep.subr.mxu0 %v830
        %2595 = vmatpush1.msra.mxu0 %v829
        %2596 = vmatprep.subr.mxu0 %v828
        %2597 = vmatpush1.msra.mxu0 %v827
        %2598 = vmatprep.subr.mxu0 %v826
        %2599 = vmatpush1.msra.mxu0 %v825
        %2600 = vmatprep.subr.mxu0 %v824
        %2601 = vmatpush1.msra.mxu0 %v823
        %2602 = vmatprep.subr.mxu0 %v822
        %2603 = vmatpush1.msra.mxu0 %v821
        %2604 = vmatprep.subr.mxu0 %v820
        %2605 = vmatpush1.msra.mxu0 %v819
        %2606 = vmatprep.subr.mxu0 %v818
        %2607 = vmatpush1.msra.mxu0 %v817
        %2608 = vmatprep.subr.mxu0 %v816
        %2609 = vmatpush1.msra.mxu0 %v815
        %2610 = vmatprep.subr.mxu0 %v814
        %2611 = vmatpush1.msra.mxu0 %v813
        %2612 = vmatprep.subr.mxu0 %v876
        %2613 = vmatpush2.msra.mxu0 %v875
        %2614 = vmatprep.subr.mxu0 %v874
        %2615 = vmatpush2.msra.mxu0 %v873
        %2616 = vmatprep.subr.mxu0 %v872
        %2617 = vmatpush2.msra.mxu0 %v871
        %2618 = vmatprep.subr.mxu0 %v870
        %2619 = vmatpush2.msra.mxu0 %v869
        %2620 = vmatprep.subr.mxu0 %v868
        %2621 = vmatpush2.msra.mxu0 %v867
        %2622 = vmatprep.subr.mxu0 %v866
        %2623 = vmatpush2.msra.mxu0 %v865
        %2624 = vmatprep.subr.mxu0 %v864
        %2625 = vmatpush2.msra.mxu0 %v863
        %2626 = vmatprep.subr.mxu0 %v862
        %2627 = vmatpush2.msra.mxu0 %v861
        %2628 = vmatprep.subr.mxu0 %v860
        %2629 = vmatpush2.msra.mxu0 %v859
        %2630 = vmatprep.subr.mxu0 %v858
        %2631 = vmatpush2.msra.mxu0 %v857
        %2632 = vmatprep.subr.mxu0 %v856
        %2633 = vmatpush2.msra.mxu0 %v855
        %2634 = vmatprep.subr.mxu0 %v854
        %2635 = vmatpush2.msra.mxu0 %v853
        %2636 = vmatprep.subr.mxu0 %v852
        %2637 = vmatpush2.msra.mxu0 %v851
        %2638 = vmatprep.subr.mxu0 %v850
        %2639 = vmatpush2.msra.mxu0 %v849
        %2640 = vmatprep.subr.mxu0 %v848
        %2641 = vmatpush2.msra.mxu0 %v847
        %2642 = vmatprep.subr.mxu0 %v846
        %2643 = vmatpush2.msra.mxu0 %v845
        %2644 = vmatprep.mubr.f32.mxu0 %v2500
        %2645 = vmatmul.mubr.f32.gmra.mxu0 %v2499
        %v2646 = vpop.f32.mrf.mxu0
        %v2647 = vadd.f32 0.0, %v2646
        %v2648 = vpop.f32.mrf.mxu0
        %v2649 = vadd.f32 0.0, %v2648
        %2650 = vmatprep.mubr.f32.mxu0 %v2502
        %2651 = vmatmul.mubr.f32.gmra.mxu0 %v2501
        %v2652 = vpop.f32.mrf.mxu0
        %v2653 = vadd.f32 0.0, %v2652
        %v2654 = vpop.f32.mrf.mxu0
        %v2655 = vadd.f32 0.0, %v2654
        %2656 = vdwg.mxu0
        %v2657 = vsub.f32 %v2570, %v2647
        %v2658 = vsub.f32 %v2572, %v2649
        %v2659 = vsub.f32 %v2576, %v2653
        %v2660 = vsub.f32 %v2578, %v2655
        %v2661 = vadd.f32 %v2410, %v2499
        %v2662 = vadd.f32 %v2411, %v2500
        %v2663 = vadd.f32 %v2412, %v2501
        %v2664 = vadd.f32 %v2413, %v2502
        %2665 = vmatprep.subr.mxu0 %v909
        %2666 = vmatpush1.msra.mxu0 %v908
        %2667 = vmatprep.subr.mxu0 %v907
        %2668 = vmatpush1.msra.mxu0 %v906
        %2669 = vmatprep.subr.mxu0 %v905
        %2670 = vmatpush1.msra.mxu0 %v904
        %2671 = vmatprep.subr.mxu0 %v903
        %2672 = vmatpush1.msra.mxu0 %v902
        %2673 = vmatprep.subr.mxu0 %v901
        %2674 = vmatpush1.msra.mxu0 %v900
        %2675 = vmatprep.subr.mxu0 %v899
        %2676 = vmatpush1.msra.mxu0 %v898
        %2677 = vmatprep.subr.mxu0 %v897
        %2678 = vmatpush1.msra.mxu0 %v896
        %2679 = vmatprep.subr.mxu0 %v895
        %2680 = vmatpush1.msra.mxu0 %v894
        %2681 = vmatprep.subr.mxu0 %v893
        %2682 = vmatpush1.msra.mxu0 %v892
        %2683 = vmatprep.subr.mxu0 %v891
        %2684 = vmatpush1.msra.mxu0 %v890
        %2685 = vmatprep.subr.mxu0 %v889
        %2686 = vmatpush1.msra.mxu0 %v888
        %2687 = vmatprep.subr.mxu0 %v887
        %2688 = vmatpush1.msra.mxu0 %v886
        %2689 = vmatprep.subr.mxu0 %v885
        %2690 = vmatpush1.msra.mxu0 %v884
        %2691 = vmatprep.subr.mxu0 %v883
        %2692 = vmatpush1.msra.mxu0 %v882
        %2693 = vmatprep.subr.mxu0 %v881
        %2694 = vmatpush1.msra.mxu0 %v880
        %2695 = vmatprep.subr.mxu0 %v879
        %2696 = vmatpush1.msra.mxu0 %v878
        %2697 = vmatprep.subr.mxu0 %v941
        %2698 = vmatpush2.msra.mxu0 %v940
        %2699 = vmatprep.subr.mxu0 %v939
        %2700 = vmatpush2.msra.mxu0 %v938
        %2701 = vmatprep.subr.mxu0 %v937
        %2702 = vmatpush2.msra.mxu0 %v936
        %2703 = vmatprep.subr.mxu0 %v935
        %2704 = vmatpush2.msra.mxu0 %v934
        %2705 = vmatprep.subr.mxu0 %v933
        %2706 = vmatpush2.msra.mxu0 %v932
        %2707 = vmatprep.subr.mxu0 %v931
        %2708 = vmatpush2.msra.mxu0 %v930
        %2709 = vmatprep.subr.mxu0 %v929
        %2710 = vmatpush2.msra.mxu0 %v928
        %2711 = vmatprep.subr.mxu0 %v927
        %2712 = vmatpush2.msra.mxu0 %v926
        %2713 = vmatprep.subr.mxu0 %v925
        %2714 = vmatpush2.msra.mxu0 %v924
        %2715 = vmatprep.subr.mxu0 %v923
        %2716 = vmatpush2.msra.mxu0 %v922
        %2717 = vmatprep.subr.mxu0 %v921
        %2718 = vmatpush2.msra.mxu0 %v920
        %2719 = vmatprep.subr.mxu0 %v919
        %2720 = vmatpush2.msra.mxu0 %v918
        %2721 = vmatprep.subr.mxu0 %v917
        %2722 = vmatpush2.msra.mxu0 %v916
        %2723 = vmatprep.subr.mxu0 %v915
        %2724 = vmatpush2.msra.mxu0 %v914
        %2725 = vmatprep.subr.mxu0 %v913
        %2726 = vmatpush2.msra.mxu0 %v912
        %2727 = vmatprep.subr.mxu0 %v911
        %2728 = vmatpush2.msra.mxu0 %v910
        %2729 = vmatprep.mubr.f32.mxu0 %v2662
        %2730 = vmatmul.mubr.f32.gmra.mxu0 %v2661
        %v2731 = vpop.f32.mrf.mxu0
        %v2732 = vadd.f32 0.0, %v2731
        %v2733 = vpop.f32.mrf.mxu0
        %v2734 = vadd.f32 0.0, %v2733
        %2735 = vmatprep.mubr.f32.mxu0 %v2664
        %2736 = vmatmul.mubr.f32.gmra.mxu0 %v2663
        %v2737 = vpop.f32.mrf.mxu0
        %v2738 = vadd.f32 0.0, %v2737
        %v2739 = vpop.f32.mrf.mxu0
        %v2740 = vadd.f32 0.0, %v2739
        %2741 = vdwg.mxu0
        %v2742 = vsub.f32 %v2732, %v2570
        %v2743 = vsub.f32 %v2734, %v2572
        %v2744 = vsub.f32 %v2738, %v2576
        %v2745 = vsub.f32 %v2740, %v2578
        %v2746 = vsub.f32 %v2742, %v2647
        %v2747 = vsub.f32 %v2743, %v2649
        %v2748 = vsub.f32 %v2744, %v2653
        %v2749 = vsub.f32 %v2745, %v2655
        %v2750 = vld [vmem:[%s4] sm:$0x3]
        %s2751 = sld [smem:[#allocation2]]
        %v2752 = vstv %s2751
        %v2753 = vmul.f32 %v2750, %v2752
        %v2754 = vld [vmem:[%s629] sm:$0xff]
        %v2755 = vld [vmem:[%s629 + $0x8] sm:$0xff]
        %v2756 = vld [vmem:[%s629 + $0x10] sm:$0xff]
        %v2757 = vld [vmem:[%s629 + $0x18] sm:$0xff]
        %v2758 = vsub.f32 %v2657, %v2754
        %v2759 = vsub.f32 %v2658, %v2755
        %v2760 = vsub.f32 %v2659, %v2756
        %v2761 = vsub.f32 %v2660, %v2757
        %v2763 = vlaneseq
        %v2764 = vshrl.u32 %v2763, 7
        %v2765 = vsub.s32 0, %v2764
        %v2766 = vrot.slane %v2753, %v2765
        %v2767 = vlaneseq
        %v2768 = vshrl.u32 %v2767, 7
        %v2769 = vsub.s32 1, %v2768
        %v2770 = vrot.slane %v2753, %v2769
        %v2773 = vmul.f32 %v2758, %v2766
        %v2774 = vmul.f32 %v2759, %v2770
        %v2775 = vmul.f32 %v2760, %v2766
        %v2776 = vmul.f32 %v2761, %v2770
        %v2777 = vsub.f32 %v2657, %v2773
        %v2778 = vsub.f32 %v2658, %v2774
        %v2779 = vsub.f32 %v2659, %v2775
        %v2780 = vsub.f32 %v2660, %v2776
        %v2781 = vld [vmem:[%s638] sm:$0xff]
        %v2782 = vld [vmem:[%s638 + $0x8] sm:$0xff]
        %v2783 = vld [vmem:[%s638 + $0x10] sm:$0xff]
        %v2784 = vld [vmem:[%s638 + $0x18] sm:$0xff]
        %v2785 = vsub.f32 %v2746, %v2781
        %v2786 = vsub.f32 %v2747, %v2782
        %v2787 = vsub.f32 %v2748, %v2783
        %v2788 = vsub.f32 %v2749, %v2784
        %v2789 = vmul.f32 %v2785, %v2766
        %v2790 = vmul.f32 %v2786, %v2770
        %v2791 = vmul.f32 %v2787, %v2766
        %v2792 = vmul.f32 %v2788, %v2770
        %v2793 = vsub.f32 %v2746, %v2789
        %v2794 = vsub.f32 %v2747, %v2790
        %v2795 = vsub.f32 %v2748, %v2791
        %v2796 = vsub.f32 %v2749, %v2792
        %2797 = vst [vmem:[%s718] sm:$0xff] %v2777
        %2798 = vst [vmem:[%s718 + $0x8] sm:$0xff] %v2778
        %2799 = vst [vmem:[%s718 + $0x10] sm:$0xff] %v2779
        %2800 = vst [vmem:[%s718 + $0x18] sm:$0xff] %v2780
        %2801 = vst [vmem:[%s725] sm:$0xff] %v2793
        %2802 = vst [vmem:[%s725 + $0x8] sm:$0xff] %v2794
        %2803 = vst [vmem:[%s725 + $0x10] sm:$0xff] %v2795
        %2804 = vst [vmem:[%s725 + $0x18] sm:$0xff] %v2796
        %2805 = vmatprep.subr.mxu0 0.0
        %2806 = vmatpush1.msra.mxu0 0.0
        %2807 = vmatprep.subr.mxu0 0.0
        %2808 = vmatpush1.msra.mxu0 0.0
        %2809 = vmatprep.subr.mxu0 0.0
        %2810 = vmatpush1.msra.mxu0 0.0
        %2811 = vmatprep.subr.mxu0 0.0
        %2812 = vmatpush1.msra.mxu0 0.0
        %2813 = vmatprep.subr.mxu0 0.0
        %2814 = vmatpush1.msra.mxu0 0.0
        %2815 = vmatprep.subr.mxu0 0.0
        %2816 = vmatpush1.msra.mxu0 0.0
        %2817 = vmatprep.subr.mxu0 0.0
        %2818 = vmatpush1.msra.mxu0 0.0
        %2819 = vmatprep.subr.mxu0 0.0
        %2820 = vmatpush1.msra.mxu0 0.0
        %2821 = vmatprep.subr.mxu0 0.0
        %2822 = vmatpush1.msra.mxu0 0.0
        %2823 = vmatprep.subr.mxu0 0.0
        %2824 = vmatpush1.msra.mxu0 0.0
        %2825 = vmatprep.subr.mxu0 0.0
        %2826 = vmatpush1.msra.mxu0 0.0
        %2827 = vmatprep.subr.mxu0 0.0
        %2828 = vmatpush1.msra.mxu0 0.0
        %2829 = vmatprep.subr.mxu0 0.0
        %2830 = vmatpush1.msra.mxu0 0.0
        %2831 = vmatprep.subr.mxu0 0.0
        %2832 = vmatpush1.msra.mxu0 0.0
        %2833 = vmatprep.subr.mxu0 %v2780
        %2834 = vmatpush1.msra.mxu0 %v2779
        %2835 = vmatprep.subr.mxu0 %v2778
        %2836 = vmatpush1.msra.mxu0 %v2777
        %2837 = vmatprep.subr.mxu0 0.0
        %2838 = vmatpush2.msra.mxu0 0.0
        %2839 = vmatprep.subr.mxu0 0.0
        %2840 = vmatpush2.msra.mxu0 0.0
        %2841 = vmatprep.subr.mxu0 0.0
        %2842 = vmatpush2.msra.mxu0 0.0
        %2843 = vmatprep.subr.mxu0 0.0
        %2844 = vmatpush2.msra.mxu0 0.0
        %2845 = vmatprep.subr.mxu0 0.0
        %2846 = vmatpush2.msra.mxu0 0.0
        %2847 = vmatprep.subr.mxu0 0.0
        %2848 = vmatpush2.msra.mxu0 0.0
        %2849 = vmatprep.subr.mxu0 0.0
        %2850 = vmatpush2.msra.mxu0 0.0
        %2851 = vmatprep.subr.mxu0 0.0
        %2852 = vmatpush2.msra.mxu0 0.0
        %2853 = vmatprep.subr.mxu0 0.0
        %2854 = vmatpush2.msra.mxu0 0.0
        %2855 = vmatprep.subr.mxu0 0.0
        %2856 = vmatpush2.msra.mxu0 0.0
        %2857 = vmatprep.subr.mxu0 0.0
        %2858 = vmatpush2.msra.mxu0 0.0
        %2859 = vmatprep.subr.mxu0 0.0
        %2860 = vmatpush2.msra.mxu0 0.0
        %2861 = vmatprep.subr.mxu0 0.0
        %2862 = vmatpush2.msra.mxu0 0.0
        %2863 = vmatprep.subr.mxu0 0.0
        %2864 = vmatpush2.msra.mxu0 0.0
        %2865 = vmatprep.subr.mxu0 0.0
        %2866 = vmatpush2.msra.mxu0 0.0
        %2867 = vmatprep.subr.mxu0 0.0
        %2868 = vmatpush2.msra.mxu0 0.0
        %2869 = vmatprep.mubr.f32.mxu0 0.0
        %2870 = vmatmul.mubr.f32.gmra.mxu0 %v952
        %v2871 = vpop.f32.mrf.mxu0
        %v2872 = vadd.f32 0.0, %v2871
        %v2873 = vpop.f32.mrf.mxu0
        %v2874 = vadd.f32 0.0, %v2873
        %2875 = vmatprep.mubr.f32.mxu0 0.0
        %2876 = vmatmul.mubr.f32.gmra.mxu0 %v955
        %v2877 = vpop.f32.mrf.mxu0
        %v2878 = vadd.f32 0.0, %v2877
        %v2879 = vpop.f32.mrf.mxu0
        %v2880 = vadd.f32 0.0, %v2879
        %2881 = vdwg.mxu0
        %2882 = vmatprep.subr.mxu0 0.0
        %2883 = vmatpush1.msra.mxu0 0.0
        %2884 = vmatprep.subr.mxu0 0.0
        %2885 = vmatpush1.msra.mxu0 0.0
        %2886 = vmatprep.subr.mxu0 0.0
        %2887 = vmatpush1.msra.mxu0 0.0
        %2888 = vmatprep.subr.mxu0 0.0
        %2889 = vmatpush1.msra.mxu0 0.0
        %2890 = vmatprep.subr.mxu0 0.0
        %2891 = vmatpush1.msra.mxu0 0.0
        %2892 = vmatprep.subr.mxu0 0.0
        %2893 = vmatpush1.msra.mxu0 0.0
        %2894 = vmatprep.subr.mxu0 0.0
        %2895 = vmatpush1.msra.mxu0 0.0
        %2896 = vmatprep.subr.mxu0 0.0
        %2897 = vmatpush1.msra.mxu0 0.0
        %2898 = vmatprep.subr.mxu0 0.0
        %2899 = vmatpush1.msra.mxu0 0.0
        %2900 = vmatprep.subr.mxu0 0.0
        %2901 = vmatpush1.msra.mxu0 0.0
        %2902 = vmatprep.subr.mxu0 0.0
        %2903 = vmatpush1.msra.mxu0 0.0
        %2904 = vmatprep.subr.mxu0 0.0
        %2905 = vmatpush1.msra.mxu0 0.0
        %2906 = vmatprep.subr.mxu0 0.0
        %2907 = vmatpush1.msra.mxu0 0.0
        %2908 = vmatprep.subr.mxu0 0.0
        %2909 = vmatpush1.msra.mxu0 0.0
        %2910 = vmatprep.subr.mxu0 %v2796
        %2911 = vmatpush1.msra.mxu0 %v2795
        %2912 = vmatprep.subr.mxu0 %v2794
        %2913 = vmatpush1.msra.mxu0 %v2793
        %2914 = vmatprep.subr.mxu0 0.0
        %2915 = vmatpush2.msra.mxu0 0.0
        %2916 = vmatprep.subr.mxu0 0.0
        %2917 = vmatpush2.msra.mxu0 0.0
        %2918 = vmatprep.subr.mxu0 0.0
        %2919 = vmatpush2.msra.mxu0 0.0
        %2920 = vmatprep.subr.mxu0 0.0
        %2921 = vmatpush2.msra.mxu0 0.0
        %2922 = vmatprep.subr.mxu0 0.0
        %2923 = vmatpush2.msra.mxu0 0.0
        %2924 = vmatprep.subr.mxu0 0.0
        %2925 = vmatpush2.msra.mxu0 0.0
        %2926 = vmatprep.subr.mxu0 0.0
        %2927 = vmatpush2.msra.mxu0 0.0
        %2928 = vmatprep.subr.mxu0 0.0
        %2929 = vmatpush2.msra.mxu0 0.0
        %2930 = vmatprep.subr.mxu0 0.0
        %2931 = vmatpush2.msra.mxu0 0.0
        %2932 = vmatprep.subr.mxu0 0.0
        %2933 = vmatpush2.msra.mxu0 0.0
        %2934 = vmatprep.subr.mxu0 0.0
        %2935 = vmatpush2.msra.mxu0 0.0
        %2936 = vmatprep.subr.mxu0 0.0
        %2937 = vmatpush2.msra.mxu0 0.0
        %2938 = vmatprep.subr.mxu0 0.0
        %2939 = vmatpush2.msra.mxu0 0.0
        %2940 = vmatprep.subr.mxu0 0.0
        %2941 = vmatpush2.msra.mxu0 0.0
        %2942 = vmatprep.subr.mxu0 0.0
        %2943 = vmatpush2.msra.mxu0 0.0
        %2944 = vmatprep.subr.mxu0 0.0
        %2945 = vmatpush2.msra.mxu0 0.0
        %2946 = vmatprep.mubr.f32.mxu0 0.0
        %2947 = vmatmul.mubr.f32.gmra.mxu0 %v1035
        %v2948 = vpop.f32.mrf.mxu0
        %v2949 = vadd.f32 0.0, %v2948
        %v2950 = vpop.f32.mrf.mxu0
        %v2951 = vadd.f32 0.0, %v2950
        %2952 = vmatprep.mubr.f32.mxu0 0.0
        %2953 = vmatmul.mubr.f32.gmra.mxu0 %v1038
        %v2954 = vpop.f32.mrf.mxu0
        %v2955 = vadd.f32 0.0, %v2954
        %v2956 = vpop.f32.mrf.mxu0
        %v2957 = vadd.f32 0.0, %v2956
        %2958 = vdwg.mxu0
        %v2959 = vadd.f32 %v2872, %v2949
        %v2960 = vadd.f32 %v2874, %v2951
        %v2961 = vadd.f32 %v2878, %v2955
        %v2962 = vadd.f32 %v2880, %v2957
        %v2963 = vsub.f32 %v2793, %v2777
        %v2964 = vsub.f32 %v2794, %v2778
        %v2965 = vsub.f32 %v2795, %v2779
        %v2966 = vsub.f32 %v2796, %v2780
        %2967 = vmatprep.subr.mxu0 0.0
        %2968 = vmatpush1.msra.mxu0 0.0
        %2969 = vmatprep.subr.mxu0 0.0
        %2970 = vmatpush1.msra.mxu0 0.0
        %2971 = vmatprep.subr.mxu0 0.0
        %2972 = vmatpush1.msra.mxu0 0.0
        %2973 = vmatprep.subr.mxu0 0.0
        %2974 = vmatpush1.msra.mxu0 0.0
        %2975 = vmatprep.subr.mxu0 0.0
        %2976 = vmatpush1.msra.mxu0 0.0
        %2977 = vmatprep.subr.mxu0 0.0
        %2978 = vmatpush1.msra.mxu0 0.0
        %2979 = vmatprep.subr.mxu0 0.0
        %2980 = vmatpush1.msra.mxu0 0.0
        %2981 = vmatprep.subr.mxu0 0.0
        %2982 = vmatpush1.msra.mxu0 0.0
        %2983 = vmatprep.subr.mxu0 0.0
        %2984 = vmatpush1.msra.mxu0 0.0
        %2985 = vmatprep.subr.mxu0 0.0
        %2986 = vmatpush1.msra.mxu0 0.0
        %2987 = vmatprep.subr.mxu0 0.0
        %2988 = vmatpush1.msra.mxu0 0.0
        %2989 = vmatprep.subr.mxu0 0.0
        %2990 = vmatpush1.msra.mxu0 0.0
        %2991 = vmatprep.subr.mxu0 0.0
        %2992 = vmatpush1.msra.mxu0 0.0
        %2993 = vmatprep.subr.mxu0 0.0
        %2994 = vmatpush1.msra.mxu0 0.0
        %2995 = vmatprep.subr.mxu0 %v2966
        %2996 = vmatpush1.msra.mxu0 %v2965
        %2997 = vmatprep.subr.mxu0 %v2964
        %2998 = vmatpush1.msra.mxu0 %v2963
        %2999 = vmatprep.subr.mxu0 0.0
        %3000 = vmatpush2.msra.mxu0 0.0
        %3001 = vmatprep.subr.mxu0 0.0
        %3002 = vmatpush2.msra.mxu0 0.0
        %3003 = vmatprep.subr.mxu0 0.0
        %3004 = vmatpush2.msra.mxu0 0.0
        %3005 = vmatprep.subr.mxu0 0.0
        %3006 = vmatpush2.msra.mxu0 0.0
        %3007 = vmatprep.subr.mxu0 0.0
        %3008 = vmatpush2.msra.mxu0 0.0
        %3009 = vmatprep.subr.mxu0 0.0
        %3010 = vmatpush2.msra.mxu0 0.0
        %3011 = vmatprep.subr.mxu0 0.0
        %3012 = vmatpush2.msra.mxu0 0.0
        %3013 = vmatprep.subr.mxu0 0.0
        %3014 = vmatpush2.msra.mxu0 0.0
        %3015 = vmatprep.subr.mxu0 0.0
        %3016 = vmatpush2.msra.mxu0 0.0
        %3017 = vmatprep.subr.mxu0 0.0
        %3018 = vmatpush2.msra.mxu0 0.0
        %3019 = vmatprep.subr.mxu0 0.0
        %3020 = vmatpush2.msra.mxu0 0.0
        %3021 = vmatprep.subr.mxu0 0.0
        %3022 = vmatpush2.msra.mxu0 0.0
        %3023 = vmatprep.subr.mxu0 0.0
        %3024 = vmatpush2.msra.mxu0 0.0
        %3025 = vmatprep.subr.mxu0 0.0
        %3026 = vmatpush2.msra.mxu0 0.0
        %3027 = vmatprep.subr.mxu0 0.0
        %3028 = vmatpush2.msra.mxu0 0.0
        %3029 = vmatprep.subr.mxu0 0.0
        %3030 = vmatpush2.msra.mxu0 0.0
        %3031 = vmatprep.mubr.f32.mxu0 0.0
        %3032 = vmatmul.mubr.f32.gmra.mxu0 %v1126
        %v3033 = vpop.f32.mrf.mxu0
        %v3034 = vadd.f32 %v2872, %v3033
        %v3035 = vpop.f32.mrf.mxu0
        %v3036 = vadd.f32 %v2874, %v3035
        %3037 = vmatprep.mubr.f32.mxu0 0.0
        %3038 = vmatmul.mubr.f32.gmra.mxu0 %v1129
        %v3039 = vpop.f32.mrf.mxu0
        %v3040 = vadd.f32 %v2878, %v3039
        %v3041 = vpop.f32.mrf.mxu0
        %v3042 = vadd.f32 %v2880, %v3041
        %3043 = vdwg.mxu0
        %v3044 = vsub.f32 %v3034, %v2949
        %v3045 = vsub.f32 %v3036, %v2951
        %v3046 = vsub.f32 %v3040, %v2955
        %v3047 = vsub.f32 %v3042, %v2957
        %3048 = vmatprep.subr.mxu0 %v779
        %3049 = vmatpush1.msra.mxu0 %v778
        %3050 = vmatprep.subr.mxu0 %v777
        %3051 = vmatpush1.msra.mxu0 %v776
        %3052 = vmatprep.subr.mxu0 %v775
        %3053 = vmatpush1.msra.mxu0 %v774
        %3054 = vmatprep.subr.mxu0 %v773
        %3055 = vmatpush1.msra.mxu0 %v772
        %3056 = vmatprep.subr.mxu0 %v771
        %3057 = vmatpush1.msra.mxu0 %v770
        %3058 = vmatprep.subr.mxu0 %v769
        %3059 = vmatpush1.msra.mxu0 %v768
        %3060 = vmatprep.subr.mxu0 %v767
        %3061 = vmatpush1.msra.mxu0 %v766
        %3062 = vmatprep.subr.mxu0 %v765
        %3063 = vmatpush1.msra.mxu0 %v764
        %3064 = vmatprep.subr.mxu0 %v763
        %3065 = vmatpush1.msra.mxu0 %v762
        %3066 = vmatprep.subr.mxu0 %v761
        %3067 = vmatpush1.msra.mxu0 %v760
        %3068 = vmatprep.subr.mxu0 %v759
        %3069 = vmatpush1.msra.mxu0 %v758
        %3070 = vmatprep.subr.mxu0 %v757
        %3071 = vmatpush1.msra.mxu0 %v756
        %3072 = vmatprep.subr.mxu0 %v755
        %3073 = vmatpush1.msra.mxu0 %v754
        %3074 = vmatprep.subr.mxu0 %v753
        %3075 = vmatpush1.msra.mxu0 %v752
        %3076 = vmatprep.subr.mxu0 %v751
        %3077 = vmatpush1.msra.mxu0 %v750
        %3078 = vmatprep.subr.mxu0 %v749
        %3079 = vmatpush1.msra.mxu0 %v748
        %3080 = vmatprep.subr.mxu0 %v811
        %3081 = vmatpush2.msra.mxu0 %v810
        %3082 = vmatprep.subr.mxu0 %v809
        %3083 = vmatpush2.msra.mxu0 %v808
        %3084 = vmatprep.subr.mxu0 %v807
        %3085 = vmatpush2.msra.mxu0 %v806
        %3086 = vmatprep.subr.mxu0 %v805
        %3087 = vmatpush2.msra.mxu0 %v804
        %3088 = vmatprep.subr.mxu0 %v803
        %3089 = vmatpush2.msra.mxu0 %v802
        %3090 = vmatprep.subr.mxu0 %v801
        %3091 = vmatpush2.msra.mxu0 %v800
        %3092 = vmatprep.subr.mxu0 %v799
        %3093 = vmatpush2.msra.mxu0 %v798
        %3094 = vmatprep.subr.mxu0 %v797
        %3095 = vmatpush2.msra.mxu0 %v796
        %3096 = vmatprep.subr.mxu0 %v795
        %3097 = vmatpush2.msra.mxu0 %v794
        %3098 = vmatprep.subr.mxu0 %v793
        %3099 = vmatpush2.msra.mxu0 %v792
        %3100 = vmatprep.subr.mxu0 %v791
        %3101 = vmatpush2.msra.mxu0 %v790
        %3102 = vmatprep.subr.mxu0 %v789
        %3103 = vmatpush2.msra.mxu0 %v788
        %3104 = vmatprep.subr.mxu0 %v787
        %3105 = vmatpush2.msra.mxu0 %v786
        %3106 = vmatprep.subr.mxu0 %v785
        %3107 = vmatpush2.msra.mxu0 %v784
        %3108 = vmatprep.subr.mxu0 %v783
        %3109 = vmatpush2.msra.mxu0 %v782
        %3110 = vmatprep.subr.mxu0 %v781
        %3111 = vmatpush2.msra.mxu0 %v780
        %3112 = vmatprep.mubr.f32.mxu0 %v2960
        %3113 = vmatmul.mubr.f32.gmra.mxu0 %v2959
        %v3114 = vpop.f32.mrf.mxu0
        %v3115 = vadd.f32 0.0, %v3114
        %v3116 = vpop.f32.mrf.mxu0
        %v3117 = vadd.f32 0.0, %v3116
        %3118 = vmatprep.mubr.f32.mxu0 %v2962
        %3119 = vmatmul.mubr.f32.gmra.mxu0 %v2961
        %v3120 = vpop.f32.mrf.mxu0
        %v3121 = vadd.f32 0.0, %v3120
        %v3122 = vpop.f32.mrf.mxu0
        %v3123 = vadd.f32 0.0, %v3122
        %3124 = vdwg.mxu0
        %3125 = vmatprep.subr.mxu0 %v844
        %3126 = vmatpush1.msra.mxu0 %v843
        %3127 = vmatprep.subr.mxu0 %v842
        %3128 = vmatpush1.msra.mxu0 %v841
        %3129 = vmatprep.subr.mxu0 %v840
        %3130 = vmatpush1.msra.mxu0 %v839
        %3131 = vmatprep.subr.mxu0 %v838
        %3132 = vmatpush1.msra.mxu0 %v837
        %3133 = vmatprep.subr.mxu0 %v836
        %3134 = vmatpush1.msra.mxu0 %v835
        %3135 = vmatprep.subr.mxu0 %v834
        %3136 = vmatpush1.msra.mxu0 %v833
        %3137 = vmatprep.subr.mxu0 %v832
        %3138 = vmatpush1.msra.mxu0 %v831
        %3139 = vmatprep.subr.mxu0 %v830
        %3140 = vmatpush1.msra.mxu0 %v829
        %3141 = vmatprep.subr.mxu0 %v828
        %3142 = vmatpush1.msra.mxu0 %v827
        %3143 = vmatprep.subr.mxu0 %v826
        %3144 = vmatpush1.msra.mxu0 %v825
        %3145 = vmatprep.subr.mxu0 %v824
        %3146 = vmatpush1.msra.mxu0 %v823
        %3147 = vmatprep.subr.mxu0 %v822
        %3148 = vmatpush1.msra.mxu0 %v821
        %3149 = vmatprep.subr.mxu0 %v820
        %3150 = vmatpush1.msra.mxu0 %v819
        %3151 = vmatprep.subr.mxu0 %v818
        %3152 = vmatpush1.msra.mxu0 %v817
        %3153 = vmatprep.subr.mxu0 %v816
        %3154 = vmatpush1.msra.mxu0 %v815
        %3155 = vmatprep.subr.mxu0 %v814
        %3156 = vmatpush1.msra.mxu0 %v813
        %3157 = vmatprep.subr.mxu0 %v876
        %3158 = vmatpush2.msra.mxu0 %v875
        %3159 = vmatprep.subr.mxu0 %v874
        %3160 = vmatpush2.msra.mxu0 %v873
        %3161 = vmatprep.subr.mxu0 %v872
        %3162 = vmatpush2.msra.mxu0 %v871
        %3163 = vmatprep.subr.mxu0 %v870
        %3164 = vmatpush2.msra.mxu0 %v869
        %3165 = vmatprep.subr.mxu0 %v868
        %3166 = vmatpush2.msra.mxu0 %v867
        %3167 = vmatprep.subr.mxu0 %v866
        %3168 = vmatpush2.msra.mxu0 %v865
        %3169 = vmatprep.subr.mxu0 %v864
        %3170 = vmatpush2.msra.mxu0 %v863
        %3171 = vmatprep.subr.mxu0 %v862
        %3172 = vmatpush2.msra.mxu0 %v861
        %3173 = vmatprep.subr.mxu0 %v860
        %3174 = vmatpush2.msra.mxu0 %v859
        %3175 = vmatprep.subr.mxu0 %v858
        %3176 = vmatpush2.msra.mxu0 %v857
        %3177 = vmatprep.subr.mxu0 %v856
        %3178 = vmatpush2.msra.mxu0 %v855
        %3179 = vmatprep.subr.mxu0 %v854
        %3180 = vmatpush2.msra.mxu0 %v853
        %3181 = vmatprep.subr.mxu0 %v852
        %3182 = vmatpush2.msra.mxu0 %v851
        %3183 = vmatprep.subr.mxu0 %v850
        %3184 = vmatpush2.msra.mxu0 %v849
        %3185 = vmatprep.subr.mxu0 %v848
        %3186 = vmatpush2.msra.mxu0 %v847
        %3187 = vmatprep.subr.mxu0 %v846
        %3188 = vmatpush2.msra.mxu0 %v845
        %3189 = vmatprep.mubr.f32.mxu0 %v3045
        %3190 = vmatmul.mubr.f32.gmra.mxu0 %v3044
        %v3191 = vpop.f32.mrf.mxu0
        %v3192 = vadd.f32 0.0, %v3191
        %v3193 = vpop.f32.mrf.mxu0
        %v3194 = vadd.f32 0.0, %v3193
        %3195 = vmatprep.mubr.f32.mxu0 %v3047
        %3196 = vmatmul.mubr.f32.gmra.mxu0 %v3046
        %v3197 = vpop.f32.mrf.mxu0
        %v3198 = vadd.f32 0.0, %v3197
        %v3199 = vpop.f32.mrf.mxu0
        %v3200 = vadd.f32 0.0, %v3199
        %3201 = vdwg.mxu0
        %v3202 = vadd.f32 %v3115, %v3192
        %v3203 = vadd.f32 %v3117, %v3194
        %v3204 = vadd.f32 %v3121, %v3198
        %v3205 = vadd.f32 %v3123, %v3200
        %v3206 = vsub.f32 %v3044, %v2959
        %v3207 = vsub.f32 %v3045, %v2960
        %v3208 = vsub.f32 %v3046, %v2961
        %v3209 = vsub.f32 %v3047, %v2962
        %3210 = vmatprep.subr.mxu0 %v909
        %3211 = vmatpush1.msra.mxu0 %v908
        %3212 = vmatprep.subr.mxu0 %v907
        %3213 = vmatpush1.msra.mxu0 %v906
        %3214 = vmatprep.subr.mxu0 %v905
        %3215 = vmatpush1.msra.mxu0 %v904
        %3216 = vmatprep.subr.mxu0 %v903
        %3217 = vmatpush1.msra.mxu0 %v902
        %3218 = vmatprep.subr.mxu0 %v901
        %3219 = vmatpush1.msra.mxu0 %v900
        %3220 = vmatprep.subr.mxu0 %v899
        %3221 = vmatpush1.msra.mxu0 %v898
        %3222 = vmatprep.subr.mxu0 %v897
        %3223 = vmatpush1.msra.mxu0 %v896
        %3224 = vmatprep.subr.mxu0 %v895
        %3225 = vmatpush1.msra.mxu0 %v894
        %3226 = vmatprep.subr.mxu0 %v893
        %3227 = vmatpush1.msra.mxu0 %v892
        %3228 = vmatprep.subr.mxu0 %v891
        %3229 = vmatpush1.msra.mxu0 %v890
        %3230 = vmatprep.subr.mxu0 %v889
        %3231 = vmatpush1.msra.mxu0 %v888
        %3232 = vmatprep.subr.mxu0 %v887
        %3233 = vmatpush1.msra.mxu0 %v886
        %3234 = vmatprep.subr.mxu0 %v885
        %3235 = vmatpush1.msra.mxu0 %v884
        %3236 = vmatprep.subr.mxu0 %v883
        %3237 = vmatpush1.msra.mxu0 %v882
        %3238 = vmatprep.subr.mxu0 %v881
        %3239 = vmatpush1.msra.mxu0 %v880
        %3240 = vmatprep.subr.mxu0 %v879
        %3241 = vmatpush1.msra.mxu0 %v878
        %3242 = vmatprep.subr.mxu0 %v941
        %3243 = vmatpush2.msra.mxu0 %v940
        %3244 = vmatprep.subr.mxu0 %v939
        %3245 = vmatpush2.msra.mxu0 %v938
        %3246 = vmatprep.subr.mxu0 %v937
        %3247 = vmatpush2.msra.mxu0 %v936
        %3248 = vmatprep.subr.mxu0 %v935
        %3249 = vmatpush2.msra.mxu0 %v934
        %3250 = vmatprep.subr.mxu0 %v933
        %3251 = vmatpush2.msra.mxu0 %v932
        %3252 = vmatprep.subr.mxu0 %v931
        %3253 = vmatpush2.msra.mxu0 %v930
        %3254 = vmatprep.subr.mxu0 %v929
        %3255 = vmatpush2.msra.mxu0 %v928
        %3256 = vmatprep.subr.mxu0 %v927
        %3257 = vmatpush2.msra.mxu0 %v926
        %3258 = vmatprep.subr.mxu0 %v925
        %3259 = vmatpush2.msra.mxu0 %v924
        %3260 = vmatprep.subr.mxu0 %v923
        %3261 = vmatpush2.msra.mxu0 %v922
        %3262 = vmatprep.subr.mxu0 %v921
        %3263 = vmatpush2.msra.mxu0 %v920
        %3264 = vmatprep.subr.mxu0 %v919
        %3265 = vmatpush2.msra.mxu0 %v918
        %3266 = vmatprep.subr.mxu0 %v917
        %3267 = vmatpush2.msra.mxu0 %v916
        %3268 = vmatprep.subr.mxu0 %v915
        %3269 = vmatpush2.msra.mxu0 %v914
        %3270 = vmatprep.subr.mxu0 %v913
        %3271 = vmatpush2.msra.mxu0 %v912
        %3272 = vmatprep.subr.mxu0 %v911
        %3273 = vmatpush2.msra.mxu0 %v910
        %3274 = vmatprep.mubr.f32.mxu0 %v3207
        %3275 = vmatmul.mubr.f32.gmra.mxu0 %v3206
        %v3276 = vpop.f32.mrf.mxu0
        %v3277 = vadd.f32 %v3115, %v3276
        %v3278 = vpop.f32.mrf.mxu0
        %v3279 = vadd.f32 %v3117, %v3278
        %3280 = vmatprep.mubr.f32.mxu0 %v3209
        %3281 = vmatmul.mubr.f32.gmra.mxu0 %v3208
        %v3282 = vpop.f32.mrf.mxu0
        %v3283 = vadd.f32 %v3121, %v3282
        %v3284 = vpop.f32.mrf.mxu0
        %v3285 = vadd.f32 %v3123, %v3284
        %3286 = vdwg.mxu0
        %v3287 = vsub.f32 %v3277, %v3192
        %v3288 = vsub.f32 %v3279, %v3194
        %v3289 = vsub.f32 %v3283, %v3198
        %v3290 = vsub.f32 %v3285, %v3200
        %3291 = vst [vmem:[%s732] sm:$0xff] %v3202
        %3292 = vst [vmem:[%s732 + $0x8] sm:$0xff] %v3203
        %3293 = vst [vmem:[%s732 + $0x10] sm:$0xff] %v3204
        %3294 = vst [vmem:[%s732 + $0x18] sm:$0xff] %v3205
        %3295 = vst [vmem:[%s739] sm:$0xff] %v3287
        %3296 = vst [vmem:[%s739 + $0x8] sm:$0xff] %v3288
        %3297 = vst [vmem:[%s739 + $0x10] sm:$0xff] %v3289
        %3298 = vst [vmem:[%s739 + $0x18] sm:$0xff] %v3290
        %s3299 = sand.u32 %s330, 1
        %s3300 = scalar_lea.sflag [#allocation5], %s3299
        %s3301 = sand.u32 %s330, 1
        %s3302 = smul.addr %s3301, 32
        %s3303 = scalar_lea.vmem [#allocation21], %s3302
        %s3304 = sand.u32 %s50, 1
        %s3305 = scalar_lea.sflag [#allocation23], %s3304
        %s3306 = sand.u32 %s356, 1
        %s3307 = smul.addr %s3306, 32
        %s3308 = scalar_lea.vmem [#allocation22], %s3307
        %s3309 = sand.u32 %s50, 1
        %s3310 = scalar_lea.sflag [#allocation23], %s3309
        %s3311 = sand.u32 %s382, 1
        %s3312 = smul.addr %s3311, 32
        %s3313 = scalar_lea.vmem [#allocation24], %s3312
        %s3314 = sand.u32 %s408, 1
        %s3315 = scalar_lea.sflag [#allocation26], %s3314
        %s3316 = sand.u32 %s408, 1
        %s3317 = smul.addr %s3316, 32
        %s3318 = scalar_lea.vmem [#allocation25], %s3317
        // Predicated region
        $region109: #{tpu_custom_call.1} parent=67 // pred_check
          %p3319 = pneg %p340
        $region110: #{tpu_custom_call.1} parent=67 // pred_check_branch
          %3321 = sbr.rel (%p3319) target = $region112
        $region111: #{tpu_custom_call.1} parent=67 // pred_region
          %s3323 = ssub.s32 512, 512
          %3324 = vsyncadd %s3300, %s3323
          %s3325 = smul.addr %s50, 4
          %s3326 = smul.addr %s3325, 128
          %s3327 = scalar_lea.hbm %s12, %s3326
          %s3328 = sshll.u32 %s3303, 4
          %s3329 = int_to_ptr.vmem [resolvable:$true] %s3328
          %3334 = dma.vmem_to_hbm [thread:$0]  %s3329, 512, %s3327, %s3300, 256, 256, 16
        $region112: #{tpu_custom_call.1} parent=67 // pred_fallthru
          _
        // Predicated region
        $region113: #{tpu_custom_call.1} parent=67 // pred_check
          %p3335 = pneg %p366
        $region114: #{tpu_custom_call.1} parent=67 // pred_check_branch
          %3337 = sbr.rel (%p3335) target = $region116
        $region115: #{tpu_custom_call.1} parent=67 // pred_region
          %s3339 = ssub.s32 512, 512
          %3340 = vsyncadd %s3305, %s3339
          %s3341 = smul.addr %s50, 4
          %s3342 = smul.addr %s3341, 128
          %s3343 = scalar_lea.hbm %s13, %s3342
          %s3344 = sshll.u32 %s3308, 4
          %s3345 = int_to_ptr.vmem [resolvable:$true] %s3344
          %3350 = dma.vmem_to_hbm [thread:$0]  %s3345, 512, %s3343, %s3305, 256, 256, 16
        $region116: #{tpu_custom_call.1} parent=67 // pred_fallthru
          _
        // Predicated region
        $region117: #{tpu_custom_call.1} parent=67 // pred_check
          %p3351 = pneg %p392
        $region118: #{tpu_custom_call.1} parent=67 // pred_check_branch
          %3353 = sbr.rel (%p3351) target = $region120
        $region119: #{tpu_custom_call.1} parent=67 // pred_region
          %s3355 = ssub.s32 512, 512
          %3356 = vsyncadd %s3310, %s3355
          %s3357 = smul.addr %s50, 4
          %s3358 = smul.addr %s3357, 128
          %s3359 = scalar_lea.hbm %s14, %s3358
          %s3360 = sshll.u32 %s3313, 4
          %s3361 = int_to_ptr.vmem [resolvable:$true] %s3360
          %3366 = dma.vmem_to_hbm [thread:$0]  %s3361, 512, %s3359, %s3310, 256, 256, 16
        $region120: #{tpu_custom_call.1} parent=67 // pred_fallthru
          _
        // Predicated region
        $region121: #{tpu_custom_call.1} parent=67 // pred_check
          %p3367 = pneg %p418
        $region122: #{tpu_custom_call.1} parent=67 // pred_check_branch
          %3369 = sbr.rel (%p3367) target = $region124
        $region123: #{tpu_custom_call.1} parent=67 // pred_region
          %s3371 = ssub.s32 512, 512
          %3372 = vsyncadd %s3315, %s3371
          %s3373 = smul.addr %s50, 4
          %s3374 = smul.addr %s3373, 128
          %s3375 = scalar_lea.hbm %s15, %s3374
          %s3376 = sshll.u32 %s3318, 4
          %s3377 = int_to_ptr.vmem [resolvable:$true] %s3376
          %3382 = dma.vmem_to_hbm [thread:$0]  %s3377, 512, %s3375, %s3315, 256, 256, 16
        $region124: #{tpu_custom_call.1} parent=67 // pred_fallthru
          _
      $region68: #{tpu_custom_call.1} parent=5 // pred_fallthru
        _
      %p3383 = scmp.le.s32.totalorder 2, %s45
      // Predicated region
      $region125: #{tpu_custom_call.1} parent=5 // pred_check
        %p3384 = pneg %p3383
      $region126: #{tpu_custom_call.1} parent=5 // pred_check_branch
        %3386 = sbr.rel (%p3384) target = $region128
      $region127: #{tpu_custom_call.1} parent=5 // pred_region
        %s3387 = ssub.s32 %s45, 2
        // Predicated region
        $region129: #{tpu_custom_call.1} parent=127 // pred_check
          %p3388 = pneg %p346
        $region130: #{tpu_custom_call.1} parent=127 // pred_check_branch
          %3390 = sbr.rel (%p3388) target = $region132
        $region131: #{tpu_custom_call.1} parent=127 // pred_region
          %s3391 = sand.u32 %s331, 1
          %s3392 = scalar_lea.sflag [#allocation5], %s3391
          %s3393 = sand.u32 %s331, 1
          %s3394 = smul.addr %s3393, 32
          %s3395 = scalar_lea.vmem [#allocation21], %s3394
          %3396 = dma.done %s3392, 512
        $region132: #{tpu_custom_call.1} parent=127 // pred_fallthru
          _
        // Predicated region
        $region133: #{tpu_custom_call.1} parent=127 // pred_check
          %p3397 = pneg %p372
        $region134: #{tpu_custom_call.1} parent=127 // pred_check_branch
          %3399 = sbr.rel (%p3397) target = $region136
        $region135: #{tpu_custom_call.1} parent=127 // pred_region
          %s3400 = sand.u32 %s51, 1
          %s3401 = scalar_lea.sflag [#allocation23], %s3400
          %s3402 = sand.u32 %s357, 1
          %s3403 = smul.addr %s3402, 32
          %s3404 = scalar_lea.vmem [#allocation22], %s3403
          %3405 = dma.done %s3401, 512
        $region136: #{tpu_custom_call.1} parent=127 // pred_fallthru
          _
        // Predicated region
        $region137: #{tpu_custom_call.1} parent=127 // pred_check
          %p3406 = pneg %p398
        $region138: #{tpu_custom_call.1} parent=127 // pred_check_branch
          %3408 = sbr.rel (%p3406) target = $region140
        $region139: #{tpu_custom_call.1} parent=127 // pred_region
          %s3409 = sand.u32 %s51, 1
          %s3410 = scalar_lea.sflag [#allocation23], %s3409
          %s3411 = sand.u32 %s383, 1
          %s3412 = smul.addr %s3411, 32
          %s3413 = scalar_lea.vmem [#allocation24], %s3412
          %3414 = dma.done %s3410, 512
        $region140: #{tpu_custom_call.1} parent=127 // pred_fallthru
          _
        // Predicated region
        $region141: #{tpu_custom_call.1} parent=127 // pred_check
          %p3415 = pneg %p424
        $region142: #{tpu_custom_call.1} parent=127 // pred_check_branch
          %3417 = sbr.rel (%p3415) target = $region144
        $region143: #{tpu_custom_call.1} parent=127 // pred_region
          %s3418 = sand.u32 %s409, 1
          %s3419 = scalar_lea.sflag [#allocation26], %s3418
          %s3420 = sand.u32 %s409, 1
          %s3421 = smul.addr %s3420, 32
          %s3422 = scalar_lea.vmem [#allocation25], %s3421
          %3423 = dma.done %s3419, 512
        $region144: #{tpu_custom_call.1} parent=127 // pred_fallthru
          _
      $region128: #{tpu_custom_call.1} parent=5 // pred_fallthru
        _
    $region6: #{tpu_custom_call.1} parent=1 // loop_footer
      %s49 = sadd.s32 1, %s45
    $region7: #{tpu_custom_call.1} parent=1 // loop_footer_branch
      %44 = sbr.rel target = $region3
    $region8: #{tpu_custom_call.1} parent=1 // loop_exit
      _
    %3424 = vsyncpa [#allocation4], 1
    %s3425 = scalar_lea.sflag [#allocation4], 1
    %3426 = vsyncpa %s3425, 1
    %3427 = vsyncpa [#allocation8], 1
    %s3428 = scalar_lea.sflag [#allocation8], 1
    %3429 = vsyncpa %s3428, 1
    %3430 = vsyncpa [#allocation11], 1
    %s3431 = scalar_lea.sflag [#allocation11], 1
    %3432 = vsyncpa %s3431, 1
    %3433 = vsyncpa [#allocation14], 1
    %3434 = vsyncpa [#allocation5], 1
    %s3435 = scalar_lea.sflag [#allocation5], 1
    %3436 = vsyncpa %s3435, 1
    %3437 = vsyncpa [#allocation23], 1
    %s3438 = scalar_lea.sflag [#allocation23], 1
    %3439 = vsyncpa %s3438, 1
    %3440 = vsyncpa [#allocation26], 1
    %s3441 = scalar_lea.sflag [#allocation26], 1
    %3442 = vsyncpa %s3441, 1
    %3443 = vsyncpa [#allocation6], 1
    %s3444 = scalar_lea.sflag [#allocation6], 1
    %3445 = vsyncpa %s3444, 1
    %3446 = vsyncpa [#allocation17], 1
    %3447 = vsyncpa [#allocation20], 1

</llo_original>
